<compile_context>
chip_gen: v7x
topology: tpu7x:2x2x1
jax: 0.10.0
libtpu: 0.0.40
codegen_flags: <defaults>
</compile_context>

<pallas_src>
import functools

import jax
import jax.numpy as jnp
from jax.experimental import pallas as pl
from jax.experimental.pallas import tpu as pltpu


def _phys_bytes(shape, dtype):
    """VMEM bytes for `shape` with (sublane, lane) physical tile padding."""
    itemsize = jnp.dtype(dtype).itemsize
    sublane = 8 if itemsize >= 4 else 8 * (4 // itemsize)  # 8 f32 / 16 bf16 / 32 i8
    dims = list(shape)
    dims[-1] = -(-dims[-1] // 128) * 128
    if len(dims) >= 2:
        dims[-2] = -(-dims[-2] // sublane) * sublane
    n = 1
    for d in dims:
        n *= d
    return n * itemsize


def _chip_profile():
    """Returns (vmem_limit_bytes, dual_core) with conservative fallbacks."""
    dual_core = True  # conservative default: assume 2 TCs / small VMEM (v7x-like)
    try:
        kind = jax.devices()[0].device_kind.lower()
        # Single-TensorCore-per-device generations: v2/v3, v5e ("lite"), v6e.
        dual_core = not any(t in kind for t in ("v2", "v3", "lite", "v5e", "v6e"))
    except Exception:
        pass
    vmem_limit = (32 << 20) if dual_core else (64 << 20)
    try:
        phys = int(pltpu.get_tpu_info().vmem_capacity_bytes)
        vmem_limit = min(vmem_limit, phys // 2)
    except Exception:
        pass
    return vmem_limit, dual_core


def _pick_batch_tile(B, C, N, PADLEN, dtype, *, budget, require_two_steps):
    """Largest divisor of B whose physically padded, double-buffered working set
    fits `budget`; on dual-core chips keep >= 2 grid steps (when B >= 2) so the
    "parallel" batch axis can shard across TensorCores."""

    def footprint(tb):
        f = 0
        f += 2 * _phys_bytes((tb, C, N), dtype)          # double-buffered input blocks
        f += 2 * _phys_bytes((tb, 1, N), dtype)          # double-buffered output blocks
        f += _phys_bytes((2, tb, PADLEN), jnp.float32)   # flat padded scratch
        f += _phys_bytes((tb, C, N), jnp.float32)        # x cast to f32 (live)
        f += 8 * _phys_bytes((tb, N), jnp.float32)       # headroom for live planes
        return f

    best = 1
    for tb in range(1, B + 1):
        if B % tb:
            continue
        if footprint(tb) > budget:
            continue
        if require_two_steps and B >= 2 and B // tb < 2:
            continue
        best = tb
    return best


def _spatial_attention_kernel(x_ref, col_ref, w_ref, o_ref, flat_ref,
                              *, H, W, K, TB, N, OFF):
    """
    x_ref:    (TB, C, N=H*W)   VMEM  lane-dense input block
    col_ref:  (1, N)           VMEM  column index (n % W), precomputed on host
    w_ref:    (2*K*K,)         SMEM  conv taps, flat [max-ch | mean-ch * 1/C]
    o_ref:    (TB, 1, N)       VMEM  lane-dense output block
    flat_ref: (2, TB, PADLEN)  VMEM  pooled maps stored at lane offset OFF; the
                                     halo lanes are never initialized — every
                                     tap read that could land there is masked.
    """
    P = (K - 1) // 2
    KK = K * K

    # Channel pooling in f32 on the lane-dense layout. Mean is a plain sum:
    # 1/C was folded into the mean-channel weights on the host.
    x = x_ref[...].astype(jnp.float32)                 # (TB, C, N)
    flat_ref[0, :, OFF:OFF + N] = jnp.max(x, axis=1)   # 128-lane-aligned store
    flat_ref[1, :, OFF:OFF + N] = jnp.sum(x, axis=1)

    # Edge masks. Row bounds only need the flat index n; column bounds use the
    # host-precomputed n % W map (no in-kernel integer div/mod).
    lane = jax.lax.broadcasted_iota(jnp.int32, (1, N), 1)   # n
    w_idx = col_ref[...]                                    # n % W
    col_ok = [(w_idx >= P - dx) & (w_idx < W + P - dx) for dx in range(K)]

    # KxK cross-correlation as flat lane shifts + masked MAC, fully unrolled.
    acc = jnp.zeros((TB, N), jnp.float32)
    for dy in range(K):
        oy = dy - P
        row_ok = (lane >= (-oy) * W) & (lane < (H - oy) * W)
        for dx in range(K):
            ox = dx - P
            a = OFF + oy * W + ox
            sh_max = flat_ref[0, :, a:a + N]       # (TB, N) shifted max map
            sh_avg = flat_ref[1, :, a:a + N]       # (TB, N) shifted (sum) map
            tap = (w_ref[dy * K + dx] * sh_max
                   + w_ref[KK + dy * K + dx] * sh_avg)
            acc = acc + jnp.where(row_ok & col_ok[dx], tap, 0.0)

    o_ref[:, 0, :] = jax.nn.sigmoid(acc).astype(o_ref.dtype)


def spatial_attention(x, conv_weight):
    """x: (B, C, H, W); conv_weight: (1, 2, K, K) (PyTorch OIHW, bias-free)."""
    B, C, H, W = x.shape
    O, I, K, K2 = conv_weight.shape
    assert O == 1 and I == 2 and K == K2 and K % 2 == 1

    N = H * W
    P = (K - 1) // 2
    MS = P * W + P                      # max |flat shift| over all taps
    OFF = -(-MS // 128) * 128           # 128-lane-aligned interior offset
    PADLEN = OFF + N + MS

    vmem_limit, dual_core = _chip_profile()
    TB = _pick_batch_tile(B, C, N, PADLEN, x.dtype,
                          budget=int(vmem_limit * 0.6),
                          require_two_steps=dual_core)
    assert B % TB == 0

    # Flat conv taps (SMEM-resident): [max-channel taps | mean-channel taps / C].
    w_flat = jnp.concatenate([
        conv_weight[0, 0].reshape(-1).astype(jnp.float32),
        conv_weight[0, 1].reshape(-1).astype(jnp.float32) / jnp.float32(C),
    ])
    # n % W map, built on the host so the kernel needs no integer div/mod.
    col_idx = jnp.tile(jnp.arange(W, dtype=jnp.int32), H).reshape(1, N)

    x_flat = x.reshape(B, C, N)         # lane-dense view (free reshape)

    kernel = functools.partial(_spatial_attention_kernel,
                               H=H, W=W, K=K, TB=TB, N=N, OFF=OFF)

    out_flat = pl.pallas_call(
        kernel,
        out_shape=jax.ShapeDtypeStruct((B, 1, N), x.dtype),
        grid_spec=pltpu.PrefetchScalarGridSpec(
            num_scalar_prefetch=0,
            grid=(B // TB,),
            in_specs=[
                # TODO(synk): if a trace shows the input DMA still exposed for
                # small TB/C, add pipeline_mode=pl.Buffered(3) on this spec.
                pl.BlockSpec((TB, C, N), lambda b: (b, 0, 0)),
                pl.BlockSpec((1, N), lambda b: (0, 0)),
                pl.BlockSpec(memory_space=pltpu.MemorySpace.SMEM),
            ],
            out_specs=pl.BlockSpec((TB, 1, N), lambda b: (b, 0, 0)),
            scratch_shapes=[pltpu.VMEM((2, TB, PADLEN), jnp.float32)],
        ),
        compiler_params=pltpu.CompilerParams(
            dimension_semantics=("parallel",),
            vmem_limit_bytes=int(vmem_limit),
        ),
    )(x_flat, col_idx, w_flat)

    return out_flat.reshape(B, 1, H, W)


if __name__ == "__main__":
    key = jax.random.PRNGKey(0)
    kx, kw = jax.random.split(key)

    B, C, H, W, K = 2, 4, 16, 16, 7
    x = jax.random.normal(kx, (B, C, H, W), dtype=jnp.float32)
    # nn.Conv2d(2, 1, 7, bias=False) weight shape (OIHW).
    conv_weight = jax.random.normal(kw, (1, 2, K, K), dtype=jnp.float32) * 0.1

    out = spatial_attention(x, conv_weight)
    out = jax.block_until_ready(out)

    # Pure-JAX reference (same semantics as the PyTorch module).
    max_pool = jnp.max(x, axis=1, keepdims=True)
    avg_pool = jnp.mean(x, axis=1, keepdims=True)
    pool = jnp.concatenate([max_pool, avg_pool], axis=1)
    conv = jax.lax.conv_general_dilated(
        pool, conv_weight, window_strides=(1, 1),
        padding=[(K // 2, K // 2), (K // 2, K // 2)],
        dimension_numbers=("NCHW", "OIHW", "NCHW"))
    ref = jax.nn.sigmoid(conv)

    assert out.shape == (B, 1, H, W)
    err = float(jnp.max(jnp.abs(out - ref)))
    assert jnp.allclose(out, ref, atol=2e-5, rtol=1e-5), err
    print("KERNEL_OK")
</pallas_src>

<mosaic_0001>
module attributes {stable_mosaic.version = 11 : i64} {
  func.func @_spatial_attention_kernel(%arg0: i32, %arg1: memref<1x4x256xf32, #tpu.memory_space<vmem>>, %arg2: memref<1x256xi32, #tpu.memory_space<vmem>>, %arg3: memref<98xf32, #tpu.memory_space<smem>>, %arg4: memref<1x1x256xf32, #tpu.memory_space<vmem>>, %arg5: memref<2x1x435xf32, #tpu.memory_space<vmem>>) attributes {dimension_semantics = [#tpu.dimension_semantics<parallel>], iteration_bounds = array<i64: 2>, scalar_prefetch = 0 : i64, scratch_operands = 1 : i64, tpu.core_type = #tpu.core_type<tc>, window_params = [{transform_indices = @transform_0, window_bounds = array<i64: 1, 4, 256>}, {pipeline_mode = #tpu.pipeline_mode<synchronous>, transform_indices = @transform_1, window_bounds = array<i64: 1, 256>}, {transform_indices = @transform_2, window_bounds = array<i64: 98>}, {transform_indices = @transform_3, window_bounds = array<i64: 1, 1, 256>}]} {
    %c0 = arith.constant 0 : index
    %c0_0 = arith.constant 0 : index
    %c0_1 = arith.constant 0 : index
    %0 = vector.load %arg1[%c0, %c0_0, %c0_1] : memref<1x4x256xf32, #tpu.memory_space<vmem>>, vector<1x4x256xf32>
    %cst = arith.constant dense<0xFF800000> : vector<1x256xf32>
    %1 = vector.multi_reduction <maximumf>, %0, %cst [1] : vector<1x4x256xf32> to vector<1x256xf32>
    %c0_2 = arith.constant 0 : index
    %c0_3 = arith.constant 0 : index
    %c128 = arith.constant 128 : index
    %2 = vector.load %arg5[%c0_2, %c0_3, %c128] : memref<2x1x435xf32, #tpu.memory_space<vmem>>, vector<1x1x256xf32>
    %3 = vector.shape_cast %2 : vector<1x1x256xf32> to vector<1x256xf32>
    %4 = vector.shape_cast %1 : vector<1x256xf32> to vector<1x1x256xf32>
    tpu.vector_store %arg5[%c0_2, %c0_3, %c128], %4 {strides = array<i32>} : memref<2x1x435xf32, #tpu.memory_space<vmem>>, vector<1x1x256xf32>,
    %cst_4 = arith.constant dense<0.000000e+00> : vector<1x256xf32>
    %5 = vector.multi_reduction <add>, %0, %cst_4 [1] : vector<1x4x256xf32> to vector<1x256xf32>
    %c1 = arith.constant 1 : index
    %c0_5 = arith.constant 0 : index
    %c128_6 = arith.constant 128 : index
    %6 = vector.load %arg5[%c1, %c0_5, %c128_6] : memref<2x1x435xf32, #tpu.memory_space<vmem>>, vector<1x1x256xf32>
    %7 = vector.shape_cast %6 : vector<1x1x256xf32> to vector<1x256xf32>
    %8 = vector.shape_cast %5 : vector<1x256xf32> to vector<1x1x256xf32>
    tpu.vector_store %arg5[%c1, %c0_5, %c128_6], %8 {strides = array<i32>} : memref<2x1x435xf32, #tpu.memory_space<vmem>>, vector<1x1x256xf32>,
    %9 = tpu.iota {dimensions = array<i32: 1>} : vector<1x256xi32>
    %c0_7 = arith.constant 0 : index
    %c0_8 = arith.constant 0 : index
    %10 = vector.load %arg2[%c0_7, %c0_8] : memref<1x256xi32, #tpu.memory_space<vmem>>, vector<1x256xi32>
    %c3_i32 = arith.constant 3 : i32
    %11 = vector.broadcast %c3_i32 : i32 to vector<1x256xi32>
    %12 = arith.cmpi sge, %10, %11 : vector<1x256xi32>
    %c19_i32 = arith.constant 19 : i32
    %13 = vector.broadcast %c19_i32 : i32 to vector<1x256xi32>
    %14 = arith.cmpi slt, %10, %13 : vector<1x256xi32>
    %15 = arith.andi %12, %14 : vector<1x256xi1>
    %c2_i32 = arith.constant 2 : i32
    %16 = vector.broadcast %c2_i32 : i32 to vector<1x256xi32>
    %17 = arith.cmpi sge, %10, %16 : vector<1x256xi32>
    %c18_i32 = arith.constant 18 : i32
    %18 = vector.broadcast %c18_i32 : i32 to vector<1x256xi32>
    %19 = arith.cmpi slt, %10, %18 : vector<1x256xi32>
    %20 = arith.andi %17, %19 : vector<1x256xi1>
    %c1_i32 = arith.constant 1 : i32
    %21 = vector.broadcast %c1_i32 : i32 to vector<1x256xi32>
    %22 = arith.cmpi sge, %10, %21 : vector<1x256xi32>
    %c17_i32 = arith.constant 17 : i32
    %23 = vector.broadcast %c17_i32 : i32 to vector<1x256xi32>
    %24 = arith.cmpi slt, %10, %23 : vector<1x256xi32>
    %25 = arith.andi %22, %24 : vector<1x256xi1>
    %c0_i32 = arith.constant 0 : i32
    %26 = vector.broadcast %c0_i32 : i32 to vector<1x256xi32>
    %27 = arith.cmpi sge, %10, %26 : vector<1x256xi32>
    %c16_i32 = arith.constant 16 : i32
    %28 = vector.broadcast %c16_i32 : i32 to vector<1x256xi32>
    %29 = arith.cmpi slt, %10, %28 : vector<1x256xi32>
    %30 = arith.andi %27, %29 : vector<1x256xi1>
    %c-1_i32 = arith.constant -1 : i32
    %31 = vector.broadcast %c-1_i32 : i32 to vector<1x256xi32>
    %32 = arith.cmpi sge, %10, %31 : vector<1x256xi32>
    %c15_i32 = arith.constant 15 : i32
    %33 = vector.broadcast %c15_i32 : i32 to vector<1x256xi32>
    %34 = arith.cmpi slt, %10, %33 : vector<1x256xi32>
    %35 = arith.andi %32, %34 : vector<1x256xi1>
    %c-2_i32 = arith.constant -2 : i32
    %36 = vector.broadcast %c-2_i32 : i32 to vector<1x256xi32>
    %37 = arith.cmpi sge, %10, %36 : vector<1x256xi32>
    %c14_i32 = arith.constant 14 : i32
    %38 = vector.broadcast %c14_i32 : i32 to vector<1x256xi32>
    %39 = arith.cmpi slt, %10, %38 : vector<1x256xi32>
    %40 = arith.andi %37, %39 : vector<1x256xi1>
    %c-3_i32 = arith.constant -3 : i32
    %41 = vector.broadcast %c-3_i32 : i32 to vector<1x256xi32>
    %42 = arith.cmpi sge, %10, %41 : vector<1x256xi32>
    %c13_i32 = arith.constant 13 : i32
    %43 = vector.broadcast %c13_i32 : i32 to vector<1x256xi32>
    %44 = arith.cmpi slt, %10, %43 : vector<1x256xi32>
    %45 = arith.andi %42, %44 : vector<1x256xi1>
    %cst_9 = arith.constant 0.000000e+00 : f32
    %46 = vector.broadcast %cst_9 : f32 to vector<1x256xf32>
    %c48_i32 = arith.constant 48 : i32
    %47 = vector.broadcast %c48_i32 : i32 to vector<1x256xi32>
    %48 = arith.cmpi sge, %9, %47 : vector<1x256xi32>
    %c304_i32 = arith.constant 304 : i32
    %49 = vector.broadcast %c304_i32 : i32 to vector<1x256xi32>
    %50 = arith.cmpi slt, %9, %49 : vector<1x256xi32>
    %51 = arith.andi %48, %50 : vector<1x256xi1>
    %c0_10 = arith.constant 0 : index
    %c0_11 = arith.constant 0 : index
    %c77 = arith.constant 77 : index
    %52 = vector.load %arg5[%c0_10, %c0_11, %c77] : memref<2x1x435xf32, #tpu.memory_space<vmem>>, vector<1x1x256xf32>
    %53 = vector.shape_cast %52 : vector<1x1x256xf32> to vector<1x256xf32>
    %c1_12 = arith.constant 1 : index
    %c0_13 = arith.constant 0 : index
    %c77_14 = arith.constant 77 : index
    %54 = vector.load %arg5[%c1_12, %c0_13, %c77_14] : memref<2x1x435xf32, #tpu.memory_space<vmem>>, vector<1x1x256xf32>
    %55 = vector.shape_cast %54 : vector<1x1x256xf32> to vector<1x256xf32>
    %c0_15 = arith.constant 0 : index
    %56 = memref.load %arg3[%c0_15] : memref<98xf32, #tpu.memory_space<smem>>
    %57 = vector.broadcast %56 : f32 to vector<1x256xf32>
    %58 = arith.mulf %57, %53 : vector<1x256xf32>
    %c49 = arith.constant 49 : index
    %59 = memref.load %arg3[%c49] : memref<98xf32, #tpu.memory_space<smem>>
    %60 = vector.broadcast %59 : f32 to vector<1x256xf32>
    %61 = arith.mulf %60, %55 : vector<1x256xf32>
    %62 = arith.addf %58, %61 : vector<1x256xf32>
    %63 = arith.andi %51, %15 : vector<1x256xi1>
    %cst_16 = arith.constant 0.000000e+00 : f32
    %64 = vector.broadcast %cst_16 : f32 to vector<1x256xf32>
    %65 = arith.select %63, %62, %64 : vector<1x256xi1>, vector<1x256xf32>
    %66 = arith.addf %46, %65 : vector<1x256xf32>
    %c0_17 = arith.constant 0 : index
    %c0_18 = arith.constant 0 : index
    %c78 = arith.constant 78 : index
    %67 = vector.load %arg5[%c0_17, %c0_18, %c78] : memref<2x1x435xf32, #tpu.memory_space<vmem>>, vector<1x1x256xf32>
    %68 = vector.shape_cast %67 : vector<1x1x256xf32> to vector<1x256xf32>
    %c1_19 = arith.constant 1 : index
    %c0_20 = arith.constant 0 : index
    %c78_21 = arith.constant 78 : index
    %69 = vector.load %arg5[%c1_19, %c0_20, %c78_21] : memref<2x1x435xf32, #tpu.memory_space<vmem>>, vector<1x1x256xf32>
    %70 = vector.shape_cast %69 : vector<1x1x256xf32> to vector<1x256xf32>
    %c1_22 = arith.constant 1 : index
    %71 = memref.load %arg3[%c1_22] : memref<98xf32, #tpu.memory_space<smem>>
    %72 = vector.broadcast %71 : f32 to vector<1x256xf32>
    %73 = arith.mulf %72, %68 : vector<1x256xf32>
    %c50 = arith.constant 50 : index
    %74 = memref.load %arg3[%c50] : memref<98xf32, #tpu.memory_space<smem>>
    %75 = vector.broadcast %74 : f32 to vector<1x256xf32>
    %76 = arith.mulf %75, %70 : vector<1x256xf32>
    %77 = arith.addf %73, %76 : vector<1x256xf32>
    %78 = arith.andi %51, %20 : vector<1x256xi1>
    %cst_23 = arith.constant 0.000000e+00 : f32
    %79 = vector.broadcast %cst_23 : f32 to vector<1x256xf32>
    %80 = arith.select %78, %77, %79 : vector<1x256xi1>, vector<1x256xf32>
    %81 = arith.addf %66, %80 : vector<1x256xf32>
    %c0_24 = arith.constant 0 : index
    %c0_25 = arith.constant 0 : index
    %c79 = arith.constant 79 : index
    %82 = vector.load %arg5[%c0_24, %c0_25, %c79] : memref<2x1x435xf32, #tpu.memory_space<vmem>>, vector<1x1x256xf32>
    %83 = vector.shape_cast %82 : vector<1x1x256xf32> to vector<1x256xf32>
    %c1_26 = arith.constant 1 : index
    %c0_27 = arith.constant 0 : index
    %c79_28 = arith.constant 79 : index
    %84 = vector.load %arg5[%c1_26, %c0_27, %c79_28] : memref<2x1x435xf32, #tpu.memory_space<vmem>>, vector<1x1x256xf32>
    %85 = vector.shape_cast %84 : vector<1x1x256xf32> to vector<1x256xf32>
    %c2 = arith.constant 2 : index
    %86 = memref.load %arg3[%c2] : memref<98xf32, #tpu.memory_space<smem>>
    %87 = vector.broadcast %86 : f32 to vector<1x256xf32>
    %88 = arith.mulf %87, %83 : vector<1x256xf32>
    %c51 = arith.constant 51 : index
    %89 = memref.load %arg3[%c51] : memref<98xf32, #tpu.memory_space<smem>>
    %90 = vector.broadcast %89 : f32 to vector<1x256xf32>
    %91 = arith.mulf %90, %85 : vector<1x256xf32>
    %92 = arith.addf %88, %91 : vector<1x256xf32>
    %93 = arith.andi %51, %25 : vector<1x256xi1>
    %cst_29 = arith.constant 0.000000e+00 : f32
    %94 = vector.broadcast %cst_29 : f32 to vector<1x256xf32>
    %95 = arith.select %93, %92, %94 : vector<1x256xi1>, vector<1x256xf32>
    %96 = arith.addf %81, %95 : vector<1x256xf32>
    %c0_30 = arith.constant 0 : index
    %c0_31 = arith.constant 0 : index
    %c80 = arith.constant 80 : index
    %97 = vector.load %arg5[%c0_30, %c0_31, %c80] : memref<2x1x435xf32, #tpu.memory_space<vmem>>, vector<1x1x256xf32>
    %98 = vector.shape_cast %97 : vector<1x1x256xf32> to vector<1x256xf32>
    %c1_32 = arith.constant 1 : index
    %c0_33 = arith.constant 0 : index
    %c80_34 = arith.constant 80 : index
    %99 = vector.load %arg5[%c1_32, %c0_33, %c80_34] : memref<2x1x435xf32, #tpu.memory_space<vmem>>, vector<1x1x256xf32>
    %100 = vector.shape_cast %99 : vector<1x1x256xf32> to vector<1x256xf32>
    %c3 = arith.constant 3 : index
    %101 = memref.load %arg3[%c3] : memref<98xf32, #tpu.memory_space<smem>>
    %102 = vector.broadcast %101 : f32 to vector<1x256xf32>
    %103 = arith.mulf %102, %98 : vector<1x256xf32>
    %c52 = arith.constant 52 : index
    %104 = memref.load %arg3[%c52] : memref<98xf32, #tpu.memory_space<smem>>
    %105 = vector.broadcast %104 : f32 to vector<1x256xf32>
    %106 = arith.mulf %105, %100 : vector<1x256xf32>
    %107 = arith.addf %103, %106 : vector<1x256xf32>
    %108 = arith.andi %51, %30 : vector<1x256xi1>
    %cst_35 = arith.constant 0.000000e+00 : f32
    %109 = vector.broadcast %cst_35 : f32 to vector<1x256xf32>
    %110 = arith.select %108, %107, %109 : vector<1x256xi1>, vector<1x256xf32>
    %111 = arith.addf %96, %110 : vector<1x256xf32>
    %c0_36 = arith.constant 0 : index
    %c0_37 = arith.constant 0 : index
    %c81 = arith.constant 81 : index
    %112 = vector.load %arg5[%c0_36, %c0_37, %c81] : memref<2x1x435xf32, #tpu.memory_space<vmem>>, vector<1x1x256xf32>
    %113 = vector.shape_cast %112 : vector<1x1x256xf32> to vector<1x256xf32>
    %c1_38 = arith.constant 1 : index
    %c0_39 = arith.constant 0 : index
    %c81_40 = arith.constant 81 : index
    %114 = vector.load %arg5[%c1_38, %c0_39, %c81_40] : memref<2x1x435xf32, #tpu.memory_space<vmem>>, vector<1x1x256xf32>
    %115 = vector.shape_cast %114 : vector<1x1x256xf32> to vector<1x256xf32>
    %c4 = arith.constant 4 : index
    %116 = memref.load %arg3[%c4] : memref<98xf32, #tpu.memory_space<smem>>
    %117 = vector.broadcast %116 : f32 to vector<1x256xf32>
    %118 = arith.mulf %117, %113 : vector<1x256xf32>
    %c53 = arith.constant 53 : index
    %119 = memref.load %arg3[%c53] : memref<98xf32, #tpu.memory_space<smem>>
    %120 = vector.broadcast %119 : f32 to vector<1x256xf32>
    %121 = arith.mulf %120, %115 : vector<1x256xf32>
    %122 = arith.addf %118, %121 : vector<1x256xf32>
    %123 = arith.andi %51, %35 : vector<1x256xi1>
    %cst_41 = arith.constant 0.000000e+00 : f32
    %124 = vector.broadcast %cst_41 : f32 to vector<1x256xf32>
    %125 = arith.select %123, %122, %124 : vector<1x256xi1>, vector<1x256xf32>
    %126 = arith.addf %111, %125 : vector<1x256xf32>
    %c0_42 = arith.constant 0 : index
    %c0_43 = arith.constant 0 : index
    %c82 = arith.constant 82 : index
    %127 = vector.load %arg5[%c0_42, %c0_43, %c82] : memref<2x1x435xf32, #tpu.memory_space<vmem>>, vector<1x1x256xf32>
    %128 = vector.shape_cast %127 : vector<1x1x256xf32> to vector<1x256xf32>
    %c1_44 = arith.constant 1 : index
    %c0_45 = arith.constant 0 : index
    %c82_46 = arith.constant 82 : index
    %129 = vector.load %arg5[%c1_44, %c0_45, %c82_46] : memref<2x1x435xf32, #tpu.memory_space<vmem>>, vector<1x1x256xf32>
    %130 = vector.shape_cast %129 : vector<1x1x256xf32> to vector<1x256xf32>
    %c5 = arith.constant 5 : index
    %131 = memref.load %arg3[%c5] : memref<98xf32, #tpu.memory_space<smem>>
    %132 = vector.broadcast %131 : f32 to vector<1x256xf32>
    %133 = arith.mulf %132, %128 : vector<1x256xf32>
    %c54 = arith.constant 54 : index
    %134 = memref.load %arg3[%c54] : memref<98xf32, #tpu.memory_space<smem>>
    %135 = vector.broadcast %134 : f32 to vector<1x256xf32>
    %136 = arith.mulf %135, %130 : vector<1x256xf32>
    %137 = arith.addf %133, %136 : vector<1x256xf32>
    %138 = arith.andi %51, %40 : vector<1x256xi1>
    %cst_47 = arith.constant 0.000000e+00 : f32
    %139 = vector.broadcast %cst_47 : f32 to vector<1x256xf32>
    %140 = arith.select %138, %137, %139 : vector<1x256xi1>, vector<1x256xf32>
    %141 = arith.addf %126, %140 : vector<1x256xf32>
    %c0_48 = arith.constant 0 : index
    %c0_49 = arith.constant 0 : index
    %c83 = arith.constant 83 : index
    %142 = vector.load %arg5[%c0_48, %c0_49, %c83] : memref<2x1x435xf32, #tpu.memory_space<vmem>>, vector<1x1x256xf32>
    %143 = vector.shape_cast %142 : vector<1x1x256xf32> to vector<1x256xf32>
    %c1_50 = arith.constant 1 : index
    %c0_51 = arith.constant 0 : index
    %c83_52 = arith.constant 83 : index
    %144 = vector.load %arg5[%c1_50, %c0_51, %c83_52] : memref<2x1x435xf32, #tpu.memory_space<vmem>>, vector<1x1x256xf32>
    %145 = vector.shape_cast %144 : vector<1x1x256xf32> to vector<1x256xf32>
    %c6 = arith.constant 6 : index
    %146 = memref.load %arg3[%c6] : memref<98xf32, #tpu.memory_space<smem>>
    %147 = vector.broadcast %146 : f32 to vector<1x256xf32>
    %148 = arith.mulf %147, %143 : vector<1x256xf32>
    %c55 = arith.constant 55 : index
    %149 = memref.load %arg3[%c55] : memref<98xf32, #tpu.memory_space<smem>>
    %150 = vector.broadcast %149 : f32 to vector<1x256xf32>
    %151 = arith.mulf %150, %145 : vector<1x256xf32>
    %152 = arith.addf %148, %151 : vector<1x256xf32>
    %153 = arith.andi %51, %45 : vector<1x256xi1>
    %cst_53 = arith.constant 0.000000e+00 : f32
    %154 = vector.broadcast %cst_53 : f32 to vector<1x256xf32>
    %155 = arith.select %153, %152, %154 : vector<1x256xi1>, vector<1x256xf32>
    %156 = arith.addf %141, %155 : vector<1x256xf32>
    %c32_i32 = arith.constant 32 : i32
    %157 = vector.broadcast %c32_i32 : i32 to vector<1x256xi32>
    %158 = arith.cmpi sge, %9, %157 : vector<1x256xi32>
    %c288_i32 = arith.constant 288 : i32
    %159 = vector.broadcast %c288_i32 : i32 to vector<1x256xi32>
    %160 = arith.cmpi slt, %9, %159 : vector<1x256xi32>
    %161 = arith.andi %158, %160 : vector<1x256xi1>
    %c0_54 = arith.constant 0 : index
    %c0_55 = arith.constant 0 : index
    %c93 = arith.constant 93 : index
    %162 = vector.load %arg5[%c0_54, %c0_55, %c93] : memref<2x1x435xf32, #tpu.memory_space<vmem>>, vector<1x1x256xf32>
    %163 = vector.shape_cast %162 : vector<1x1x256xf32> to vector<1x256xf32>
    %c1_56 = arith.constant 1 : index
    %c0_57 = arith.constant 0 : index
    %c93_58 = arith.constant 93 : index
    %164 = vector.load %arg5[%c1_56, %c0_57, %c93_58] : memref<2x1x435xf32, #tpu.memory_space<vmem>>, vector<1x1x256xf32>
    %165 = vector.shape_cast %164 : vector<1x1x256xf32> to vector<1x256xf32>
    %c7 = arith.constant 7 : index
    %166 = memref.load %arg3[%c7] : memref<98xf32, #tpu.memory_space<smem>>
    %167 = vector.broadcast %166 : f32 to vector<1x256xf32>
    %168 = arith.mulf %167, %163 : vector<1x256xf32>
    %c56 = arith.constant 56 : index
    %169 = memref.load %arg3[%c56] : memref<98xf32, #tpu.memory_space<smem>>
    %170 = vector.broadcast %169 : f32 to vector<1x256xf32>
    %171 = arith.mulf %170, %165 : vector<1x256xf32>
    %172 = arith.addf %168, %171 : vector<1x256xf32>
    %173 = arith.andi %161, %15 : vector<1x256xi1>
    %cst_59 = arith.constant 0.000000e+00 : f32
    %174 = vector.broadcast %cst_59 : f32 to vector<1x256xf32>
    %175 = arith.select %173, %172, %174 : vector<1x256xi1>, vector<1x256xf32>
    %176 = arith.addf %156, %175 : vector<1x256xf32>
    %c0_60 = arith.constant 0 : index
    %c0_61 = arith.constant 0 : index
    %c94 = arith.constant 94 : index
    %177 = vector.load %arg5[%c0_60, %c0_61, %c94] : memref<2x1x435xf32, #tpu.memory_space<vmem>>, vector<1x1x256xf32>
    %178 = vector.shape_cast %177 : vector<1x1x256xf32> to vector<1x256xf32>
    %c1_62 = arith.constant 1 : index
    %c0_63 = arith.constant 0 : index
    %c94_64 = arith.constant 94 : index
    %179 = vector.load %arg5[%c1_62, %c0_63, %c94_64] : memref<2x1x435xf32, #tpu.memory_space<vmem>>, vector<1x1x256xf32>
    %180 = vector.shape_cast %179 : vector<1x1x256xf32> to vector<1x256xf32>
    %c8 = arith.constant 8 : index
    %181 = memref.load %arg3[%c8] : memref<98xf32, #tpu.memory_space<smem>>
    %182 = vector.broadcast %181 : f32 to vector<1x256xf32>
    %183 = arith.mulf %182, %178 : vector<1x256xf32>
    %c57 = arith.constant 57 : index
    %184 = memref.load %arg3[%c57] : memref<98xf32, #tpu.memory_space<smem>>
    %185 = vector.broadcast %184 : f32 to vector<1x256xf32>
    %186 = arith.mulf %185, %180 : vector<1x256xf32>
    %187 = arith.addf %183, %186 : vector<1x256xf32>
    %188 = arith.andi %161, %20 : vector<1x256xi1>
    %cst_65 = arith.constant 0.000000e+00 : f32
    %189 = vector.broadcast %cst_65 : f32 to vector<1x256xf32>
    %190 = arith.select %188, %187, %189 : vector<1x256xi1>, vector<1x256xf32>
    %191 = arith.addf %176, %190 : vector<1x256xf32>
    %c0_66 = arith.constant 0 : index
    %c0_67 = arith.constant 0 : index
    %c95 = arith.constant 95 : index
    %192 = vector.load %arg5[%c0_66, %c0_67, %c95] : memref<2x1x435xf32, #tpu.memory_space<vmem>>, vector<1x1x256xf32>
    %193 = vector.shape_cast %192 : vector<1x1x256xf32> to vector<1x256xf32>
    %c1_68 = arith.constant 1 : index
    %c0_69 = arith.constant 0 : index
    %c95_70 = arith.constant 95 : index
    %194 = vector.load %arg5[%c1_68, %c0_69, %c95_70] : memref<2x1x435xf32, #tpu.memory_space<vmem>>, vector<1x1x256xf32>
    %195 = vector.shape_cast %194 : vector<1x1x256xf32> to vector<1x256xf32>
    %c9 = arith.constant 9 : index
    %196 = memref.load %arg3[%c9] : memref<98xf32, #tpu.memory_space<smem>>
    %197 = vector.broadcast %196 : f32 to vector<1x256xf32>
    %198 = arith.mulf %197, %193 : vector<1x256xf32>
    %c58 = arith.constant 58 : index
    %199 = memref.load %arg3[%c58] : memref<98xf32, #tpu.memory_space<smem>>
    %200 = vector.broadcast %199 : f32 to vector<1x256xf32>
    %201 = arith.mulf %200, %195 : vector<1x256xf32>
    %202 = arith.addf %198, %201 : vector<1x256xf32>
    %203 = arith.andi %161, %25 : vector<1x256xi1>
    %cst_71 = arith.constant 0.000000e+00 : f32
    %204 = vector.broadcast %cst_71 : f32 to vector<1x256xf32>
    %205 = arith.select %203, %202, %204 : vector<1x256xi1>, vector<1x256xf32>
    %206 = arith.addf %191, %205 : vector<1x256xf32>
    %c0_72 = arith.constant 0 : index
    %c0_73 = arith.constant 0 : index
    %c96 = arith.constant 96 : index
    %207 = vector.load %arg5[%c0_72, %c0_73, %c96] : memref<2x1x435xf32, #tpu.memory_space<vmem>>, vector<1x1x256xf32>
    %208 = vector.shape_cast %207 : vector<1x1x256xf32> to vector<1x256xf32>
    %c1_74 = arith.constant 1 : index
    %c0_75 = arith.constant 0 : index
    %c96_76 = arith.constant 96 : index
    %209 = vector.load %arg5[%c1_74, %c0_75, %c96_76] : memref<2x1x435xf32, #tpu.memory_space<vmem>>, vector<1x1x256xf32>
    %210 = vector.shape_cast %209 : vector<1x1x256xf32> to vector<1x256xf32>
    %c10 = arith.constant 10 : index
    %211 = memref.load %arg3[%c10] : memref<98xf32, #tpu.memory_space<smem>>
    %212 = vector.broadcast %211 : f32 to vector<1x256xf32>
    %213 = arith.mulf %212, %208 : vector<1x256xf32>
    %c59 = arith.constant 59 : index
    %214 = memref.load %arg3[%c59] : memref<98xf32, #tpu.memory_space<smem>>
    %215 = vector.broadcast %214 : f32 to vector<1x256xf32>
    %216 = arith.mulf %215, %210 : vector<1x256xf32>
    %217 = arith.addf %213, %216 : vector<1x256xf32>
    %218 = arith.andi %161, %30 : vector<1x256xi1>
    %cst_77 = arith.constant 0.000000e+00 : f32
    %219 = vector.broadcast %cst_77 : f32 to vector<1x256xf32>
    %220 = arith.select %218, %217, %219 : vector<1x256xi1>, vector<1x256xf32>
    %221 = arith.addf %206, %220 : vector<1x256xf32>
    %c0_78 = arith.constant 0 : index
    %c0_79 = arith.constant 0 : index
    %c97 = arith.constant 97 : index
    %222 = vector.load %arg5[%c0_78, %c0_79, %c97] : memref<2x1x435xf32, #tpu.memory_space<vmem>>, vector<1x1x256xf32>
    %223 = vector.shape_cast %222 : vector<1x1x256xf32> to vector<1x256xf32>
    %c1_80 = arith.constant 1 : index
    %c0_81 = arith.constant 0 : index
    %c97_82 = arith.constant 97 : index
    %224 = vector.load %arg5[%c1_80, %c0_81, %c97_82] : memref<2x1x435xf32, #tpu.memory_space<vmem>>, vector<1x1x256xf32>
    %225 = vector.shape_cast %224 : vector<1x1x256xf32> to vector<1x256xf32>
    %c11 = arith.constant 11 : index
    %226 = memref.load %arg3[%c11] : memref<98xf32, #tpu.memory_space<smem>>
    %227 = vector.broadcast %226 : f32 to vector<1x256xf32>
    %228 = arith.mulf %227, %223 : vector<1x256xf32>
    %c60 = arith.constant 60 : index
    %229 = memref.load %arg3[%c60] : memref<98xf32, #tpu.memory_space<smem>>
    %230 = vector.broadcast %229 : f32 to vector<1x256xf32>
    %231 = arith.mulf %230, %225 : vector<1x256xf32>
    %232 = arith.addf %228, %231 : vector<1x256xf32>
    %233 = arith.andi %161, %35 : vector<1x256xi1>
    %cst_83 = arith.constant 0.000000e+00 : f32
    %234 = vector.broadcast %cst_83 : f32 to vector<1x256xf32>
    %235 = arith.select %233, %232, %234 : vector<1x256xi1>, vector<1x256xf32>
    %236 = arith.addf %221, %235 : vector<1x256xf32>
    %c0_84 = arith.constant 0 : index
    %c0_85 = arith.constant 0 : index
    %c98 = arith.constant 98 : index
    %237 = vector.load %arg5[%c0_84, %c0_85, %c98] : memref<2x1x435xf32, #tpu.memory_space<vmem>>, vector<1x1x256xf32>
    %238 = vector.shape_cast %237 : vector<1x1x256xf32> to vector<1x256xf32>
    %c1_86 = arith.constant 1 : index
    %c0_87 = arith.constant 0 : index
    %c98_88 = arith.constant 98 : index
    %239 = vector.load %arg5[%c1_86, %c0_87, %c98_88] : memref<2x1x435xf32, #tpu.memory_space<vmem>>, vector<1x1x256xf32>
    %240 = vector.shape_cast %239 : vector<1x1x256xf32> to vector<1x256xf32>
    %c12 = arith.constant 12 : index
    %241 = memref.load %arg3[%c12] : memref<98xf32, #tpu.memory_space<smem>>
    %242 = vector.broadcast %241 : f32 to vector<1x256xf32>
    %243 = arith.mulf %242, %238 : vector<1x256xf32>
    %c61 = arith.constant 61 : index
    %244 = memref.load %arg3[%c61] : memref<98xf32, #tpu.memory_space<smem>>
    %245 = vector.broadcast %244 : f32 to vector<1x256xf32>
    %246 = arith.mulf %245, %240 : vector<1x256xf32>
    %247 = arith.addf %243, %246 : vector<1x256xf32>
    %248 = arith.andi %161, %40 : vector<1x256xi1>
    %cst_89 = arith.constant 0.000000e+00 : f32
    %249 = vector.broadcast %cst_89 : f32 to vector<1x256xf32>
    %250 = arith.select %248, %247, %249 : vector<1x256xi1>, vector<1x256xf32>
    %251 = arith.addf %236, %250 : vector<1x256xf32>
    %c0_90 = arith.constant 0 : index
    %c0_91 = arith.constant 0 : index
    %c99 = arith.constant 99 : index
    %252 = vector.load %arg5[%c0_90, %c0_91, %c99] : memref<2x1x435xf32, #tpu.memory_space<vmem>>, vector<1x1x256xf32>
    %253 = vector.shape_cast %252 : vector<1x1x256xf32> to vector<1x256xf32>
    %c1_92 = arith.constant 1 : index
    %c0_93 = arith.constant 0 : index
    %c99_94 = arith.constant 99 : index
    %254 = vector.load %arg5[%c1_92, %c0_93, %c99_94] : memref<2x1x435xf32, #tpu.memory_space<vmem>>, vector<1x1x256xf32>
    %255 = vector.shape_cast %254 : vector<1x1x256xf32> to vector<1x256xf32>
    %c13 = arith.constant 13 : index
    %256 = memref.load %arg3[%c13] : memref<98xf32, #tpu.memory_space<smem>>
    %257 = vector.broadcast %256 : f32 to vector<1x256xf32>
    %258 = arith.mulf %257, %253 : vector<1x256xf32>
    %c62 = arith.constant 62 : index
    %259 = memref.load %arg3[%c62] : memref<98xf32, #tpu.memory_space<smem>>
    %260 = vector.broadcast %259 : f32 to vector<1x256xf32>
    %261 = arith.mulf %260, %255 : vector<1x256xf32>
    %262 = arith.addf %258, %261 : vector<1x256xf32>
    %263 = arith.andi %161, %45 : vector<1x256xi1>
    %cst_95 = arith.constant 0.000000e+00 : f32
    %264 = vector.broadcast %cst_95 : f32 to vector<1x256xf32>
    %265 = arith.select %263, %262, %264 : vector<1x256xi1>, vector<1x256xf32>
    %266 = arith.addf %251, %265 : vector<1x256xf32>
    %c16_i32_96 = arith.constant 16 : i32
    %267 = vector.broadcast %c16_i32_96 : i32 to vector<1x256xi32>
    %268 = arith.cmpi sge, %9, %267 : vector<1x256xi32>
    %c272_i32 = arith.constant 272 : i32
    %269 = vector.broadcast %c272_i32 : i32 to vector<1x256xi32>
    %270 = arith.cmpi slt, %9, %269 : vector<1x256xi32>
    %271 = arith.andi %268, %270 : vector<1x256xi1>
    %c0_97 = arith.constant 0 : index
    %c0_98 = arith.constant 0 : index
    %c109 = arith.constant 109 : index
    %272 = vector.load %arg5[%c0_97, %c0_98, %c109] : memref<2x1x435xf32, #tpu.memory_space<vmem>>, vector<1x1x256xf32>
    %273 = vector.shape_cast %272 : vector<1x1x256xf32> to vector<1x256xf32>
    %c1_99 = arith.constant 1 : index
    %c0_100 = arith.constant 0 : index
    %c109_101 = arith.constant 109 : index
    %274 = vector.load %arg5[%c1_99, %c0_100, %c109_101] : memref<2x1x435xf32, #tpu.memory_space<vmem>>, vector<1x1x256xf32>
    %275 = vector.shape_cast %274 : vector<1x1x256xf32> to vector<1x256xf32>
    %c14 = arith.constant 14 : index
    %276 = memref.load %arg3[%c14] : memref<98xf32, #tpu.memory_space<smem>>
    %277 = vector.broadcast %276 : f32 to vector<1x256xf32>
    %278 = arith.mulf %277, %273 : vector<1x256xf32>
    %c63 = arith.constant 63 : index
    %279 = memref.load %arg3[%c63] : memref<98xf32, #tpu.memory_space<smem>>
    %280 = vector.broadcast %279 : f32 to vector<1x256xf32>
    %281 = arith.mulf %280, %275 : vector<1x256xf32>
    %282 = arith.addf %278, %281 : vector<1x256xf32>
    %283 = arith.andi %271, %15 : vector<1x256xi1>
    %cst_102 = arith.constant 0.000000e+00 : f32
    %284 = vector.broadcast %cst_102 : f32 to vector<1x256xf32>
    %285 = arith.select %283, %282, %284 : vector<1x256xi1>, vector<1x256xf32>
    %286 = arith.addf %266, %285 : vector<1x256xf32>
    %c0_103 = arith.constant 0 : index
    %c0_104 = arith.constant 0 : index
    %c110 = arith.constant 110 : index
    %287 = vector.load %arg5[%c0_103, %c0_104, %c110] : memref<2x1x435xf32, #tpu.memory_space<vmem>>, vector<1x1x256xf32>
    %288 = vector.shape_cast %287 : vector<1x1x256xf32> to vector<1x256xf32>
    %c1_105 = arith.constant 1 : index
    %c0_106 = arith.constant 0 : index
    %c110_107 = arith.constant 110 : index
    %289 = vector.load %arg5[%c1_105, %c0_106, %c110_107] : memref<2x1x435xf32, #tpu.memory_space<vmem>>, vector<1x1x256xf32>
    %290 = vector.shape_cast %289 : vector<1x1x256xf32> to vector<1x256xf32>
    %c15 = arith.constant 15 : index
    %291 = memref.load %arg3[%c15] : memref<98xf32, #tpu.memory_space<smem>>
    %292 = vector.broadcast %291 : f32 to vector<1x256xf32>
    %293 = arith.mulf %292, %288 : vector<1x256xf32>
    %c64 = arith.constant 64 : index
    %294 = memref.load %arg3[%c64] : memref<98xf32, #tpu.memory_space<smem>>
    %295 = vector.broadcast %294 : f32 to vector<1x256xf32>
    %296 = arith.mulf %295, %290 : vector<1x256xf32>
    %297 = arith.addf %293, %296 : vector<1x256xf32>
    %298 = arith.andi %271, %20 : vector<1x256xi1>
    %cst_108 = arith.constant 0.000000e+00 : f32
    %299 = vector.broadcast %cst_108 : f32 to vector<1x256xf32>
    %300 = arith.select %298, %297, %299 : vector<1x256xi1>, vector<1x256xf32>
    %301 = arith.addf %286, %300 : vector<1x256xf32>
    %c0_109 = arith.constant 0 : index
    %c0_110 = arith.constant 0 : index
    %c111 = arith.constant 111 : index
    %302 = vector.load %arg5[%c0_109, %c0_110, %c111] : memref<2x1x435xf32, #tpu.memory_space<vmem>>, vector<1x1x256xf32>
    %303 = vector.shape_cast %302 : vector<1x1x256xf32> to vector<1x256xf32>
    %c1_111 = arith.constant 1 : index
    %c0_112 = arith.constant 0 : index
    %c111_113 = arith.constant 111 : index
    %304 = vector.load %arg5[%c1_111, %c0_112, %c111_113] : memref<2x1x435xf32, #tpu.memory_space<vmem>>, vector<1x1x256xf32>
    %305 = vector.shape_cast %304 : vector<1x1x256xf32> to vector<1x256xf32>
    %c16 = arith.constant 16 : index
    %306 = memref.load %arg3[%c16] : memref<98xf32, #tpu.memory_space<smem>>
    %307 = vector.broadcast %306 : f32 to vector<1x256xf32>
    %308 = arith.mulf %307, %303 : vector<1x256xf32>
    %c65 = arith.constant 65 : index
    %309 = memref.load %arg3[%c65] : memref<98xf32, #tpu.memory_space<smem>>
    %310 = vector.broadcast %309 : f32 to vector<1x256xf32>
    %311 = arith.mulf %310, %305 : vector<1x256xf32>
    %312 = arith.addf %308, %311 : vector<1x256xf32>
    %313 = arith.andi %271, %25 : vector<1x256xi1>
    %cst_114 = arith.constant 0.000000e+00 : f32
    %314 = vector.broadcast %cst_114 : f32 to vector<1x256xf32>
    %315 = arith.select %313, %312, %314 : vector<1x256xi1>, vector<1x256xf32>
    %316 = arith.addf %301, %315 : vector<1x256xf32>
    %c0_115 = arith.constant 0 : index
    %c0_116 = arith.constant 0 : index
    %c112 = arith.constant 112 : index
    %317 = vector.load %arg5[%c0_115, %c0_116, %c112] : memref<2x1x435xf32, #tpu.memory_space<vmem>>, vector<1x1x256xf32>
    %318 = vector.shape_cast %317 : vector<1x1x256xf32> to vector<1x256xf32>
    %c1_117 = arith.constant 1 : index
    %c0_118 = arith.constant 0 : index
    %c112_119 = arith.constant 112 : index
    %319 = vector.load %arg5[%c1_117, %c0_118, %c112_119] : memref<2x1x435xf32, #tpu.memory_space<vmem>>, vector<1x1x256xf32>
    %320 = vector.shape_cast %319 : vector<1x1x256xf32> to vector<1x256xf32>
    %c17 = arith.constant 17 : index
    %321 = memref.load %arg3[%c17] : memref<98xf32, #tpu.memory_space<smem>>
    %322 = vector.broadcast %321 : f32 to vector<1x256xf32>
    %323 = arith.mulf %322, %318 : vector<1x256xf32>
    %c66 = arith.constant 66 : index
    %324 = memref.load %arg3[%c66] : memref<98xf32, #tpu.memory_space<smem>>
    %325 = vector.broadcast %324 : f32 to vector<1x256xf32>
    %326 = arith.mulf %325, %320 : vector<1x256xf32>
    %327 = arith.addf %323, %326 : vector<1x256xf32>
    %328 = arith.andi %271, %30 : vector<1x256xi1>
    %cst_120 = arith.constant 0.000000e+00 : f32
    %329 = vector.broadcast %cst_120 : f32 to vector<1x256xf32>
    %330 = arith.select %328, %327, %329 : vector<1x256xi1>, vector<1x256xf32>
    %331 = arith.addf %316, %330 : vector<1x256xf32>
    %c0_121 = arith.constant 0 : index
    %c0_122 = arith.constant 0 : index
    %c113 = arith.constant 113 : index
    %332 = vector.load %arg5[%c0_121, %c0_122, %c113] : memref<2x1x435xf32, #tpu.memory_space<vmem>>, vector<1x1x256xf32>
    %333 = vector.shape_cast %332 : vector<1x1x256xf32> to vector<1x256xf32>
    %c1_123 = arith.constant 1 : index
    %c0_124 = arith.constant 0 : index
    %c113_125 = arith.constant 113 : index
    %334 = vector.load %arg5[%c1_123, %c0_124, %c113_125] : memref<2x1x435xf32, #tpu.memory_space<vmem>>, vector<1x1x256xf32>
    %335 = vector.shape_cast %334 : vector<1x1x256xf32> to vector<1x256xf32>
    %c18 = arith.constant 18 : index
    %336 = memref.load %arg3[%c18] : memref<98xf32, #tpu.memory_space<smem>>
    %337 = vector.broadcast %336 : f32 to vector<1x256xf32>
    %338 = arith.mulf %337, %333 : vector<1x256xf32>
    %c67 = arith.constant 67 : index
    %339 = memref.load %arg3[%c67] : memref<98xf32, #tpu.memory_space<smem>>
    %340 = vector.broadcast %339 : f32 to vector<1x256xf32>
    %341 = arith.mulf %340, %335 : vector<1x256xf32>
    %342 = arith.addf %338, %341 : vector<1x256xf32>
    %343 = arith.andi %271, %35 : vector<1x256xi1>
    %cst_126 = arith.constant 0.000000e+00 : f32
    %344 = vector.broadcast %cst_126 : f32 to vector<1x256xf32>
    %345 = arith.select %343, %342, %344 : vector<1x256xi1>, vector<1x256xf32>
    %346 = arith.addf %331, %345 : vector<1x256xf32>
    %c0_127 = arith.constant 0 : index
    %c0_128 = arith.constant 0 : index
    %c114 = arith.constant 114 : index
    %347 = vector.load %arg5[%c0_127, %c0_128, %c114] : memref<2x1x435xf32, #tpu.memory_space<vmem>>, vector<1x1x256xf32>
    %348 = vector.shape_cast %347 : vector<1x1x256xf32> to vector<1x256xf32>
    %c1_129 = arith.constant 1 : index
    %c0_130 = arith.constant 0 : index
    %c114_131 = arith.constant 114 : index
    %349 = vector.load %arg5[%c1_129, %c0_130, %c114_131] : memref<2x1x435xf32, #tpu.memory_space<vmem>>, vector<1x1x256xf32>
    %350 = vector.shape_cast %349 : vector<1x1x256xf32> to vector<1x256xf32>
    %c19 = arith.constant 19 : index
    %351 = memref.load %arg3[%c19] : memref<98xf32, #tpu.memory_space<smem>>
    %352 = vector.broadcast %351 : f32 to vector<1x256xf32>
    %353 = arith.mulf %352, %348 : vector<1x256xf32>
    %c68 = arith.constant 68 : index
    %354 = memref.load %arg3[%c68] : memref<98xf32, #tpu.memory_space<smem>>
    %355 = vector.broadcast %354 : f32 to vector<1x256xf32>
    %356 = arith.mulf %355, %350 : vector<1x256xf32>
    %357 = arith.addf %353, %356 : vector<1x256xf32>
    %358 = arith.andi %271, %40 : vector<1x256xi1>
    %cst_132 = arith.constant 0.000000e+00 : f32
    %359 = vector.broadcast %cst_132 : f32 to vector<1x256xf32>
    %360 = arith.select %358, %357, %359 : vector<1x256xi1>, vector<1x256xf32>
    %361 = arith.addf %346, %360 : vector<1x256xf32>
    %c0_133 = arith.constant 0 : index
    %c0_134 = arith.constant 0 : index
    %c115 = arith.constant 115 : index
    %362 = vector.load %arg5[%c0_133, %c0_134, %c115] : memref<2x1x435xf32, #tpu.memory_space<vmem>>, vector<1x1x256xf32>
    %363 = vector.shape_cast %362 : vector<1x1x256xf32> to vector<1x256xf32>
    %c1_135 = arith.constant 1 : index
    %c0_136 = arith.constant 0 : index
    %c115_137 = arith.constant 115 : index
    %364 = vector.load %arg5[%c1_135, %c0_136, %c115_137] : memref<2x1x435xf32, #tpu.memory_space<vmem>>, vector<1x1x256xf32>
    %365 = vector.shape_cast %364 : vector<1x1x256xf32> to vector<1x256xf32>
    %c20 = arith.constant 20 : index
    %366 = memref.load %arg3[%c20] : memref<98xf32, #tpu.memory_space<smem>>
    %367 = vector.broadcast %366 : f32 to vector<1x256xf32>
    %368 = arith.mulf %367, %363 : vector<1x256xf32>
    %c69 = arith.constant 69 : index
    %369 = memref.load %arg3[%c69] : memref<98xf32, #tpu.memory_space<smem>>
    %370 = vector.broadcast %369 : f32 to vector<1x256xf32>
    %371 = arith.mulf %370, %365 : vector<1x256xf32>
    %372 = arith.addf %368, %371 : vector<1x256xf32>
    %373 = arith.andi %271, %45 : vector<1x256xi1>
    %cst_138 = arith.constant 0.000000e+00 : f32
    %374 = vector.broadcast %cst_138 : f32 to vector<1x256xf32>
    %375 = arith.select %373, %372, %374 : vector<1x256xi1>, vector<1x256xf32>
    %376 = arith.addf %361, %375 : vector<1x256xf32>
    %c0_i32_139 = arith.constant 0 : i32
    %377 = vector.broadcast %c0_i32_139 : i32 to vector<1x256xi32>
    %378 = arith.cmpi sge, %9, %377 : vector<1x256xi32>
    %c256_i32 = arith.constant 256 : i32
    %379 = vector.broadcast %c256_i32 : i32 to vector<1x256xi32>
    %380 = arith.cmpi slt, %9, %379 : vector<1x256xi32>
    %381 = arith.andi %378, %380 : vector<1x256xi1>
    %c0_140 = arith.constant 0 : index
    %c0_141 = arith.constant 0 : index
    %c125 = arith.constant 125 : index
    %382 = vector.load %arg5[%c0_140, %c0_141, %c125] : memref<2x1x435xf32, #tpu.memory_space<vmem>>, vector<1x1x256xf32>
    %383 = vector.shape_cast %382 : vector<1x1x256xf32> to vector<1x256xf32>
    %c1_142 = arith.constant 1 : index
    %c0_143 = arith.constant 0 : index
    %c125_144 = arith.constant 125 : index
    %384 = vector.load %arg5[%c1_142, %c0_143, %c125_144] : memref<2x1x435xf32, #tpu.memory_space<vmem>>, vector<1x1x256xf32>
    %385 = vector.shape_cast %384 : vector<1x1x256xf32> to vector<1x256xf32>
    %c21 = arith.constant 21 : index
    %386 = memref.load %arg3[%c21] : memref<98xf32, #tpu.memory_space<smem>>
    %387 = vector.broadcast %386 : f32 to vector<1x256xf32>
    %388 = arith.mulf %387, %383 : vector<1x256xf32>
    %c70 = arith.constant 70 : index
    %389 = memref.load %arg3[%c70] : memref<98xf32, #tpu.memory_space<smem>>
    %390 = vector.broadcast %389 : f32 to vector<1x256xf32>
    %391 = arith.mulf %390, %385 : vector<1x256xf32>
    %392 = arith.addf %388, %391 : vector<1x256xf32>
    %393 = arith.andi %381, %15 : vector<1x256xi1>
    %cst_145 = arith.constant 0.000000e+00 : f32
    %394 = vector.broadcast %cst_145 : f32 to vector<1x256xf32>
    %395 = arith.select %393, %392, %394 : vector<1x256xi1>, vector<1x256xf32>
    %396 = arith.addf %376, %395 : vector<1x256xf32>
    %c0_146 = arith.constant 0 : index
    %c0_147 = arith.constant 0 : index
    %c126 = arith.constant 126 : index
    %397 = vector.load %arg5[%c0_146, %c0_147, %c126] : memref<2x1x435xf32, #tpu.memory_space<vmem>>, vector<1x1x256xf32>
    %398 = vector.shape_cast %397 : vector<1x1x256xf32> to vector<1x256xf32>
    %c1_148 = arith.constant 1 : index
    %c0_149 = arith.constant 0 : index
    %c126_150 = arith.constant 126 : index
    %399 = vector.load %arg5[%c1_148, %c0_149, %c126_150] : memref<2x1x435xf32, #tpu.memory_space<vmem>>, vector<1x1x256xf32>
    %400 = vector.shape_cast %399 : vector<1x1x256xf32> to vector<1x256xf32>
    %c22 = arith.constant 22 : index
    %401 = memref.load %arg3[%c22] : memref<98xf32, #tpu.memory_space<smem>>
    %402 = vector.broadcast %401 : f32 to vector<1x256xf32>
    %403 = arith.mulf %402, %398 : vector<1x256xf32>
    %c71 = arith.constant 71 : index
    %404 = memref.load %arg3[%c71] : memref<98xf32, #tpu.memory_space<smem>>
    %405 = vector.broadcast %404 : f32 to vector<1x256xf32>
    %406 = arith.mulf %405, %400 : vector<1x256xf32>
    %407 = arith.addf %403, %406 : vector<1x256xf32>
    %408 = arith.andi %381, %20 : vector<1x256xi1>
    %cst_151 = arith.constant 0.000000e+00 : f32
    %409 = vector.broadcast %cst_151 : f32 to vector<1x256xf32>
    %410 = arith.select %408, %407, %409 : vector<1x256xi1>, vector<1x256xf32>
    %411 = arith.addf %396, %410 : vector<1x256xf32>
    %c0_152 = arith.constant 0 : index
    %c0_153 = arith.constant 0 : index
    %c127 = arith.constant 127 : index
    %412 = vector.load %arg5[%c0_152, %c0_153, %c127] : memref<2x1x435xf32, #tpu.memory_space<vmem>>, vector<1x1x256xf32>
    %413 = vector.shape_cast %412 : vector<1x1x256xf32> to vector<1x256xf32>
    %c1_154 = arith.constant 1 : index
    %c0_155 = arith.constant 0 : index
    %c127_156 = arith.constant 127 : index
    %414 = vector.load %arg5[%c1_154, %c0_155, %c127_156] : memref<2x1x435xf32, #tpu.memory_space<vmem>>, vector<1x1x256xf32>
    %415 = vector.shape_cast %414 : vector<1x1x256xf32> to vector<1x256xf32>
    %c23 = arith.constant 23 : index
    %416 = memref.load %arg3[%c23] : memref<98xf32, #tpu.memory_space<smem>>
    %417 = vector.broadcast %416 : f32 to vector<1x256xf32>
    %418 = arith.mulf %417, %413 : vector<1x256xf32>
    %c72 = arith.constant 72 : index
    %419 = memref.load %arg3[%c72] : memref<98xf32, #tpu.memory_space<smem>>
    %420 = vector.broadcast %419 : f32 to vector<1x256xf32>
    %421 = arith.mulf %420, %415 : vector<1x256xf32>
    %422 = arith.addf %418, %421 : vector<1x256xf32>
    %423 = arith.andi %381, %25 : vector<1x256xi1>
    %cst_157 = arith.constant 0.000000e+00 : f32
    %424 = vector.broadcast %cst_157 : f32 to vector<1x256xf32>
    %425 = arith.select %423, %422, %424 : vector<1x256xi1>, vector<1x256xf32>
    %426 = arith.addf %411, %425 : vector<1x256xf32>
    %c0_158 = arith.constant 0 : index
    %c0_159 = arith.constant 0 : index
    %c128_160 = arith.constant 128 : index
    %427 = vector.load %arg5[%c0_158, %c0_159, %c128_160] : memref<2x1x435xf32, #tpu.memory_space<vmem>>, vector<1x1x256xf32>
    %428 = vector.shape_cast %427 : vector<1x1x256xf32> to vector<1x256xf32>
    %c1_161 = arith.constant 1 : index
    %c0_162 = arith.constant 0 : index
    %c128_163 = arith.constant 128 : index
    %429 = vector.load %arg5[%c1_161, %c0_162, %c128_163] : memref<2x1x435xf32, #tpu.memory_space<vmem>>, vector<1x1x256xf32>
    %430 = vector.shape_cast %429 : vector<1x1x256xf32> to vector<1x256xf32>
    %c24 = arith.constant 24 : index
    %431 = memref.load %arg3[%c24] : memref<98xf32, #tpu.memory_space<smem>>
    %432 = vector.broadcast %431 : f32 to vector<1x256xf32>
    %433 = arith.mulf %432, %428 : vector<1x256xf32>
    %c73 = arith.constant 73 : index
    %434 = memref.load %arg3[%c73] : memref<98xf32, #tpu.memory_space<smem>>
    %435 = vector.broadcast %434 : f32 to vector<1x256xf32>
    %436 = arith.mulf %435, %430 : vector<1x256xf32>
    %437 = arith.addf %433, %436 : vector<1x256xf32>
    %438 = arith.andi %381, %30 : vector<1x256xi1>
    %cst_164 = arith.constant 0.000000e+00 : f32
    %439 = vector.broadcast %cst_164 : f32 to vector<1x256xf32>
    %440 = arith.select %438, %437, %439 : vector<1x256xi1>, vector<1x256xf32>
    %441 = arith.addf %426, %440 : vector<1x256xf32>
    %c0_165 = arith.constant 0 : index
    %c0_166 = arith.constant 0 : index
    %c129 = arith.constant 129 : index
    %442 = vector.load %arg5[%c0_165, %c0_166, %c129] : memref<2x1x435xf32, #tpu.memory_space<vmem>>, vector<1x1x256xf32>
    %443 = vector.shape_cast %442 : vector<1x1x256xf32> to vector<1x256xf32>
    %c1_167 = arith.constant 1 : index
    %c0_168 = arith.constant 0 : index
    %c129_169 = arith.constant 129 : index
    %444 = vector.load %arg5[%c1_167, %c0_168, %c129_169] : memref<2x1x435xf32, #tpu.memory_space<vmem>>, vector<1x1x256xf32>
    %445 = vector.shape_cast %444 : vector<1x1x256xf32> to vector<1x256xf32>
    %c25 = arith.constant 25 : index
    %446 = memref.load %arg3[%c25] : memref<98xf32, #tpu.memory_space<smem>>
    %447 = vector.broadcast %446 : f32 to vector<1x256xf32>
    %448 = arith.mulf %447, %443 : vector<1x256xf32>
    %c74 = arith.constant 74 : index
    %449 = memref.load %arg3[%c74] : memref<98xf32, #tpu.memory_space<smem>>
    %450 = vector.broadcast %449 : f32 to vector<1x256xf32>
    %451 = arith.mulf %450, %445 : vector<1x256xf32>
    %452 = arith.addf %448, %451 : vector<1x256xf32>
    %453 = arith.andi %381, %35 : vector<1x256xi1>
    %cst_170 = arith.constant 0.000000e+00 : f32
    %454 = vector.broadcast %cst_170 : f32 to vector<1x256xf32>
    %455 = arith.select %453, %452, %454 : vector<1x256xi1>, vector<1x256xf32>
    %456 = arith.addf %441, %455 : vector<1x256xf32>
    %c0_171 = arith.constant 0 : index
    %c0_172 = arith.constant 0 : index
    %c130 = arith.constant 130 : index
    %457 = vector.load %arg5[%c0_171, %c0_172, %c130] : memref<2x1x435xf32, #tpu.memory_space<vmem>>, vector<1x1x256xf32>
    %458 = vector.shape_cast %457 : vector<1x1x256xf32> to vector<1x256xf32>
    %c1_173 = arith.constant 1 : index
    %c0_174 = arith.constant 0 : index
    %c130_175 = arith.constant 130 : index
    %459 = vector.load %arg5[%c1_173, %c0_174, %c130_175] : memref<2x1x435xf32, #tpu.memory_space<vmem>>, vector<1x1x256xf32>
    %460 = vector.shape_cast %459 : vector<1x1x256xf32> to vector<1x256xf32>
    %c26 = arith.constant 26 : index
    %461 = memref.load %arg3[%c26] : memref<98xf32, #tpu.memory_space<smem>>
    %462 = vector.broadcast %461 : f32 to vector<1x256xf32>
    %463 = arith.mulf %462, %458 : vector<1x256xf32>
    %c75 = arith.constant 75 : index
    %464 = memref.load %arg3[%c75] : memref<98xf32, #tpu.memory_space<smem>>
    %465 = vector.broadcast %464 : f32 to vector<1x256xf32>
    %466 = arith.mulf %465, %460 : vector<1x256xf32>
    %467 = arith.addf %463, %466 : vector<1x256xf32>
    %468 = arith.andi %381, %40 : vector<1x256xi1>
    %cst_176 = arith.constant 0.000000e+00 : f32
    %469 = vector.broadcast %cst_176 : f32 to vector<1x256xf32>
    %470 = arith.select %468, %467, %469 : vector<1x256xi1>, vector<1x256xf32>
    %471 = arith.addf %456, %470 : vector<1x256xf32>
    %c0_177 = arith.constant 0 : index
    %c0_178 = arith.constant 0 : index
    %c131 = arith.constant 131 : index
    %472 = vector.load %arg5[%c0_177, %c0_178, %c131] : memref<2x1x435xf32, #tpu.memory_space<vmem>>, vector<1x1x256xf32>
    %473 = vector.shape_cast %472 : vector<1x1x256xf32> to vector<1x256xf32>
    %c1_179 = arith.constant 1 : index
    %c0_180 = arith.constant 0 : index
    %c131_181 = arith.constant 131 : index
    %474 = vector.load %arg5[%c1_179, %c0_180, %c131_181] : memref<2x1x435xf32, #tpu.memory_space<vmem>>, vector<1x1x256xf32>
    %475 = vector.shape_cast %474 : vector<1x1x256xf32> to vector<1x256xf32>
    %c27 = arith.constant 27 : index
    %476 = memref.load %arg3[%c27] : memref<98xf32, #tpu.memory_space<smem>>
    %477 = vector.broadcast %476 : f32 to vector<1x256xf32>
    %478 = arith.mulf %477, %473 : vector<1x256xf32>
    %c76 = arith.constant 76 : index
    %479 = memref.load %arg3[%c76] : memref<98xf32, #tpu.memory_space<smem>>
    %480 = vector.broadcast %479 : f32 to vector<1x256xf32>
    %481 = arith.mulf %480, %475 : vector<1x256xf32>
    %482 = arith.addf %478, %481 : vector<1x256xf32>
    %483 = arith.andi %381, %45 : vector<1x256xi1>
    %cst_182 = arith.constant 0.000000e+00 : f32
    %484 = vector.broadcast %cst_182 : f32 to vector<1x256xf32>
    %485 = arith.select %483, %482, %484 : vector<1x256xi1>, vector<1x256xf32>
    %486 = arith.addf %471, %485 : vector<1x256xf32>
    %c-16_i32 = arith.constant -16 : i32
    %487 = vector.broadcast %c-16_i32 : i32 to vector<1x256xi32>
    %488 = arith.cmpi sge, %9, %487 : vector<1x256xi32>
    %c240_i32 = arith.constant 240 : i32
    %489 = vector.broadcast %c240_i32 : i32 to vector<1x256xi32>
    %490 = arith.cmpi slt, %9, %489 : vector<1x256xi32>
    %491 = arith.andi %488, %490 : vector<1x256xi1>
    %c0_183 = arith.constant 0 : index
    %c0_184 = arith.constant 0 : index
    %c141 = arith.constant 141 : index
    %492 = vector.load %arg5[%c0_183, %c0_184, %c141] : memref<2x1x435xf32, #tpu.memory_space<vmem>>, vector<1x1x256xf32>
    %493 = vector.shape_cast %492 : vector<1x1x256xf32> to vector<1x256xf32>
    %c1_185 = arith.constant 1 : index
    %c0_186 = arith.constant 0 : index
    %c141_187 = arith.constant 141 : index
    %494 = vector.load %arg5[%c1_185, %c0_186, %c141_187] : memref<2x1x435xf32, #tpu.memory_space<vmem>>, vector<1x1x256xf32>
    %495 = vector.shape_cast %494 : vector<1x1x256xf32> to vector<1x256xf32>
    %c28 = arith.constant 28 : index
    %496 = memref.load %arg3[%c28] : memref<98xf32, #tpu.memory_space<smem>>
    %497 = vector.broadcast %496 : f32 to vector<1x256xf32>
    %498 = arith.mulf %497, %493 : vector<1x256xf32>
    %c77_188 = arith.constant 77 : index
    %499 = memref.load %arg3[%c77_188] : memref<98xf32, #tpu.memory_space<smem>>
    %500 = vector.broadcast %499 : f32 to vector<1x256xf32>
    %501 = arith.mulf %500, %495 : vector<1x256xf32>
    %502 = arith.addf %498, %501 : vector<1x256xf32>
    %503 = arith.andi %491, %15 : vector<1x256xi1>
    %cst_189 = arith.constant 0.000000e+00 : f32
    %504 = vector.broadcast %cst_189 : f32 to vector<1x256xf32>
    %505 = arith.select %503, %502, %504 : vector<1x256xi1>, vector<1x256xf32>
    %506 = arith.addf %486, %505 : vector<1x256xf32>
    %c0_190 = arith.constant 0 : index
    %c0_191 = arith.constant 0 : index
    %c142 = arith.constant 142 : index
    %507 = vector.load %arg5[%c0_190, %c0_191, %c142] : memref<2x1x435xf32, #tpu.memory_space<vmem>>, vector<1x1x256xf32>
    %508 = vector.shape_cast %507 : vector<1x1x256xf32> to vector<1x256xf32>
    %c1_192 = arith.constant 1 : index
    %c0_193 = arith.constant 0 : index
    %c142_194 = arith.constant 142 : index
    %509 = vector.load %arg5[%c1_192, %c0_193, %c142_194] : memref<2x1x435xf32, #tpu.memory_space<vmem>>, vector<1x1x256xf32>
    %510 = vector.shape_cast %509 : vector<1x1x256xf32> to vector<1x256xf32>
    %c29 = arith.constant 29 : index
    %511 = memref.load %arg3[%c29] : memref<98xf32, #tpu.memory_space<smem>>
    %512 = vector.broadcast %511 : f32 to vector<1x256xf32>
    %513 = arith.mulf %512, %508 : vector<1x256xf32>
    %c78_195 = arith.constant 78 : index
    %514 = memref.load %arg3[%c78_195] : memref<98xf32, #tpu.memory_space<smem>>
    %515 = vector.broadcast %514 : f32 to vector<1x256xf32>
    %516 = arith.mulf %515, %510 : vector<1x256xf32>
    %517 = arith.addf %513, %516 : vector<1x256xf32>
    %518 = arith.andi %491, %20 : vector<1x256xi1>
    %cst_196 = arith.constant 0.000000e+00 : f32
    %519 = vector.broadcast %cst_196 : f32 to vector<1x256xf32>
    %520 = arith.select %518, %517, %519 : vector<1x256xi1>, vector<1x256xf32>
    %521 = arith.addf %506, %520 : vector<1x256xf32>
    %c0_197 = arith.constant 0 : index
    %c0_198 = arith.constant 0 : index
    %c143 = arith.constant 143 : index
    %522 = vector.load %arg5[%c0_197, %c0_198, %c143] : memref<2x1x435xf32, #tpu.memory_space<vmem>>, vector<1x1x256xf32>
    %523 = vector.shape_cast %522 : vector<1x1x256xf32> to vector<1x256xf32>
    %c1_199 = arith.constant 1 : index
    %c0_200 = arith.constant 0 : index
    %c143_201 = arith.constant 143 : index
    %524 = vector.load %arg5[%c1_199, %c0_200, %c143_201] : memref<2x1x435xf32, #tpu.memory_space<vmem>>, vector<1x1x256xf32>
    %525 = vector.shape_cast %524 : vector<1x1x256xf32> to vector<1x256xf32>
    %c30 = arith.constant 30 : index
    %526 = memref.load %arg3[%c30] : memref<98xf32, #tpu.memory_space<smem>>
    %527 = vector.broadcast %526 : f32 to vector<1x256xf32>
    %528 = arith.mulf %527, %523 : vector<1x256xf32>
    %c79_202 = arith.constant 79 : index
    %529 = memref.load %arg3[%c79_202] : memref<98xf32, #tpu.memory_space<smem>>
    %530 = vector.broadcast %529 : f32 to vector<1x256xf32>
    %531 = arith.mulf %530, %525 : vector<1x256xf32>
    %532 = arith.addf %528, %531 : vector<1x256xf32>
    %533 = arith.andi %491, %25 : vector<1x256xi1>
    %cst_203 = arith.constant 0.000000e+00 : f32
    %534 = vector.broadcast %cst_203 : f32 to vector<1x256xf32>
    %535 = arith.select %533, %532, %534 : vector<1x256xi1>, vector<1x256xf32>
    %536 = arith.addf %521, %535 : vector<1x256xf32>
    %c0_204 = arith.constant 0 : index
    %c0_205 = arith.constant 0 : index
    %c144 = arith.constant 144 : index
    %537 = vector.load %arg5[%c0_204, %c0_205, %c144] : memref<2x1x435xf32, #tpu.memory_space<vmem>>, vector<1x1x256xf32>
    %538 = vector.shape_cast %537 : vector<1x1x256xf32> to vector<1x256xf32>
    %c1_206 = arith.constant 1 : index
    %c0_207 = arith.constant 0 : index
    %c144_208 = arith.constant 144 : index
    %539 = vector.load %arg5[%c1_206, %c0_207, %c144_208] : memref<2x1x435xf32, #tpu.memory_space<vmem>>, vector<1x1x256xf32>
    %540 = vector.shape_cast %539 : vector<1x1x256xf32> to vector<1x256xf32>
    %c31 = arith.constant 31 : index
    %541 = memref.load %arg3[%c31] : memref<98xf32, #tpu.memory_space<smem>>
    %542 = vector.broadcast %541 : f32 to vector<1x256xf32>
    %543 = arith.mulf %542, %538 : vector<1x256xf32>
    %c80_209 = arith.constant 80 : index
    %544 = memref.load %arg3[%c80_209] : memref<98xf32, #tpu.memory_space<smem>>
    %545 = vector.broadcast %544 : f32 to vector<1x256xf32>
    %546 = arith.mulf %545, %540 : vector<1x256xf32>
    %547 = arith.addf %543, %546 : vector<1x256xf32>
    %548 = arith.andi %491, %30 : vector<1x256xi1>
    %cst_210 = arith.constant 0.000000e+00 : f32
    %549 = vector.broadcast %cst_210 : f32 to vector<1x256xf32>
    %550 = arith.select %548, %547, %549 : vector<1x256xi1>, vector<1x256xf32>
    %551 = arith.addf %536, %550 : vector<1x256xf32>
    %c0_211 = arith.constant 0 : index
    %c0_212 = arith.constant 0 : index
    %c145 = arith.constant 145 : index
    %552 = vector.load %arg5[%c0_211, %c0_212, %c145] : memref<2x1x435xf32, #tpu.memory_space<vmem>>, vector<1x1x256xf32>
    %553 = vector.shape_cast %552 : vector<1x1x256xf32> to vector<1x256xf32>
    %c1_213 = arith.constant 1 : index
    %c0_214 = arith.constant 0 : index
    %c145_215 = arith.constant 145 : index
    %554 = vector.load %arg5[%c1_213, %c0_214, %c145_215] : memref<2x1x435xf32, #tpu.memory_space<vmem>>, vector<1x1x256xf32>
    %555 = vector.shape_cast %554 : vector<1x1x256xf32> to vector<1x256xf32>
    %c32 = arith.constant 32 : index
    %556 = memref.load %arg3[%c32] : memref<98xf32, #tpu.memory_space<smem>>
    %557 = vector.broadcast %556 : f32 to vector<1x256xf32>
    %558 = arith.mulf %557, %553 : vector<1x256xf32>
    %c81_216 = arith.constant 81 : index
    %559 = memref.load %arg3[%c81_216] : memref<98xf32, #tpu.memory_space<smem>>
    %560 = vector.broadcast %559 : f32 to vector<1x256xf32>
    %561 = arith.mulf %560, %555 : vector<1x256xf32>
    %562 = arith.addf %558, %561 : vector<1x256xf32>
    %563 = arith.andi %491, %35 : vector<1x256xi1>
    %cst_217 = arith.constant 0.000000e+00 : f32
    %564 = vector.broadcast %cst_217 : f32 to vector<1x256xf32>
    %565 = arith.select %563, %562, %564 : vector<1x256xi1>, vector<1x256xf32>
    %566 = arith.addf %551, %565 : vector<1x256xf32>
    %c0_218 = arith.constant 0 : index
    %c0_219 = arith.constant 0 : index
    %c146 = arith.constant 146 : index
    %567 = vector.load %arg5[%c0_218, %c0_219, %c146] : memref<2x1x435xf32, #tpu.memory_space<vmem>>, vector<1x1x256xf32>
    %568 = vector.shape_cast %567 : vector<1x1x256xf32> to vector<1x256xf32>
    %c1_220 = arith.constant 1 : index
    %c0_221 = arith.constant 0 : index
    %c146_222 = arith.constant 146 : index
    %569 = vector.load %arg5[%c1_220, %c0_221, %c146_222] : memref<2x1x435xf32, #tpu.memory_space<vmem>>, vector<1x1x256xf32>
    %570 = vector.shape_cast %569 : vector<1x1x256xf32> to vector<1x256xf32>
    %c33 = arith.constant 33 : index
    %571 = memref.load %arg3[%c33] : memref<98xf32, #tpu.memory_space<smem>>
    %572 = vector.broadcast %571 : f32 to vector<1x256xf32>
    %573 = arith.mulf %572, %568 : vector<1x256xf32>
    %c82_223 = arith.constant 82 : index
    %574 = memref.load %arg3[%c82_223] : memref<98xf32, #tpu.memory_space<smem>>
    %575 = vector.broadcast %574 : f32 to vector<1x256xf32>
    %576 = arith.mulf %575, %570 : vector<1x256xf32>
    %577 = arith.addf %573, %576 : vector<1x256xf32>
    %578 = arith.andi %491, %40 : vector<1x256xi1>
    %cst_224 = arith.constant 0.000000e+00 : f32
    %579 = vector.broadcast %cst_224 : f32 to vector<1x256xf32>
    %580 = arith.select %578, %577, %579 : vector<1x256xi1>, vector<1x256xf32>
    %581 = arith.addf %566, %580 : vector<1x256xf32>
    %c0_225 = arith.constant 0 : index
    %c0_226 = arith.constant 0 : index
    %c147 = arith.constant 147 : index
    %582 = vector.load %arg5[%c0_225, %c0_226, %c147] : memref<2x1x435xf32, #tpu.memory_space<vmem>>, vector<1x1x256xf32>
    %583 = vector.shape_cast %582 : vector<1x1x256xf32> to vector<1x256xf32>
    %c1_227 = arith.constant 1 : index
    %c0_228 = arith.constant 0 : index
    %c147_229 = arith.constant 147 : index
    %584 = vector.load %arg5[%c1_227, %c0_228, %c147_229] : memref<2x1x435xf32, #tpu.memory_space<vmem>>, vector<1x1x256xf32>
    %585 = vector.shape_cast %584 : vector<1x1x256xf32> to vector<1x256xf32>
    %c34 = arith.constant 34 : index
    %586 = memref.load %arg3[%c34] : memref<98xf32, #tpu.memory_space<smem>>
    %587 = vector.broadcast %586 : f32 to vector<1x256xf32>
    %588 = arith.mulf %587, %583 : vector<1x256xf32>
    %c83_230 = arith.constant 83 : index
    %589 = memref.load %arg3[%c83_230] : memref<98xf32, #tpu.memory_space<smem>>
    %590 = vector.broadcast %589 : f32 to vector<1x256xf32>
    %591 = arith.mulf %590, %585 : vector<1x256xf32>
    %592 = arith.addf %588, %591 : vector<1x256xf32>
    %593 = arith.andi %491, %45 : vector<1x256xi1>
    %cst_231 = arith.constant 0.000000e+00 : f32
    %594 = vector.broadcast %cst_231 : f32 to vector<1x256xf32>
    %595 = arith.select %593, %592, %594 : vector<1x256xi1>, vector<1x256xf32>
    %596 = arith.addf %581, %595 : vector<1x256xf32>
    %c-32_i32 = arith.constant -32 : i32
    %597 = vector.broadcast %c-32_i32 : i32 to vector<1x256xi32>
    %598 = arith.cmpi sge, %9, %597 : vector<1x256xi32>
    %c224_i32 = arith.constant 224 : i32
    %599 = vector.broadcast %c224_i32 : i32 to vector<1x256xi32>
    %600 = arith.cmpi slt, %9, %599 : vector<1x256xi32>
    %601 = arith.andi %598, %600 : vector<1x256xi1>
    %c0_232 = arith.constant 0 : index
    %c0_233 = arith.constant 0 : index
    %c157 = arith.constant 157 : index
    %602 = vector.load %arg5[%c0_232, %c0_233, %c157] : memref<2x1x435xf32, #tpu.memory_space<vmem>>, vector<1x1x256xf32>
    %603 = vector.shape_cast %602 : vector<1x1x256xf32> to vector<1x256xf32>
    %c1_234 = arith.constant 1 : index
    %c0_235 = arith.constant 0 : index
    %c157_236 = arith.constant 157 : index
    %604 = vector.load %arg5[%c1_234, %c0_235, %c157_236] : memref<2x1x435xf32, #tpu.memory_space<vmem>>, vector<1x1x256xf32>
    %605 = vector.shape_cast %604 : vector<1x1x256xf32> to vector<1x256xf32>
    %c35 = arith.constant 35 : index
    %606 = memref.load %arg3[%c35] : memref<98xf32, #tpu.memory_space<smem>>
    %607 = vector.broadcast %606 : f32 to vector<1x256xf32>
    %608 = arith.mulf %607, %603 : vector<1x256xf32>
    %c84 = arith.constant 84 : index
    %609 = memref.load %arg3[%c84] : memref<98xf32, #tpu.memory_space<smem>>
    %610 = vector.broadcast %609 : f32 to vector<1x256xf32>
    %611 = arith.mulf %610, %605 : vector<1x256xf32>
    %612 = arith.addf %608, %611 : vector<1x256xf32>
    %613 = arith.andi %601, %15 : vector<1x256xi1>
    %cst_237 = arith.constant 0.000000e+00 : f32
    %614 = vector.broadcast %cst_237 : f32 to vector<1x256xf32>
    %615 = arith.select %613, %612, %614 : vector<1x256xi1>, vector<1x256xf32>
    %616 = arith.addf %596, %615 : vector<1x256xf32>
    %c0_238 = arith.constant 0 : index
    %c0_239 = arith.constant 0 : index
    %c158 = arith.constant 158 : index
    %617 = vector.load %arg5[%c0_238, %c0_239, %c158] : memref<2x1x435xf32, #tpu.memory_space<vmem>>, vector<1x1x256xf32>
    %618 = vector.shape_cast %617 : vector<1x1x256xf32> to vector<1x256xf32>
    %c1_240 = arith.constant 1 : index
    %c0_241 = arith.constant 0 : index
    %c158_242 = arith.constant 158 : index
    %619 = vector.load %arg5[%c1_240, %c0_241, %c158_242] : memref<2x1x435xf32, #tpu.memory_space<vmem>>, vector<1x1x256xf32>
    %620 = vector.shape_cast %619 : vector<1x1x256xf32> to vector<1x256xf32>
    %c36 = arith.constant 36 : index
    %621 = memref.load %arg3[%c36] : memref<98xf32, #tpu.memory_space<smem>>
    %622 = vector.broadcast %621 : f32 to vector<1x256xf32>
    %623 = arith.mulf %622, %618 : vector<1x256xf32>
    %c85 = arith.constant 85 : index
    %624 = memref.load %arg3[%c85] : memref<98xf32, #tpu.memory_space<smem>>
    %625 = vector.broadcast %624 : f32 to vector<1x256xf32>
    %626 = arith.mulf %625, %620 : vector<1x256xf32>
    %627 = arith.addf %623, %626 : vector<1x256xf32>
    %628 = arith.andi %601, %20 : vector<1x256xi1>
    %cst_243 = arith.constant 0.000000e+00 : f32
    %629 = vector.broadcast %cst_243 : f32 to vector<1x256xf32>
    %630 = arith.select %628, %627, %629 : vector<1x256xi1>, vector<1x256xf32>
    %631 = arith.addf %616, %630 : vector<1x256xf32>
    %c0_244 = arith.constant 0 : index
    %c0_245 = arith.constant 0 : index
    %c159 = arith.constant 159 : index
    %632 = vector.load %arg5[%c0_244, %c0_245, %c159] : memref<2x1x435xf32, #tpu.memory_space<vmem>>, vector<1x1x256xf32>
    %633 = vector.shape_cast %632 : vector<1x1x256xf32> to vector<1x256xf32>
    %c1_246 = arith.constant 1 : index
    %c0_247 = arith.constant 0 : index
    %c159_248 = arith.constant 159 : index
    %634 = vector.load %arg5[%c1_246, %c0_247, %c159_248] : memref<2x1x435xf32, #tpu.memory_space<vmem>>, vector<1x1x256xf32>
    %635 = vector.shape_cast %634 : vector<1x1x256xf32> to vector<1x256xf32>
    %c37 = arith.constant 37 : index
    %636 = memref.load %arg3[%c37] : memref<98xf32, #tpu.memory_space<smem>>
    %637 = vector.broadcast %636 : f32 to vector<1x256xf32>
    %638 = arith.mulf %637, %633 : vector<1x256xf32>
    %c86 = arith.constant 86 : index
    %639 = memref.load %arg3[%c86] : memref<98xf32, #tpu.memory_space<smem>>
    %640 = vector.broadcast %639 : f32 to vector<1x256xf32>
    %641 = arith.mulf %640, %635 : vector<1x256xf32>
    %642 = arith.addf %638, %641 : vector<1x256xf32>
    %643 = arith.andi %601, %25 : vector<1x256xi1>
    %cst_249 = arith.constant 0.000000e+00 : f32
    %644 = vector.broadcast %cst_249 : f32 to vector<1x256xf32>
    %645 = arith.select %643, %642, %644 : vector<1x256xi1>, vector<1x256xf32>
    %646 = arith.addf %631, %645 : vector<1x256xf32>
    %c0_250 = arith.constant 0 : index
    %c0_251 = arith.constant 0 : index
    %c160 = arith.constant 160 : index
    %647 = vector.load %arg5[%c0_250, %c0_251, %c160] : memref<2x1x435xf32, #tpu.memory_space<vmem>>, vector<1x1x256xf32>
    %648 = vector.shape_cast %647 : vector<1x1x256xf32> to vector<1x256xf32>
    %c1_252 = arith.constant 1 : index
    %c0_253 = arith.constant 0 : index
    %c160_254 = arith.constant 160 : index
    %649 = vector.load %arg5[%c1_252, %c0_253, %c160_254] : memref<2x1x435xf32, #tpu.memory_space<vmem>>, vector<1x1x256xf32>
    %650 = vector.shape_cast %649 : vector<1x1x256xf32> to vector<1x256xf32>
    %c38 = arith.constant 38 : index
    %651 = memref.load %arg3[%c38] : memref<98xf32, #tpu.memory_space<smem>>
    %652 = vector.broadcast %651 : f32 to vector<1x256xf32>
    %653 = arith.mulf %652, %648 : vector<1x256xf32>
    %c87 = arith.constant 87 : index
    %654 = memref.load %arg3[%c87] : memref<98xf32, #tpu.memory_space<smem>>
    %655 = vector.broadcast %654 : f32 to vector<1x256xf32>
    %656 = arith.mulf %655, %650 : vector<1x256xf32>
    %657 = arith.addf %653, %656 : vector<1x256xf32>
    %658 = arith.andi %601, %30 : vector<1x256xi1>
    %cst_255 = arith.constant 0.000000e+00 : f32
    %659 = vector.broadcast %cst_255 : f32 to vector<1x256xf32>
    %660 = arith.select %658, %657, %659 : vector<1x256xi1>, vector<1x256xf32>
    %661 = arith.addf %646, %660 : vector<1x256xf32>
    %c0_256 = arith.constant 0 : index
    %c0_257 = arith.constant 0 : index
    %c161 = arith.constant 161 : index
    %662 = vector.load %arg5[%c0_256, %c0_257, %c161] : memref<2x1x435xf32, #tpu.memory_space<vmem>>, vector<1x1x256xf32>
    %663 = vector.shape_cast %662 : vector<1x1x256xf32> to vector<1x256xf32>
    %c1_258 = arith.constant 1 : index
    %c0_259 = arith.constant 0 : index
    %c161_260 = arith.constant 161 : index
    %664 = vector.load %arg5[%c1_258, %c0_259, %c161_260] : memref<2x1x435xf32, #tpu.memory_space<vmem>>, vector<1x1x256xf32>
    %665 = vector.shape_cast %664 : vector<1x1x256xf32> to vector<1x256xf32>
    %c39 = arith.constant 39 : index
    %666 = memref.load %arg3[%c39] : memref<98xf32, #tpu.memory_space<smem>>
    %667 = vector.broadcast %666 : f32 to vector<1x256xf32>
    %668 = arith.mulf %667, %663 : vector<1x256xf32>
    %c88 = arith.constant 88 : index
    %669 = memref.load %arg3[%c88] : memref<98xf32, #tpu.memory_space<smem>>
    %670 = vector.broadcast %669 : f32 to vector<1x256xf32>
    %671 = arith.mulf %670, %665 : vector<1x256xf32>
    %672 = arith.addf %668, %671 : vector<1x256xf32>
    %673 = arith.andi %601, %35 : vector<1x256xi1>
    %cst_261 = arith.constant 0.000000e+00 : f32
    %674 = vector.broadcast %cst_261 : f32 to vector<1x256xf32>
    %675 = arith.select %673, %672, %674 : vector<1x256xi1>, vector<1x256xf32>
    %676 = arith.addf %661, %675 : vector<1x256xf32>
    %c0_262 = arith.constant 0 : index
    %c0_263 = arith.constant 0 : index
    %c162 = arith.constant 162 : index
    %677 = vector.load %arg5[%c0_262, %c0_263, %c162] : memref<2x1x435xf32, #tpu.memory_space<vmem>>, vector<1x1x256xf32>
    %678 = vector.shape_cast %677 : vector<1x1x256xf32> to vector<1x256xf32>
    %c1_264 = arith.constant 1 : index
    %c0_265 = arith.constant 0 : index
    %c162_266 = arith.constant 162 : index
    %679 = vector.load %arg5[%c1_264, %c0_265, %c162_266] : memref<2x1x435xf32, #tpu.memory_space<vmem>>, vector<1x1x256xf32>
    %680 = vector.shape_cast %679 : vector<1x1x256xf32> to vector<1x256xf32>
    %c40 = arith.constant 40 : index
    %681 = memref.load %arg3[%c40] : memref<98xf32, #tpu.memory_space<smem>>
    %682 = vector.broadcast %681 : f32 to vector<1x256xf32>
    %683 = arith.mulf %682, %678 : vector<1x256xf32>
    %c89 = arith.constant 89 : index
    %684 = memref.load %arg3[%c89] : memref<98xf32, #tpu.memory_space<smem>>
    %685 = vector.broadcast %684 : f32 to vector<1x256xf32>
    %686 = arith.mulf %685, %680 : vector<1x256xf32>
    %687 = arith.addf %683, %686 : vector<1x256xf32>
    %688 = arith.andi %601, %40 : vector<1x256xi1>
    %cst_267 = arith.constant 0.000000e+00 : f32
    %689 = vector.broadcast %cst_267 : f32 to vector<1x256xf32>
    %690 = arith.select %688, %687, %689 : vector<1x256xi1>, vector<1x256xf32>
    %691 = arith.addf %676, %690 : vector<1x256xf32>
    %c0_268 = arith.constant 0 : index
    %c0_269 = arith.constant 0 : index
    %c163 = arith.constant 163 : index
    %692 = vector.load %arg5[%c0_268, %c0_269, %c163] : memref<2x1x435xf32, #tpu.memory_space<vmem>>, vector<1x1x256xf32>
    %693 = vector.shape_cast %692 : vector<1x1x256xf32> to vector<1x256xf32>
    %c1_270 = arith.constant 1 : index
    %c0_271 = arith.constant 0 : index
    %c163_272 = arith.constant 163 : index
    %694 = vector.load %arg5[%c1_270, %c0_271, %c163_272] : memref<2x1x435xf32, #tpu.memory_space<vmem>>, vector<1x1x256xf32>
    %695 = vector.shape_cast %694 : vector<1x1x256xf32> to vector<1x256xf32>
    %c41 = arith.constant 41 : index
    %696 = memref.load %arg3[%c41] : memref<98xf32, #tpu.memory_space<smem>>
    %697 = vector.broadcast %696 : f32 to vector<1x256xf32>
    %698 = arith.mulf %697, %693 : vector<1x256xf32>
    %c90 = arith.constant 90 : index
    %699 = memref.load %arg3[%c90] : memref<98xf32, #tpu.memory_space<smem>>
    %700 = vector.broadcast %699 : f32 to vector<1x256xf32>
    %701 = arith.mulf %700, %695 : vector<1x256xf32>
    %702 = arith.addf %698, %701 : vector<1x256xf32>
    %703 = arith.andi %601, %45 : vector<1x256xi1>
    %cst_273 = arith.constant 0.000000e+00 : f32
    %704 = vector.broadcast %cst_273 : f32 to vector<1x256xf32>
    %705 = arith.select %703, %702, %704 : vector<1x256xi1>, vector<1x256xf32>
    %706 = arith.addf %691, %705 : vector<1x256xf32>
    %c-48_i32 = arith.constant -48 : i32
    %707 = vector.broadcast %c-48_i32 : i32 to vector<1x256xi32>
    %708 = arith.cmpi sge, %9, %707 : vector<1x256xi32>
    %c208_i32 = arith.constant 208 : i32
    %709 = vector.broadcast %c208_i32 : i32 to vector<1x256xi32>
    %710 = arith.cmpi slt, %9, %709 : vector<1x256xi32>
    %711 = arith.andi %708, %710 : vector<1x256xi1>
    %c0_274 = arith.constant 0 : index
    %c0_275 = arith.constant 0 : index
    %c173 = arith.constant 173 : index
    %712 = vector.load %arg5[%c0_274, %c0_275, %c173] : memref<2x1x435xf32, #tpu.memory_space<vmem>>, vector<1x1x256xf32>
    %713 = vector.shape_cast %712 : vector<1x1x256xf32> to vector<1x256xf32>
    %c1_276 = arith.constant 1 : index
    %c0_277 = arith.constant 0 : index
    %c173_278 = arith.constant 173 : index
    %714 = vector.load %arg5[%c1_276, %c0_277, %c173_278] : memref<2x1x435xf32, #tpu.memory_space<vmem>>, vector<1x1x256xf32>
    %715 = vector.shape_cast %714 : vector<1x1x256xf32> to vector<1x256xf32>
    %c42 = arith.constant 42 : index
    %716 = memref.load %arg3[%c42] : memref<98xf32, #tpu.memory_space<smem>>
    %717 = vector.broadcast %716 : f32 to vector<1x256xf32>
    %718 = arith.mulf %717, %713 : vector<1x256xf32>
    %c91 = arith.constant 91 : index
    %719 = memref.load %arg3[%c91] : memref<98xf32, #tpu.memory_space<smem>>
    %720 = vector.broadcast %719 : f32 to vector<1x256xf32>
    %721 = arith.mulf %720, %715 : vector<1x256xf32>
    %722 = arith.addf %718, %721 : vector<1x256xf32>
    %723 = arith.andi %711, %15 : vector<1x256xi1>
    %cst_279 = arith.constant 0.000000e+00 : f32
    %724 = vector.broadcast %cst_279 : f32 to vector<1x256xf32>
    %725 = arith.select %723, %722, %724 : vector<1x256xi1>, vector<1x256xf32>
    %726 = arith.addf %706, %725 : vector<1x256xf32>
    %c0_280 = arith.constant 0 : index
    %c0_281 = arith.constant 0 : index
    %c174 = arith.constant 174 : index
    %727 = vector.load %arg5[%c0_280, %c0_281, %c174] : memref<2x1x435xf32, #tpu.memory_space<vmem>>, vector<1x1x256xf32>
    %728 = vector.shape_cast %727 : vector<1x1x256xf32> to vector<1x256xf32>
    %c1_282 = arith.constant 1 : index
    %c0_283 = arith.constant 0 : index
    %c174_284 = arith.constant 174 : index
    %729 = vector.load %arg5[%c1_282, %c0_283, %c174_284] : memref<2x1x435xf32, #tpu.memory_space<vmem>>, vector<1x1x256xf32>
    %730 = vector.shape_cast %729 : vector<1x1x256xf32> to vector<1x256xf32>
    %c43 = arith.constant 43 : index
    %731 = memref.load %arg3[%c43] : memref<98xf32, #tpu.memory_space<smem>>
    %732 = vector.broadcast %731 : f32 to vector<1x256xf32>
    %733 = arith.mulf %732, %728 : vector<1x256xf32>
    %c92 = arith.constant 92 : index
    %734 = memref.load %arg3[%c92] : memref<98xf32, #tpu.memory_space<smem>>
    %735 = vector.broadcast %734 : f32 to vector<1x256xf32>
    %736 = arith.mulf %735, %730 : vector<1x256xf32>
    %737 = arith.addf %733, %736 : vector<1x256xf32>
    %738 = arith.andi %711, %20 : vector<1x256xi1>
    %cst_285 = arith.constant 0.000000e+00 : f32
    %739 = vector.broadcast %cst_285 : f32 to vector<1x256xf32>
    %740 = arith.select %738, %737, %739 : vector<1x256xi1>, vector<1x256xf32>
    %741 = arith.addf %726, %740 : vector<1x256xf32>
    %c0_286 = arith.constant 0 : index
    %c0_287 = arith.constant 0 : index
    %c175 = arith.constant 175 : index
    %742 = vector.load %arg5[%c0_286, %c0_287, %c175] : memref<2x1x435xf32, #tpu.memory_space<vmem>>, vector<1x1x256xf32>
    %743 = vector.shape_cast %742 : vector<1x1x256xf32> to vector<1x256xf32>
    %c1_288 = arith.constant 1 : index
    %c0_289 = arith.constant 0 : index
    %c175_290 = arith.constant 175 : index
    %744 = vector.load %arg5[%c1_288, %c0_289, %c175_290] : memref<2x1x435xf32, #tpu.memory_space<vmem>>, vector<1x1x256xf32>
    %745 = vector.shape_cast %744 : vector<1x1x256xf32> to vector<1x256xf32>
    %c44 = arith.constant 44 : index
    %746 = memref.load %arg3[%c44] : memref<98xf32, #tpu.memory_space<smem>>
    %747 = vector.broadcast %746 : f32 to vector<1x256xf32>
    %748 = arith.mulf %747, %743 : vector<1x256xf32>
    %c93_291 = arith.constant 93 : index
    %749 = memref.load %arg3[%c93_291] : memref<98xf32, #tpu.memory_space<smem>>
    %750 = vector.broadcast %749 : f32 to vector<1x256xf32>
    %751 = arith.mulf %750, %745 : vector<1x256xf32>
    %752 = arith.addf %748, %751 : vector<1x256xf32>
    %753 = arith.andi %711, %25 : vector<1x256xi1>
    %cst_292 = arith.constant 0.000000e+00 : f32
    %754 = vector.broadcast %cst_292 : f32 to vector<1x256xf32>
    %755 = arith.select %753, %752, %754 : vector<1x256xi1>, vector<1x256xf32>
    %756 = arith.addf %741, %755 : vector<1x256xf32>
    %c0_293 = arith.constant 0 : index
    %c0_294 = arith.constant 0 : index
    %c176 = arith.constant 176 : index
    %757 = vector.load %arg5[%c0_293, %c0_294, %c176] : memref<2x1x435xf32, #tpu.memory_space<vmem>>, vector<1x1x256xf32>
    %758 = vector.shape_cast %757 : vector<1x1x256xf32> to vector<1x256xf32>
    %c1_295 = arith.constant 1 : index
    %c0_296 = arith.constant 0 : index
    %c176_297 = arith.constant 176 : index
    %759 = vector.load %arg5[%c1_295, %c0_296, %c176_297] : memref<2x1x435xf32, #tpu.memory_space<vmem>>, vector<1x1x256xf32>
    %760 = vector.shape_cast %759 : vector<1x1x256xf32> to vector<1x256xf32>
    %c45 = arith.constant 45 : index
    %761 = memref.load %arg3[%c45] : memref<98xf32, #tpu.memory_space<smem>>
    %762 = vector.broadcast %761 : f32 to vector<1x256xf32>
    %763 = arith.mulf %762, %758 : vector<1x256xf32>
    %c94_298 = arith.constant 94 : index
    %764 = memref.load %arg3[%c94_298] : memref<98xf32, #tpu.memory_space<smem>>
    %765 = vector.broadcast %764 : f32 to vector<1x256xf32>
    %766 = arith.mulf %765, %760 : vector<1x256xf32>
    %767 = arith.addf %763, %766 : vector<1x256xf32>
    %768 = arith.andi %711, %30 : vector<1x256xi1>
    %cst_299 = arith.constant 0.000000e+00 : f32
    %769 = vector.broadcast %cst_299 : f32 to vector<1x256xf32>
    %770 = arith.select %768, %767, %769 : vector<1x256xi1>, vector<1x256xf32>
    %771 = arith.addf %756, %770 : vector<1x256xf32>
    %c0_300 = arith.constant 0 : index
    %c0_301 = arith.constant 0 : index
    %c177 = arith.constant 177 : index
    %772 = vector.load %arg5[%c0_300, %c0_301, %c177] : memref<2x1x435xf32, #tpu.memory_space<vmem>>, vector<1x1x256xf32>
    %773 = vector.shape_cast %772 : vector<1x1x256xf32> to vector<1x256xf32>
    %c1_302 = arith.constant 1 : index
    %c0_303 = arith.constant 0 : index
    %c177_304 = arith.constant 177 : index
    %774 = vector.load %arg5[%c1_302, %c0_303, %c177_304] : memref<2x1x435xf32, #tpu.memory_space<vmem>>, vector<1x1x256xf32>
    %775 = vector.shape_cast %774 : vector<1x1x256xf32> to vector<1x256xf32>
    %c46 = arith.constant 46 : index
    %776 = memref.load %arg3[%c46] : memref<98xf32, #tpu.memory_space<smem>>
    %777 = vector.broadcast %776 : f32 to vector<1x256xf32>
    %778 = arith.mulf %777, %773 : vector<1x256xf32>
    %c95_305 = arith.constant 95 : index
    %779 = memref.load %arg3[%c95_305] : memref<98xf32, #tpu.memory_space<smem>>
    %780 = vector.broadcast %779 : f32 to vector<1x256xf32>
    %781 = arith.mulf %780, %775 : vector<1x256xf32>
    %782 = arith.addf %778, %781 : vector<1x256xf32>
    %783 = arith.andi %711, %35 : vector<1x256xi1>
    %cst_306 = arith.constant 0.000000e+00 : f32
    %784 = vector.broadcast %cst_306 : f32 to vector<1x256xf32>
    %785 = arith.select %783, %782, %784 : vector<1x256xi1>, vector<1x256xf32>
    %786 = arith.addf %771, %785 : vector<1x256xf32>
    %c0_307 = arith.constant 0 : index
    %c0_308 = arith.constant 0 : index
    %c178 = arith.constant 178 : index
    %787 = vector.load %arg5[%c0_307, %c0_308, %c178] : memref<2x1x435xf32, #tpu.memory_space<vmem>>, vector<1x1x256xf32>
    %788 = vector.shape_cast %787 : vector<1x1x256xf32> to vector<1x256xf32>
    %c1_309 = arith.constant 1 : index
    %c0_310 = arith.constant 0 : index
    %c178_311 = arith.constant 178 : index
    %789 = vector.load %arg5[%c1_309, %c0_310, %c178_311] : memref<2x1x435xf32, #tpu.memory_space<vmem>>, vector<1x1x256xf32>
    %790 = vector.shape_cast %789 : vector<1x1x256xf32> to vector<1x256xf32>
    %c47 = arith.constant 47 : index
    %791 = memref.load %arg3[%c47] : memref<98xf32, #tpu.memory_space<smem>>
    %792 = vector.broadcast %791 : f32 to vector<1x256xf32>
    %793 = arith.mulf %792, %788 : vector<1x256xf32>
    %c96_312 = arith.constant 96 : index
    %794 = memref.load %arg3[%c96_312] : memref<98xf32, #tpu.memory_space<smem>>
    %795 = vector.broadcast %794 : f32 to vector<1x256xf32>
    %796 = arith.mulf %795, %790 : vector<1x256xf32>
    %797 = arith.addf %793, %796 : vector<1x256xf32>
    %798 = arith.andi %711, %40 : vector<1x256xi1>
    %cst_313 = arith.constant 0.000000e+00 : f32
    %799 = vector.broadcast %cst_313 : f32 to vector<1x256xf32>
    %800 = arith.select %798, %797, %799 : vector<1x256xi1>, vector<1x256xf32>
    %801 = arith.addf %786, %800 : vector<1x256xf32>
    %c0_314 = arith.constant 0 : index
    %c0_315 = arith.constant 0 : index
    %c179 = arith.constant 179 : index
    %802 = vector.load %arg5[%c0_314, %c0_315, %c179] : memref<2x1x435xf32, #tpu.memory_space<vmem>>, vector<1x1x256xf32>
    %803 = vector.shape_cast %802 : vector<1x1x256xf32> to vector<1x256xf32>
    %c1_316 = arith.constant 1 : index
    %c0_317 = arith.constant 0 : index
    %c179_318 = arith.constant 179 : index
    %804 = vector.load %arg5[%c1_316, %c0_317, %c179_318] : memref<2x1x435xf32, #tpu.memory_space<vmem>>, vector<1x1x256xf32>
    %805 = vector.shape_cast %804 : vector<1x1x256xf32> to vector<1x256xf32>
    %c48 = arith.constant 48 : index
    %806 = memref.load %arg3[%c48] : memref<98xf32, #tpu.memory_space<smem>>
    %807 = vector.broadcast %806 : f32 to vector<1x256xf32>
    %808 = arith.mulf %807, %803 : vector<1x256xf32>
    %c97_319 = arith.constant 97 : index
    %809 = memref.load %arg3[%c97_319] : memref<98xf32, #tpu.memory_space<smem>>
    %810 = vector.broadcast %809 : f32 to vector<1x256xf32>
    %811 = arith.mulf %810, %805 : vector<1x256xf32>
    %812 = arith.addf %808, %811 : vector<1x256xf32>
    %813 = arith.andi %711, %45 : vector<1x256xi1>
    %cst_320 = arith.constant 0.000000e+00 : f32
    %814 = vector.broadcast %cst_320 : f32 to vector<1x256xf32>
    %815 = arith.select %813, %812, %814 : vector<1x256xi1>, vector<1x256xf32>
    %816 = arith.addf %801, %815 : vector<1x256xf32>
    %817 = arith.negf %816 : vector<1x256xf32>
    %818 = math.exp %817 : vector<1x256xf32>
    %cst_321 = arith.constant 1.000000e+00 : f32
    %819 = vector.broadcast %cst_321 : f32 to vector<1x256xf32>
    %820 = arith.addf %819, %818 : vector<1x256xf32>
    %821 = arith.divf %819, %820 : vector<1x256xf32>
    %c0_322 = arith.constant 0 : index
    %c0_323 = arith.constant 0 : index
    %c0_324 = arith.constant 0 : index
    %822 = vector.load %arg4[%c0_322, %c0_323, %c0_324] : memref<1x1x256xf32, #tpu.memory_space<vmem>>, vector<1x1x256xf32>
    %823 = vector.shape_cast %822 : vector<1x1x256xf32> to vector<1x256xf32>
    %824 = vector.shape_cast %821 : vector<1x256xf32> to vector<1x1x256xf32>
    tpu.vector_store %arg4[%c0_322, %c0_323, %c0_324], %824 {strides = array<i32>} : memref<1x1x256xf32, #tpu.memory_space<vmem>>, vector<1x1x256xf32>,
    return
  }
  func.func @transform_0(%arg0: i32) -> (i32, i32, i32) {
    %c0_i32 = arith.constant 0 : i32
    %c0_i32_0 = arith.constant 0 : i32
    %c0_i32_1 = arith.constant 0 : i32
    return %arg0, %c0_i32, %c0_i32_0 : i32, i32, i32
  }
  func.func @transform_1(%arg0: i32) -> (i32, i32) {
    %c0_i32 = arith.constant 0 : i32
    %c0_i32_0 = arith.constant 0 : i32
    %c0_i32_1 = arith.constant 0 : i32
    return %c0_i32, %c0_i32_0 : i32, i32
  }
  func.func @transform_2(%arg0: i32) -> i32 {
    %c0_i32 = arith.constant 0 : i32
    %c0_i32_0 = arith.constant 0 : i32
    return %c0_i32 : i32
  }
  func.func @transform_3(%arg0: i32) -> (i32, i32, i32) {
    %c0_i32 = arith.constant 0 : i32
    %c0_i32_0 = arith.constant 0 : i32
    %c0_i32_1 = arith.constant 0 : i32
    return %arg0, %c0_i32, %c0_i32_0 : i32, i32, i32
  }
}

</mosaic_0001>

<llo_original>
// kernel: tpu_custom_call.1
$region0: #{tpu_custom_call.1}
  #allocation0 [shape = 'u32[]', space=smem, size = 0x4, offset = 0x4, fixed_abs, tag = 'smem constant byte address 0x4 - core index']
  #allocation1 [shape = 'u32[144,128]{1,0:T(1,128)}', space=vmem, size = 0x12000, scoped, tag = 'internal scratch']
  #allocation2 [shape = 'f32[2,1,435]{2,1,0:T(1,128)}', space=vmem, size = 0x1000, scoped, tag = 'scratch operand']
  %s0 = inlined_call_operand.hbm [shape: f32[2,4,256], index: 0, kind: input, shape index: {}]
  %s1 = inlined_call_operand.vmem [shape: s32[1,256], index: 1, kind: input, shape index: {}]
  %s2 = inlined_call_operand.vmem [shape: f32[98], index: 2, kind: input, shape index: {}]
  %s3 = inlined_call_operand.hbm [shape: f32[2,1,256], index: 3, kind: output, shape index: {}]
  %s4 = sld [smem:[#allocation0]]
  $region53: #{tpu_custom_call.1} parent=0
    _
  %s6 = ssub.s32 1, %s4
  %s7 = scalar_select 0, %s6, %s4
  $region1: #{tpu_custom_call.1} parent=0
    #allocation3 [shape = 'u8[8192]{0}', space=vmem, size = 0x2000, scoped, tag = 'input window, operand 0']
    #allocation4 [shape = 's32[2]{0}', space=sflag, size = 0x8, scoped, tag = 'scoped memory for tpu_custom_call.1']
    #allocation5 [shape = 's32[2]{0}', space=sflag, size = 0x8, scoped, tag = 'scoped memory for tpu_custom_call.1']
    #allocation6 [shape = 's32[2]{0}', space=sflag, size = 0x8, scoped, tag = 'scoped memory for tpu_custom_call.1']
    #allocation7 [shape = 'u8[512]{0}', space=smem, size = 0x200, scoped, tag = 'input window, operand 2, single buffered']
    #allocation8 [shape = 'u8[2048]{0}', space=vmem, size = 0x800, scoped, tag = 'output window, operand 0']
    %8 = vsyncpa [#allocation4], 0
    %s9 = scalar_lea.sflag [#allocation4], 1
    %10 = vsyncpa %s9, 0
    %11 = vsyncpa [#allocation6], 0
    %12 = vsyncpa [#allocation5], 0
    %s13 = scalar_lea.sflag [#allocation5], 1
    %14 = vsyncpa %s13, 0
    loop: start=0, step=1, limit=4
    $region2: #{tpu_custom_call.1} parent=1 // loop_pre_header
      _
    $region3: #{tpu_custom_call.1} parent=1 // loop_header
      %s16 = sphi 0, %s20
      %p17 = scmp.ge.s32.totalorder %s16, 4
      %s26 = sphi 0, %s28
      %s29 = sphi 0, %s26
      %s30 = sphi 0, %s29
      %s46 = sphi 0, %s30
      %s50 = sphi 0, %s50
      %s52 = sphi 0, %s50
      %s53 = sphi 0, %s52
      %s67 = sphi 0, %s53
      %s71 = sphi 0, %s71
      %s73 = sphi 0, %s71
      %s74 = sphi 0, %s73
      %s88 = sphi 0, %s74
      %s94 = sphi 0, %s96
      %s97 = sphi 0, %s94
      %s98 = sphi 0, %s97
      %s114 = sphi 0, %s98
    $region4: #{tpu_custom_call.1} parent=1 // loop_header_branch
      %19 = sbr.rel (%p17) target = $region8
    $region5: #{tpu_custom_call.1} parent=1 // loop_body
      %s21 = ssub.s32 %s16, 1
      %s22 = ssub.s32 %s16, 2
      %s23 = sadd.s32 %s16, 1
      %s24 = ssub.s32 %s16, %s23
      %p25 = scmp.eq.s32.totalorder %s24, 0
      %s27 = sadd.s32 %s26, 1
      %s28 = scalar_select %p25, %s26, %s27
      %p31 = pneg %p25
      %p32 = scmp.eq.s32.totalorder %s16, 1
      %p33 = por %p31, %p32
      %p34 = scmp.ne.s32.totalorder %s26, %s29
      %p35 = scmp.eq.s32.totalorder %s16, 0
      %p36 = por %p34, %p35
      %p37 = scmp.ne.s32.totalorder %s26, %s29
      %p38 = scmp.eq.s32.totalorder %s21, 1
      %p39 = por %p37, %p38
      %p40 = scmp.ne.s32.totalorder %s29, %s30
      %p41 = scmp.eq.s32.totalorder %s21, 0
      %p42 = por %p40, %p41
      %p43 = scmp.ne.s32.totalorder %s29, %s30
      %p44 = scmp.eq.s32.totalorder %s22, 1
      %p45 = por %p43, %p44
      %p47 = scmp.ne.s32.totalorder %s30, %s46
      %p48 = scmp.eq.s32.totalorder %s22, 0
      %p49 = por %p47, %p48
      %s51 = sadd.s32 %s50, 1
      %p54 = scmp.eq.s32.totalorder %s16, 1
      %p55 = scmp.ne.s32.totalorder %s50, %s52
      %p56 = scmp.eq.s32.totalorder %s16, 0
      %p57 = por %p55, %p56
      %p58 = scmp.ne.s32.totalorder %s50, %s52
      %p59 = scmp.eq.s32.totalorder %s21, 1
      %p60 = por %p58, %p59
      %p61 = scmp.ne.s32.totalorder %s52, %s53
      %p62 = scmp.eq.s32.totalorder %s21, 0
      %p63 = por %p61, %p62
      %p64 = scmp.ne.s32.totalorder %s52, %s53
      %p65 = scmp.eq.s32.totalorder %s22, 1
      %p66 = por %p64, %p65
      %p68 = scmp.ne.s32.totalorder %s53, %s67
      %p69 = scmp.eq.s32.totalorder %s22, 0
      %p70 = por %p68, %p69
      %s72 = sadd.s32 %s71, 1
      %p75 = scmp.eq.s32.totalorder %s16, 1
      %p76 = scmp.ne.s32.totalorder %s71, %s73
      %p77 = scmp.eq.s32.totalorder %s16, 0
      %p78 = por %p76, %p77
      %p79 = scmp.ne.s32.totalorder %s71, %s73
      %p80 = scmp.eq.s32.totalorder %s21, 1
      %p81 = por %p79, %p80
      %p82 = scmp.ne.s32.totalorder %s73, %s74
      %p83 = scmp.eq.s32.totalorder %s21, 0
      %p84 = por %p82, %p83
      %p85 = scmp.ne.s32.totalorder %s73, %s74
      %p86 = scmp.eq.s32.totalorder %s22, 1
      %p87 = por %p85, %p86
      %p89 = scmp.ne.s32.totalorder %s74, %s88
      %p90 = scmp.eq.s32.totalorder %s22, 0
      %p91 = por %p89, %p90
      %s92 = ssub.s32 %s16, %s23
      %p93 = scmp.eq.s32.totalorder %s92, 0
      %s95 = sadd.s32 %s94, 1
      %s96 = scalar_select %p93, %s94, %s95
      %p99 = pneg %p93
      %p100 = scmp.eq.s32.totalorder %s16, 1
      %p101 = por %p99, %p100
      %p102 = scmp.ne.s32.totalorder %s94, %s97
      %p103 = scmp.eq.s32.totalorder %s16, 0
      %p104 = por %p102, %p103
      %p105 = scmp.ne.s32.totalorder %s94, %s97
      %p106 = scmp.eq.s32.totalorder %s21, 1
      %p107 = por %p105, %p106
      %p108 = scmp.ne.s32.totalorder %s97, %s98
      %p109 = scmp.eq.s32.totalorder %s21, 0
      %p110 = por %p108, %p109
      %p111 = scmp.ne.s32.totalorder %s97, %s98
      %p112 = scmp.eq.s32.totalorder %s22, 1
      %p113 = por %p111, %p112
      %p115 = scmp.ne.s32.totalorder %s98, %s114
      %p116 = scmp.eq.s32.totalorder %s22, 0
      %p117 = por %p115, %p116
      %p118 = scmp.le.s32.totalorder 1, %s16
      %p119 = scmp.lt.s32.totalorder %s16, 3
      %p120 = pnand %p118, %p119
      %p121 = pneg %p120
      // Predicated region
      $region9: #{tpu_custom_call.1} parent=5 // pred_check
        _
      $region10: #{tpu_custom_call.1} parent=5 // pred_check_branch
        %123 = sbr.rel (%p120) target = $region12
      $region11: #{tpu_custom_call.1} parent=5 // pred_region
        %s124 = ssub.s32 %s16, 1
        // Predicated region
        $region13: #{tpu_custom_call.1} parent=11 // pred_check
          %p125 = pneg %p63
        $region14: #{tpu_custom_call.1} parent=11 // pred_check_branch
          %127 = sbr.rel (%p125) target = $region16
        $region15: #{tpu_custom_call.1} parent=11 // pred_region
          _
        $region16: #{tpu_custom_call.1} parent=11 // pred_fallthru
          _
        // Predicated region
        $region17: #{tpu_custom_call.1} parent=11 // pred_check
          %p128 = pneg %p84
        $region18: #{tpu_custom_call.1} parent=11 // pred_check_branch
          %130 = sbr.rel (%p128) target = $region20
        $region19: #{tpu_custom_call.1} parent=11 // pred_region
          %s132 = ssub.s32 16, 16
          %133 = vsyncadd [#allocation6], %s132
          %s135 = sshll.u32 %s2, 4
          %s136 = int_to_ptr.vmem [resolvable:$true] %s135
          %138 = dma.vmem_to_smem %s136, 16, [#allocation7], [#allocation6]
        $region20: #{tpu_custom_call.1} parent=11 // pred_fallthru
          _
      $region12: #{tpu_custom_call.1} parent=5 // pred_fallthru
        _
      %p139 = scmp.lt.s32.totalorder %s16, 2
      // Predicated region
      $region21: #{tpu_custom_call.1} parent=5 // pred_check
        %p140 = pneg %p139
      $region22: #{tpu_custom_call.1} parent=5 // pred_check_branch
        %142 = sbr.rel (%p140) target = $region24
      $region23: #{tpu_custom_call.1} parent=5 // pred_region
        // Predicated region
        $region25: #{tpu_custom_call.1} parent=23 // pred_check
          %p143 = pneg %p36
        $region26: #{tpu_custom_call.1} parent=23 // pred_check_branch
          %145 = sbr.rel (%p143) target = $region28
        $region27: #{tpu_custom_call.1} parent=23 // pred_region
          %s146 = sand.u32 %s26, 1
          %s147 = scalar_lea.sflag [#allocation4], %s146
          %s148 = sand.u32 %s26, 1
          %s149 = smul.addr %s148, 8
          %s150 = scalar_lea.vmem [#allocation3], %s149
          %s152 = ssub.s32 128, 128
          %153 = vsyncadd %s147, %s152
          %s154 = smul.addr %s16, 2
          %s155 = smul.addr %s154, 64
          %s156 = scalar_lea.hbm %s0, %s155
          %s158 = sshll.u32 %s150, 4
          %s159 = int_to_ptr.vmem [resolvable:$true] %s158
          %161 = dma.hbm_to_vmem [thread:$0]  %s156, 128, %s159, %s147
        $region28: #{tpu_custom_call.1} parent=23 // pred_fallthru
          _
      $region24: #{tpu_custom_call.1} parent=5 // pred_fallthru
        _
      %p162 = scmp.le.s32.totalorder 1, %s16
      %p163 = scmp.lt.s32.totalorder %s16, 3
      %p164 = pnand %p162, %p163
      %p165 = pneg %p164
      // Predicated region
      $region29: #{tpu_custom_call.1} parent=5 // pred_check
        _
      $region30: #{tpu_custom_call.1} parent=5 // pred_check_branch
        %167 = sbr.rel (%p164) target = $region32
      $region31: #{tpu_custom_call.1} parent=5 // pred_region
        %s168 = ssub.s32 %s16, 1
        %s169 = sand.u32 %s29, 1
        %s170 = scalar_lea.sflag [#allocation4], %s169
        %s171 = sand.u32 %s29, 1
        %s172 = smul.addr %s171, 8
        %s173 = scalar_lea.vmem [#allocation3], %s172
        // Predicated region
        $region33: #{tpu_custom_call.1} parent=31 // pred_check
          %p174 = pneg %p42
        $region34: #{tpu_custom_call.1} parent=31 // pred_check_branch
          %176 = sbr.rel (%p174) target = $region36
        $region35: #{tpu_custom_call.1} parent=31 // pred_region
          %177 = dma.done %s170, 128
        $region36: #{tpu_custom_call.1} parent=31 // pred_fallthru
          _
        // Predicated region
        $region37: #{tpu_custom_call.1} parent=31 // pred_check
          %p178 = pneg %p84
        $region38: #{tpu_custom_call.1} parent=31 // pred_check_branch
          %180 = sbr.rel (%p178) target = $region40
        $region39: #{tpu_custom_call.1} parent=31 // pred_region
          %181 = dma.done [#allocation6], 16
        $region40: #{tpu_custom_call.1} parent=31 // pred_fallthru
          _
        %182 = sfence
        %s183 = sand.u32 %s29, 1
        %s184 = scalar_lea.sflag [#allocation4], %s183
        %s185 = sand.u32 %s29, 1
        %s186 = smul.addr %s185, 8
        %s187 = scalar_lea.vmem [#allocation3], %s186
        %p188 = pneg %p42
        %p189 = pneg %p39
        %p190 = pneg %p63
        %p191 = pneg %p60
        %p192 = pneg %p84
        %p193 = pneg %p81
        %p194 = pneg %p110
        %p195 = pneg %p107
        %s196 = sand.u32 %s97, 1
        %s197 = scalar_lea.sflag [#allocation5], %s196
        %s198 = sand.u32 %s97, 1
        %s199 = smul.addr %s198, 2
        %s200 = scalar_lea.vmem [#allocation8], %s199
        %v201 = vld [vmem:[%s173] sm:$0xff]
        %v203 = vcombine.high %v201, %v201
        %vm205 = vcmask 1043456
        %v206 = vsel %vm205, %v201, -inf
        %v207 = vrot.slane %v206, 4
        %v208 = vmax.f32 %v206, %v207
        %v209 = vrot.slane %v208, 2
        %v210 = vmax.f32 %v208, %v209
        %v211 = vrot.slane %v210, 1
        %v212 = vmax.f32 %v210, %v211
        %v213 = vsel %vm205, %v203, -inf
        %v214 = vrot.slane %v213, 4
        %v215 = vmax.f32 %v213, %v214
        %v216 = vrot.slane %v215, 2
        %v217 = vmax.f32 %v215, %v216
        %v218 = vrot.slane %v217, 1
        %v219 = vmax.f32 %v217, %v218
        %v222 = vcombine.low %v212, %v219
        %v224 = vunpack.c.l.s4 1966171168
        %v225 = vunpack.c.0.s8 %v224
        %v226 = vlaneseq
        %v227 = vshrl.u32 %v226, 7
        %v228 = vsub.s32 %v225, %v227
        %v229 = vrot.slane %v222, %v228
        %v231 = vunpack.c.l.s4 1966171168
        %v232 = vunpack.c.0.s8 %v231
        %v233 = vlaneseq
        %v234 = vshrl.u32 %v233, 7
        %v235 = vsub.s32 %v232, %v234
        %v236 = vrot.slane %v229, %v235
        %v238 = vlaneseq
        %vm239 = vcmp.ge.s32.totalorder %v238, 0
        %vm240 = vcmp.lt.s32.totalorder %v238, 256
        %vm241 = vmand %vm239, %vm240
        %242 = vst.msk [vmem:[#allocation2 + $0x1] sm:$0x3] %vm241, %v236
        %v243 = vsel %vm205, %v201, 0.0
        %v244 = vrot.slane %v243, 4
        %v245 = vadd.f32 %v243, %v244
        %v246 = vrot.slane %v245, 2
        %v247 = vadd.f32 %v245, %v246
        %v248 = vrot.slane %v247, 1
        %v249 = vadd.f32 %v247, %v248
        %v250 = vsel %vm205, %v203, 0.0
        %v251 = vrot.slane %v250, 4
        %v252 = vadd.f32 %v250, %v251
        %v253 = vrot.slane %v252, 2
        %v254 = vadd.f32 %v252, %v253
        %v255 = vrot.slane %v254, 1
        %v256 = vadd.f32 %v254, %v255
        %v259 = vcombine.low %v249, %v256
        %v261 = vunpack.c.l.s4 1966171168
        %v262 = vunpack.c.0.s8 %v261
        %v263 = vlaneseq
        %v264 = vshrl.u32 %v263, 7
        %v265 = vsub.s32 %v262, %v264
        %v266 = vrot.slane %v259, %v265
        %v268 = vunpack.c.l.s4 1966171168
        %v269 = vunpack.c.0.s8 %v268
        %v270 = vlaneseq
        %v271 = vshrl.u32 %v270, 7
        %v272 = vsub.s32 %v269, %v271
        %v273 = vrot.slane %v266, %v272
        %s275 = scalar_lea.vmem [#allocation2], 4
        %276 = vst.msk [vmem:[%s275 + $0x1] sm:$0x3] %vm241, %v273
        %v277 = vlaneseq
        %v278 = vand.u32 %v277, 127
        %v279 = vadd.s32 %v278, 128
        %v280 = vld [vmem:[%s1] sm:$0x3]
        %vm281 = vcmp.ge.s32.totalorder %v280, 3
        %vm282 = vcmp.lt.s32.totalorder %v280, 19
        %vm283 = vmand %vm281, %vm282
        %vm284 = vcmp.ge.s32.totalorder %v280, 2
        %vm285 = vcmp.lt.s32.totalorder %v280, 18
        %vm286 = vmand %vm284, %vm285
        %vm287 = vcmp.ge.s32.totalorder %v280, 1
        %vm288 = vcmp.lt.s32.totalorder %v280, 17
        %vm289 = vmand %vm287, %vm288
        %vm290 = vcmp.ge.s32.totalorder %v280, 0
        %vm291 = vcmp.lt.s32.totalorder %v280, 16
        %vm292 = vmand %vm290, %vm291
        %vm293 = vcmp.ge.s32.totalorder %v280, 4294967295
        %vm294 = vcmp.lt.s32.totalorder %v280, 15
        %vm295 = vmand %vm293, %vm294
        %vm296 = vcmp.ge.s32.totalorder %v280, 4294967294
        %vm297 = vcmp.lt.s32.totalorder %v280, 14
        %vm298 = vmand %vm296, %vm297
        %vm299 = vcmp.ge.s32.totalorder %v280, 4294967293
        %vm300 = vcmp.lt.s32.totalorder %v280, 13
        %vm301 = vmand %vm299, %vm300
        %vm302 = vcmp.ge.s32.totalorder %v278, 48
        %vm303 = vcmp.ge.s32.totalorder %v279, 48
        %vm304 = vcmp.lt.s32.totalorder %v278, 304
        %vm305 = vcmp.lt.s32.totalorder %v279, 304
        %vm306 = vmand %vm302, %vm304
        %vm307 = vmand %vm303, %vm305
        %v308 = vld [vmem:[#allocation2] sm:$0x7]
        %v309 = vld [vmem:[%s275] sm:$0x7]
        %s310 = sld [smem:[#allocation7]]
        %v311 = vstv %s310
        %v312 = vmul.f32 %v311, %v308
        %s313 = sld [smem:[#allocation7 + $0x31]]
        %v314 = vstv %s313
        %v315 = vmul.f32 %v314, %v309
        %v316 = vadd.f32 %v312, %v315
        %v317 = vsel %vm283, 1, 0
        %v318 = vlaneseq
        %v319 = vshrl.u32 %v318, 7
        %v320 = vsub.s32 0, %v319
        %v321 = vrot.slane %v317, %v320
        %v322 = vlaneseq
        %v323 = vshrl.u32 %v322, 7
        %v324 = vsub.s32 1, %v323
        %v325 = vrot.slane %v317, %v324
        %vm326 = vcmp.ne.s32.totalorder %v321, 0
        %vm327 = vcmp.ne.s32.totalorder %v325, 0
        %vm328 = vmand %vm306, %vm326
        %vm329 = vmand %vm307, %vm327
        %v331 = vlaneseq
        %v332 = vshrl.u32 %v331, 7
        %v333 = vsub.s32 0, %v332
        %v334 = vrot.slane %v316, %v333
        %v335 = vlaneseq
        %v336 = vshrl.u32 %v335, 7
        %v337 = vsub.s32 1, %v336
        %v338 = vrot.slane %v316, %v337
        %v339 = vlaneseq
        %v340 = vshrl.u32 %v339, 7
        %v341 = vsub.s32 2, %v340
        %v342 = vrot.slane %v316, %v341
        %343 = vrot.lane.b32.xlu0 %v334, 51
        %v344 = vpop.permute.xlu0 %343
        %345 = vrot.lane.b32.xlu0 %v338, 51
        %v346 = vpop.permute.xlu0 %345
        %347 = vrot.lane.b32.xlu0 %v342, 51
        %v348 = vpop.permute.xlu0 %347
        %vm349 = vcmask 416768
        %v350 = vsel %vm349, %v344, %v346
        %v351 = vsel %vm349, %v346, %v348
        %v354 = vsel %vm328, %v350, 0.0
        %v355 = vsel %vm329, %v351, 0.0
        %v356 = vadd.f32 %v354, 0.0
        %v357 = vadd.f32 %v355, 0.0
        %s358 = sld [smem:[#allocation7 + $0x1]]
        %v359 = vstv %s358
        %v360 = vmul.f32 %v359, %v308
        %s361 = sld [smem:[#allocation7 + $0x32]]
        %v362 = vstv %s361
        %v363 = vmul.f32 %v362, %v309
        %v364 = vadd.f32 %v360, %v363
        %v365 = vsel %vm286, 1, 0
        %v366 = vlaneseq
        %v367 = vshrl.u32 %v366, 7
        %v368 = vsub.s32 0, %v367
        %v369 = vrot.slane %v365, %v368
        %v370 = vlaneseq
        %v371 = vshrl.u32 %v370, 7
        %v372 = vsub.s32 1, %v371
        %v373 = vrot.slane %v365, %v372
        %vm374 = vcmp.ne.s32.totalorder %v369, 0
        %vm375 = vcmp.ne.s32.totalorder %v373, 0
        %vm376 = vmand %vm306, %vm374
        %vm377 = vmand %vm307, %vm375
        %v379 = vlaneseq
        %v380 = vshrl.u32 %v379, 7
        %v381 = vsub.s32 0, %v380
        %v382 = vrot.slane %v364, %v381
        %v383 = vlaneseq
        %v384 = vshrl.u32 %v383, 7
        %v385 = vsub.s32 1, %v384
        %v386 = vrot.slane %v364, %v385
        %v387 = vlaneseq
        %v388 = vshrl.u32 %v387, 7
        %v389 = vsub.s32 2, %v388
        %v390 = vrot.slane %v364, %v389
        %391 = vrot.lane.b32.xlu0 %v382, 50
        %v392 = vpop.permute.xlu0 %391
        %393 = vrot.lane.b32.xlu0 %v386, 50
        %v394 = vpop.permute.xlu0 %393
        %395 = vrot.lane.b32.xlu0 %v390, 50
        %v396 = vpop.permute.xlu0 %395
        %vm397 = vcmask 408576
        %v398 = vsel %vm397, %v392, %v394
        %v399 = vsel %vm397, %v394, %v396
        %v402 = vsel %vm376, %v398, 0.0
        %v403 = vsel %vm377, %v399, 0.0
        %v404 = vadd.f32 %v356, %v402
        %v405 = vadd.f32 %v357, %v403
        %s406 = sld [smem:[#allocation7 + $0x2]]
        %v407 = vstv %s406
        %v408 = vmul.f32 %v407, %v308
        %s409 = sld [smem:[#allocation7 + $0x33]]
        %v410 = vstv %s409
        %v411 = vmul.f32 %v410, %v309
        %v412 = vadd.f32 %v408, %v411
        %v413 = vsel %vm289, 1, 0
        %v414 = vlaneseq
        %v415 = vshrl.u32 %v414, 7
        %v416 = vsub.s32 0, %v415
        %v417 = vrot.slane %v413, %v416
        %v418 = vlaneseq
        %v419 = vshrl.u32 %v418, 7
        %v420 = vsub.s32 1, %v419
        %v421 = vrot.slane %v413, %v420
        %vm422 = vcmp.ne.s32.totalorder %v417, 0
        %vm423 = vcmp.ne.s32.totalorder %v421, 0
        %vm424 = vmand %vm306, %vm422
        %vm425 = vmand %vm307, %vm423
        %v427 = vlaneseq
        %v428 = vshrl.u32 %v427, 7
        %v429 = vsub.s32 0, %v428
        %v430 = vrot.slane %v412, %v429
        %v431 = vlaneseq
        %v432 = vshrl.u32 %v431, 7
        %v433 = vsub.s32 1, %v432
        %v434 = vrot.slane %v412, %v433
        %v435 = vlaneseq
        %v436 = vshrl.u32 %v435, 7
        %v437 = vsub.s32 2, %v436
        %v438 = vrot.slane %v412, %v437
        %439 = vrot.lane.b32.xlu0 %v430, 49
        %v440 = vpop.permute.xlu0 %439
        %441 = vrot.lane.b32.xlu0 %v434, 49
        %v442 = vpop.permute.xlu0 %441
        %443 = vrot.lane.b32.xlu0 %v438, 49
        %v444 = vpop.permute.xlu0 %443
        %vm445 = vcmask 400384
        %v446 = vsel %vm445, %v440, %v442
        %v447 = vsel %vm445, %v442, %v444
        %v450 = vsel %vm424, %v446, 0.0
        %v451 = vsel %vm425, %v447, 0.0
        %v452 = vadd.f32 %v404, %v450
        %v453 = vadd.f32 %v405, %v451
        %s454 = sld [smem:[#allocation7 + $0x3]]
        %v455 = vstv %s454
        %v456 = vmul.f32 %v455, %v308
        %s457 = sld [smem:[#allocation7 + $0x34]]
        %v458 = vstv %s457
        %v459 = vmul.f32 %v458, %v309
        %v460 = vadd.f32 %v456, %v459
        %v461 = vsel %vm292, 1, 0
        %v462 = vlaneseq
        %v463 = vshrl.u32 %v462, 7
        %v464 = vsub.s32 0, %v463
        %v465 = vrot.slane %v461, %v464
        %v466 = vlaneseq
        %v467 = vshrl.u32 %v466, 7
        %v468 = vsub.s32 1, %v467
        %v469 = vrot.slane %v461, %v468
        %vm470 = vcmp.ne.s32.totalorder %v465, 0
        %vm471 = vcmp.ne.s32.totalorder %v469, 0
        %vm472 = vmand %vm306, %vm470
        %vm473 = vmand %vm307, %vm471
        %v475 = vlaneseq
        %v476 = vshrl.u32 %v475, 7
        %v477 = vsub.s32 0, %v476
        %v478 = vrot.slane %v460, %v477
        %v479 = vlaneseq
        %v480 = vshrl.u32 %v479, 7
        %v481 = vsub.s32 1, %v480
        %v482 = vrot.slane %v460, %v481
        %v483 = vlaneseq
        %v484 = vshrl.u32 %v483, 7
        %v485 = vsub.s32 2, %v484
        %v486 = vrot.slane %v460, %v485
        %487 = vrot.lane.b32.xlu0 %v478, 48
        %v488 = vpop.permute.xlu0 %487
        %489 = vrot.lane.b32.xlu0 %v482, 48
        %v490 = vpop.permute.xlu0 %489
        %491 = vrot.lane.b32.xlu0 %v486, 48
        %v492 = vpop.permute.xlu0 %491
        %vm493 = vcmask 392192
        %v494 = vsel %vm493, %v488, %v490
        %v495 = vsel %vm493, %v490, %v492
        %v498 = vsel %vm472, %v494, 0.0
        %v499 = vsel %vm473, %v495, 0.0
        %v500 = vadd.f32 %v452, %v498
        %v501 = vadd.f32 %v453, %v499
        %s502 = sld [smem:[#allocation7 + $0x4]]
        %v503 = vstv %s502
        %v504 = vmul.f32 %v503, %v308
        %s505 = sld [smem:[#allocation7 + $0x35]]
        %v506 = vstv %s505
        %v507 = vmul.f32 %v506, %v309
        %v508 = vadd.f32 %v504, %v507
        %v509 = vsel %vm295, 1, 0
        %v510 = vlaneseq
        %v511 = vshrl.u32 %v510, 7
        %v512 = vsub.s32 0, %v511
        %v513 = vrot.slane %v509, %v512
        %v514 = vlaneseq
        %v515 = vshrl.u32 %v514, 7
        %v516 = vsub.s32 1, %v515
        %v517 = vrot.slane %v509, %v516
        %vm518 = vcmp.ne.s32.totalorder %v513, 0
        %vm519 = vcmp.ne.s32.totalorder %v517, 0
        %vm520 = vmand %vm306, %vm518
        %vm521 = vmand %vm307, %vm519
        %v523 = vlaneseq
        %v524 = vshrl.u32 %v523, 7
        %v525 = vsub.s32 0, %v524
        %v526 = vrot.slane %v508, %v525
        %v527 = vlaneseq
        %v528 = vshrl.u32 %v527, 7
        %v529 = vsub.s32 1, %v528
        %v530 = vrot.slane %v508, %v529
        %v531 = vlaneseq
        %v532 = vshrl.u32 %v531, 7
        %v533 = vsub.s32 2, %v532
        %v534 = vrot.slane %v508, %v533
        %535 = vrot.lane.b32.xlu0 %v526, 47
        %v536 = vpop.permute.xlu0 %535
        %537 = vrot.lane.b32.xlu0 %v530, 47
        %v538 = vpop.permute.xlu0 %537
        %539 = vrot.lane.b32.xlu0 %v534, 47
        %v540 = vpop.permute.xlu0 %539
        %vm541 = vcmask 384000
        %v542 = vsel %vm541, %v536, %v538
        %v543 = vsel %vm541, %v538, %v540
        %v546 = vsel %vm520, %v542, 0.0
        %v547 = vsel %vm521, %v543, 0.0
        %v548 = vadd.f32 %v500, %v546
        %v549 = vadd.f32 %v501, %v547
        %s550 = sld [smem:[#allocation7 + $0x5]]
        %v551 = vstv %s550
        %v552 = vmul.f32 %v551, %v308
        %s553 = sld [smem:[#allocation7 + $0x36]]
        %v554 = vstv %s553
        %v555 = vmul.f32 %v554, %v309
        %v556 = vadd.f32 %v552, %v555
        %v557 = vsel %vm298, 1, 0
        %v558 = vlaneseq
        %v559 = vshrl.u32 %v558, 7
        %v560 = vsub.s32 0, %v559
        %v561 = vrot.slane %v557, %v560
        %v562 = vlaneseq
        %v563 = vshrl.u32 %v562, 7
        %v564 = vsub.s32 1, %v563
        %v565 = vrot.slane %v557, %v564
        %vm566 = vcmp.ne.s32.totalorder %v561, 0
        %vm567 = vcmp.ne.s32.totalorder %v565, 0
        %vm568 = vmand %vm306, %vm566
        %vm569 = vmand %vm307, %vm567
        %v571 = vlaneseq
        %v572 = vshrl.u32 %v571, 7
        %v573 = vsub.s32 0, %v572
        %v574 = vrot.slane %v556, %v573
        %v575 = vlaneseq
        %v576 = vshrl.u32 %v575, 7
        %v577 = vsub.s32 1, %v576
        %v578 = vrot.slane %v556, %v577
        %v579 = vlaneseq
        %v580 = vshrl.u32 %v579, 7
        %v581 = vsub.s32 2, %v580
        %v582 = vrot.slane %v556, %v581
        %583 = vrot.lane.b32.xlu0 %v574, 46
        %v584 = vpop.permute.xlu0 %583
        %585 = vrot.lane.b32.xlu0 %v578, 46
        %v586 = vpop.permute.xlu0 %585
        %587 = vrot.lane.b32.xlu0 %v582, 46
        %v588 = vpop.permute.xlu0 %587
        %vm589 = vcmask 375808
        %v590 = vsel %vm589, %v584, %v586
        %v591 = vsel %vm589, %v586, %v588
        %v594 = vsel %vm568, %v590, 0.0
        %v595 = vsel %vm569, %v591, 0.0
        %v596 = vadd.f32 %v548, %v594
        %v597 = vadd.f32 %v549, %v595
        %s598 = sld [smem:[#allocation7 + $0x6]]
        %v599 = vstv %s598
        %v600 = vmul.f32 %v599, %v308
        %s601 = sld [smem:[#allocation7 + $0x37]]
        %v602 = vstv %s601
        %v603 = vmul.f32 %v602, %v309
        %v604 = vadd.f32 %v600, %v603
        %v605 = vsel %vm301, 1, 0
        %v606 = vlaneseq
        %v607 = vshrl.u32 %v606, 7
        %v608 = vsub.s32 0, %v607
        %v609 = vrot.slane %v605, %v608
        %v610 = vlaneseq
        %v611 = vshrl.u32 %v610, 7
        %v612 = vsub.s32 1, %v611
        %v613 = vrot.slane %v605, %v612
        %vm614 = vcmp.ne.s32.totalorder %v609, 0
        %vm615 = vcmp.ne.s32.totalorder %v613, 0
        %vm616 = vmand %vm306, %vm614
        %vm617 = vmand %vm307, %vm615
        %v619 = vlaneseq
        %v620 = vshrl.u32 %v619, 7
        %v621 = vsub.s32 0, %v620
        %v622 = vrot.slane %v604, %v621
        %v623 = vlaneseq
        %v624 = vshrl.u32 %v623, 7
        %v625 = vsub.s32 1, %v624
        %v626 = vrot.slane %v604, %v625
        %v627 = vlaneseq
        %v628 = vshrl.u32 %v627, 7
        %v629 = vsub.s32 2, %v628
        %v630 = vrot.slane %v604, %v629
        %631 = vrot.lane.b32.xlu0 %v622, 45
        %v632 = vpop.permute.xlu0 %631
        %633 = vrot.lane.b32.xlu0 %v626, 45
        %v634 = vpop.permute.xlu0 %633
        %635 = vrot.lane.b32.xlu0 %v630, 45
        %v636 = vpop.permute.xlu0 %635
        %vm637 = vcmask 367616
        %v638 = vsel %vm637, %v632, %v634
        %v639 = vsel %vm637, %v634, %v636
        %v642 = vsel %vm616, %v638, 0.0
        %v643 = vsel %vm617, %v639, 0.0
        %v644 = vadd.f32 %v596, %v642
        %v645 = vadd.f32 %v597, %v643
        %vm646 = vcmp.ge.s32.totalorder %v278, 32
        %vm647 = vcmp.ge.s32.totalorder %v279, 32
        %vm648 = vcmp.lt.s32.totalorder %v278, 288
        %vm649 = vcmp.lt.s32.totalorder %v279, 288
        %vm650 = vmand %vm646, %vm648
        %vm651 = vmand %vm647, %vm649
        %s652 = sld [smem:[#allocation7 + $0x7]]
        %v653 = vstv %s652
        %v654 = vmul.f32 %v653, %v308
        %s655 = sld [smem:[#allocation7 + $0x38]]
        %v656 = vstv %s655
        %v657 = vmul.f32 %v656, %v309
        %v658 = vadd.f32 %v654, %v657
        %vm659 = vmand %vm650, %vm326
        %vm660 = vmand %vm651, %vm327
        %v662 = vlaneseq
        %v663 = vshrl.u32 %v662, 7
        %v664 = vsub.s32 0, %v663
        %v665 = vrot.slane %v658, %v664
        %v666 = vlaneseq
        %v667 = vshrl.u32 %v666, 7
        %v668 = vsub.s32 1, %v667
        %v669 = vrot.slane %v658, %v668
        %v670 = vlaneseq
        %v671 = vshrl.u32 %v670, 7
        %v672 = vsub.s32 2, %v671
        %v673 = vrot.slane %v658, %v672
        %674 = vrot.lane.b32.xlu0 %v665, 35
        %v675 = vpop.permute.xlu0 %674
        %676 = vrot.lane.b32.xlu0 %v669, 35
        %v677 = vpop.permute.xlu0 %676
        %678 = vrot.lane.b32.xlu0 %v673, 35
        %v679 = vpop.permute.xlu0 %678
        %vm680 = vcmask 285696
        %v681 = vsel %vm680, %v675, %v677
        %v682 = vsel %vm680, %v677, %v679
        %v685 = vsel %vm659, %v681, 0.0
        %v686 = vsel %vm660, %v682, 0.0
        %v687 = vadd.f32 %v644, %v685
        %v688 = vadd.f32 %v645, %v686
        %s689 = sld [smem:[#allocation7 + $0x8]]
        %v690 = vstv %s689
        %v691 = vmul.f32 %v690, %v308
        %s692 = sld [smem:[#allocation7 + $0x39]]
        %v693 = vstv %s692
        %v694 = vmul.f32 %v693, %v309
        %v695 = vadd.f32 %v691, %v694
        %vm696 = vmand %vm650, %vm374
        %vm697 = vmand %vm651, %vm375
        %v699 = vlaneseq
        %v700 = vshrl.u32 %v699, 7
        %v701 = vsub.s32 0, %v700
        %v702 = vrot.slane %v695, %v701
        %v703 = vlaneseq
        %v704 = vshrl.u32 %v703, 7
        %v705 = vsub.s32 1, %v704
        %v706 = vrot.slane %v695, %v705
        %v707 = vlaneseq
        %v708 = vshrl.u32 %v707, 7
        %v709 = vsub.s32 2, %v708
        %v710 = vrot.slane %v695, %v709
        %711 = vrot.lane.b32.xlu0 %v702, 34
        %v712 = vpop.permute.xlu0 %711
        %713 = vrot.lane.b32.xlu0 %v706, 34
        %v714 = vpop.permute.xlu0 %713
        %715 = vrot.lane.b32.xlu0 %v710, 34
        %v716 = vpop.permute.xlu0 %715
        %vm717 = vcmask 277504
        %v718 = vsel %vm717, %v712, %v714
        %v719 = vsel %vm717, %v714, %v716
        %v722 = vsel %vm696, %v718, 0.0
        %v723 = vsel %vm697, %v719, 0.0
        %v724 = vadd.f32 %v687, %v722
        %v725 = vadd.f32 %v688, %v723
        %s726 = sld [smem:[#allocation7 + $0x9]]
        %v727 = vstv %s726
        %v728 = vmul.f32 %v727, %v308
        %s729 = sld [smem:[#allocation7 + $0x3a]]
        %v730 = vstv %s729
        %v731 = vmul.f32 %v730, %v309
        %v732 = vadd.f32 %v728, %v731
        %vm733 = vmand %vm650, %vm422
        %vm734 = vmand %vm651, %vm423
        %v736 = vlaneseq
        %v737 = vshrl.u32 %v736, 7
        %v738 = vsub.s32 0, %v737
        %v739 = vrot.slane %v732, %v738
        %v740 = vlaneseq
        %v741 = vshrl.u32 %v740, 7
        %v742 = vsub.s32 1, %v741
        %v743 = vrot.slane %v732, %v742
        %v744 = vlaneseq
        %v745 = vshrl.u32 %v744, 7
        %v746 = vsub.s32 2, %v745
        %v747 = vrot.slane %v732, %v746
        %748 = vrot.lane.b32.xlu0 %v739, 33
        %v749 = vpop.permute.xlu0 %748
        %750 = vrot.lane.b32.xlu0 %v743, 33
        %v751 = vpop.permute.xlu0 %750
        %752 = vrot.lane.b32.xlu0 %v747, 33
        %v753 = vpop.permute.xlu0 %752
        %vm754 = vcmask 269312
        %v755 = vsel %vm754, %v749, %v751
        %v756 = vsel %vm754, %v751, %v753
        %v759 = vsel %vm733, %v755, 0.0
        %v760 = vsel %vm734, %v756, 0.0
        %v761 = vadd.f32 %v724, %v759
        %v762 = vadd.f32 %v725, %v760
        %s763 = sld [smem:[#allocation7 + $0xa]]
        %v764 = vstv %s763
        %v765 = vmul.f32 %v764, %v308
        %s766 = sld [smem:[#allocation7 + $0x3b]]
        %v767 = vstv %s766
        %v768 = vmul.f32 %v767, %v309
        %v769 = vadd.f32 %v765, %v768
        %vm770 = vmand %vm650, %vm470
        %vm771 = vmand %vm651, %vm471
        %v773 = vlaneseq
        %v774 = vshrl.u32 %v773, 7
        %v775 = vsub.s32 0, %v774
        %v776 = vrot.slane %v769, %v775
        %v777 = vlaneseq
        %v778 = vshrl.u32 %v777, 7
        %v779 = vsub.s32 1, %v778
        %v780 = vrot.slane %v769, %v779
        %v781 = vlaneseq
        %v782 = vshrl.u32 %v781, 7
        %v783 = vsub.s32 2, %v782
        %v784 = vrot.slane %v769, %v783
        %785 = vrot.lane.b32.xlu0 %v776, 32
        %v786 = vpop.permute.xlu0 %785
        %787 = vrot.lane.b32.xlu0 %v780, 32
        %v788 = vpop.permute.xlu0 %787
        %789 = vrot.lane.b32.xlu0 %v784, 32
        %v790 = vpop.permute.xlu0 %789
        %vm791 = vcmask 261120
        %v792 = vsel %vm791, %v786, %v788
        %v793 = vsel %vm791, %v788, %v790
        %v796 = vsel %vm770, %v792, 0.0
        %v797 = vsel %vm771, %v793, 0.0
        %v798 = vadd.f32 %v761, %v796
        %v799 = vadd.f32 %v762, %v797
        %s800 = sld [smem:[#allocation7 + $0xb]]
        %v801 = vstv %s800
        %v802 = vmul.f32 %v801, %v308
        %s803 = sld [smem:[#allocation7 + $0x3c]]
        %v804 = vstv %s803
        %v805 = vmul.f32 %v804, %v309
        %v806 = vadd.f32 %v802, %v805
        %vm807 = vmand %vm650, %vm518
        %vm808 = vmand %vm651, %vm519
        %v810 = vlaneseq
        %v811 = vshrl.u32 %v810, 7
        %v812 = vsub.s32 0, %v811
        %v813 = vrot.slane %v806, %v812
        %v814 = vlaneseq
        %v815 = vshrl.u32 %v814, 7
        %v816 = vsub.s32 1, %v815
        %v817 = vrot.slane %v806, %v816
        %v818 = vlaneseq
        %v819 = vshrl.u32 %v818, 7
        %v820 = vsub.s32 2, %v819
        %v821 = vrot.slane %v806, %v820
        %822 = vrot.lane.b32.xlu0 %v813, 31
        %v823 = vpop.permute.xlu0 %822
        %824 = vrot.lane.b32.xlu0 %v817, 31
        %v825 = vpop.permute.xlu0 %824
        %826 = vrot.lane.b32.xlu0 %v821, 31
        %v827 = vpop.permute.xlu0 %826
        %vm828 = vcmask 252928
        %v829 = vsel %vm828, %v823, %v825
        %v830 = vsel %vm828, %v825, %v827
        %v833 = vsel %vm807, %v829, 0.0
        %v834 = vsel %vm808, %v830, 0.0
        %v835 = vadd.f32 %v798, %v833
        %v836 = vadd.f32 %v799, %v834
        %s837 = sld [smem:[#allocation7 + $0xc]]
        %v838 = vstv %s837
        %v839 = vmul.f32 %v838, %v308
        %s840 = sld [smem:[#allocation7 + $0x3d]]
        %v841 = vstv %s840
        %v842 = vmul.f32 %v841, %v309
        %v843 = vadd.f32 %v839, %v842
        %vm844 = vmand %vm650, %vm566
        %vm845 = vmand %vm651, %vm567
        %v847 = vlaneseq
        %v848 = vshrl.u32 %v847, 7
        %v849 = vsub.s32 0, %v848
        %v850 = vrot.slane %v843, %v849
        %v851 = vlaneseq
        %v852 = vshrl.u32 %v851, 7
        %v853 = vsub.s32 1, %v852
        %v854 = vrot.slane %v843, %v853
        %v855 = vlaneseq
        %v856 = vshrl.u32 %v855, 7
        %v857 = vsub.s32 2, %v856
        %v858 = vrot.slane %v843, %v857
        %859 = vrot.lane.b32.xlu0 %v850, 30
        %v860 = vpop.permute.xlu0 %859
        %861 = vrot.lane.b32.xlu0 %v854, 30
        %v862 = vpop.permute.xlu0 %861
        %863 = vrot.lane.b32.xlu0 %v858, 30
        %v864 = vpop.permute.xlu0 %863
        %vm865 = vcmask 244736
        %v866 = vsel %vm865, %v860, %v862
        %v867 = vsel %vm865, %v862, %v864
        %v870 = vsel %vm844, %v866, 0.0
        %v871 = vsel %vm845, %v867, 0.0
        %v872 = vadd.f32 %v835, %v870
        %v873 = vadd.f32 %v836, %v871
        %s874 = sld [smem:[#allocation7 + $0xd]]
        %v875 = vstv %s874
        %v876 = vmul.f32 %v875, %v308
        %s877 = sld [smem:[#allocation7 + $0x3e]]
        %v878 = vstv %s877
        %v879 = vmul.f32 %v878, %v309
        %v880 = vadd.f32 %v876, %v879
        %vm881 = vmand %vm650, %vm614
        %vm882 = vmand %vm651, %vm615
        %v884 = vlaneseq
        %v885 = vshrl.u32 %v884, 7
        %v886 = vsub.s32 0, %v885
        %v887 = vrot.slane %v880, %v886
        %v888 = vlaneseq
        %v889 = vshrl.u32 %v888, 7
        %v890 = vsub.s32 1, %v889
        %v891 = vrot.slane %v880, %v890
        %v892 = vlaneseq
        %v893 = vshrl.u32 %v892, 7
        %v894 = vsub.s32 2, %v893
        %v895 = vrot.slane %v880, %v894
        %896 = vrot.lane.b32.xlu0 %v887, 29
        %v897 = vpop.permute.xlu0 %896
        %898 = vrot.lane.b32.xlu0 %v891, 29
        %v899 = vpop.permute.xlu0 %898
        %900 = vrot.lane.b32.xlu0 %v895, 29
        %v901 = vpop.permute.xlu0 %900
        %vm902 = vcmask 236544
        %v903 = vsel %vm902, %v897, %v899
        %v904 = vsel %vm902, %v899, %v901
        %v907 = vsel %vm881, %v903, 0.0
        %v908 = vsel %vm882, %v904, 0.0
        %v909 = vadd.f32 %v872, %v907
        %v910 = vadd.f32 %v873, %v908
        %vm911 = vcmp.ge.s32.totalorder %v278, 16
        %vm912 = vcmp.ge.s32.totalorder %v279, 16
        %vm913 = vcmp.lt.s32.totalorder %v278, 272
        %vm914 = vcmp.lt.s32.totalorder %v279, 272
        %vm915 = vmand %vm911, %vm913
        %vm916 = vmand %vm912, %vm914
        %s917 = sld [smem:[#allocation7 + $0xe]]
        %v918 = vstv %s917
        %v919 = vmul.f32 %v918, %v308
        %s920 = sld [smem:[#allocation7 + $0x3f]]
        %v921 = vstv %s920
        %v922 = vmul.f32 %v921, %v309
        %v923 = vadd.f32 %v919, %v922
        %vm924 = vmand %vm915, %vm326
        %vm925 = vmand %vm916, %vm327
        %v927 = vlaneseq
        %v928 = vshrl.u32 %v927, 7
        %v929 = vsub.s32 0, %v928
        %v930 = vrot.slane %v923, %v929
        %v931 = vlaneseq
        %v932 = vshrl.u32 %v931, 7
        %v933 = vsub.s32 1, %v932
        %v934 = vrot.slane %v923, %v933
        %v935 = vlaneseq
        %v936 = vshrl.u32 %v935, 7
        %v937 = vsub.s32 2, %v936
        %v938 = vrot.slane %v923, %v937
        %939 = vrot.lane.b32.xlu0 %v930, 19
        %v940 = vpop.permute.xlu0 %939
        %941 = vrot.lane.b32.xlu0 %v934, 19
        %v942 = vpop.permute.xlu0 %941
        %943 = vrot.lane.b32.xlu0 %v938, 19
        %v944 = vpop.permute.xlu0 %943
        %vm945 = vcmask 154624
        %v946 = vsel %vm945, %v940, %v942
        %v947 = vsel %vm945, %v942, %v944
        %v950 = vsel %vm924, %v946, 0.0
        %v951 = vsel %vm925, %v947, 0.0
        %v952 = vadd.f32 %v909, %v950
        %v953 = vadd.f32 %v910, %v951
        %s954 = sld [smem:[#allocation7 + $0xf]]
        %v955 = vstv %s954
        %v956 = vmul.f32 %v955, %v308
        %s957 = sld [smem:[#allocation7 + $0x40]]
        %v958 = vstv %s957
        %v959 = vmul.f32 %v958, %v309
        %v960 = vadd.f32 %v956, %v959
        %vm961 = vmand %vm915, %vm374
        %vm962 = vmand %vm916, %vm375
        %v964 = vlaneseq
        %v965 = vshrl.u32 %v964, 7
        %v966 = vsub.s32 0, %v965
        %v967 = vrot.slane %v960, %v966
        %v968 = vlaneseq
        %v969 = vshrl.u32 %v968, 7
        %v970 = vsub.s32 1, %v969
        %v971 = vrot.slane %v960, %v970
        %v972 = vlaneseq
        %v973 = vshrl.u32 %v972, 7
        %v974 = vsub.s32 2, %v973
        %v975 = vrot.slane %v960, %v974
        %976 = vrot.lane.b32.xlu0 %v967, 18
        %v977 = vpop.permute.xlu0 %976
        %978 = vrot.lane.b32.xlu0 %v971, 18
        %v979 = vpop.permute.xlu0 %978
        %980 = vrot.lane.b32.xlu0 %v975, 18
        %v981 = vpop.permute.xlu0 %980
        %vm982 = vcmask 146432
        %v983 = vsel %vm982, %v977, %v979
        %v984 = vsel %vm982, %v979, %v981
        %v987 = vsel %vm961, %v983, 0.0
        %v988 = vsel %vm962, %v984, 0.0
        %v989 = vadd.f32 %v952, %v987
        %v990 = vadd.f32 %v953, %v988
        %s991 = sld [smem:[#allocation7 + $0x10]]
        %v992 = vstv %s991
        %v993 = vmul.f32 %v992, %v308
        %s994 = sld [smem:[#allocation7 + $0x41]]
        %v995 = vstv %s994
        %v996 = vmul.f32 %v995, %v309
        %v997 = vadd.f32 %v993, %v996
        %vm998 = vmand %vm915, %vm422
        %vm999 = vmand %vm916, %vm423
        %v1001 = vlaneseq
        %v1002 = vshrl.u32 %v1001, 7
        %v1003 = vsub.s32 0, %v1002
        %v1004 = vrot.slane %v997, %v1003
        %v1005 = vlaneseq
        %v1006 = vshrl.u32 %v1005, 7
        %v1007 = vsub.s32 1, %v1006
        %v1008 = vrot.slane %v997, %v1007
        %v1009 = vlaneseq
        %v1010 = vshrl.u32 %v1009, 7
        %v1011 = vsub.s32 2, %v1010
        %v1012 = vrot.slane %v997, %v1011
        %1013 = vrot.lane.b32.xlu0 %v1004, 17
        %v1014 = vpop.permute.xlu0 %1013
        %1015 = vrot.lane.b32.xlu0 %v1008, 17
        %v1016 = vpop.permute.xlu0 %1015
        %1017 = vrot.lane.b32.xlu0 %v1012, 17
        %v1018 = vpop.permute.xlu0 %1017
        %vm1019 = vcmask 138240
        %v1020 = vsel %vm1019, %v1014, %v1016
        %v1021 = vsel %vm1019, %v1016, %v1018
        %v1024 = vsel %vm998, %v1020, 0.0
        %v1025 = vsel %vm999, %v1021, 0.0
        %v1026 = vadd.f32 %v989, %v1024
        %v1027 = vadd.f32 %v990, %v1025
        %s1028 = sld [smem:[#allocation7 + $0x11]]
        %v1029 = vstv %s1028
        %v1030 = vmul.f32 %v1029, %v308
        %s1031 = sld [smem:[#allocation7 + $0x42]]
        %v1032 = vstv %s1031
        %v1033 = vmul.f32 %v1032, %v309
        %v1034 = vadd.f32 %v1030, %v1033
        %vm1035 = vmand %vm915, %vm470
        %vm1036 = vmand %vm916, %vm471
        %v1038 = vlaneseq
        %v1039 = vshrl.u32 %v1038, 7
        %v1040 = vsub.s32 0, %v1039
        %v1041 = vrot.slane %v1034, %v1040
        %v1042 = vlaneseq
        %v1043 = vshrl.u32 %v1042, 7
        %v1044 = vsub.s32 1, %v1043
        %v1045 = vrot.slane %v1034, %v1044
        %v1046 = vlaneseq
        %v1047 = vshrl.u32 %v1046, 7
        %v1048 = vsub.s32 2, %v1047
        %v1049 = vrot.slane %v1034, %v1048
        %1050 = vrot.lane.b32.xlu0 %v1041, 16
        %v1051 = vpop.permute.xlu0 %1050
        %1052 = vrot.lane.b32.xlu0 %v1045, 16
        %v1053 = vpop.permute.xlu0 %1052
        %1054 = vrot.lane.b32.xlu0 %v1049, 16
        %v1055 = vpop.permute.xlu0 %1054
        %vm1056 = vcmask 130048
        %v1057 = vsel %vm1056, %v1051, %v1053
        %v1058 = vsel %vm1056, %v1053, %v1055
        %v1061 = vsel %vm1035, %v1057, 0.0
        %v1062 = vsel %vm1036, %v1058, 0.0
        %v1063 = vadd.f32 %v1026, %v1061
        %v1064 = vadd.f32 %v1027, %v1062
        %s1065 = sld [smem:[#allocation7 + $0x12]]
        %v1066 = vstv %s1065
        %v1067 = vmul.f32 %v1066, %v308
        %s1068 = sld [smem:[#allocation7 + $0x43]]
        %v1069 = vstv %s1068
        %v1070 = vmul.f32 %v1069, %v309
        %v1071 = vadd.f32 %v1067, %v1070
        %vm1072 = vmand %vm915, %vm518
        %vm1073 = vmand %vm916, %vm519
        %v1075 = vlaneseq
        %v1076 = vshrl.u32 %v1075, 7
        %v1077 = vsub.s32 0, %v1076
        %v1078 = vrot.slane %v1071, %v1077
        %v1079 = vlaneseq
        %v1080 = vshrl.u32 %v1079, 7
        %v1081 = vsub.s32 1, %v1080
        %v1082 = vrot.slane %v1071, %v1081
        %v1083 = vlaneseq
        %v1084 = vshrl.u32 %v1083, 7
        %v1085 = vsub.s32 2, %v1084
        %v1086 = vrot.slane %v1071, %v1085
        %1087 = vrot.lane.b32.xlu0 %v1078, 15
        %v1088 = vpop.permute.xlu0 %1087
        %1089 = vrot.lane.b32.xlu0 %v1082, 15
        %v1090 = vpop.permute.xlu0 %1089
        %1091 = vrot.lane.b32.xlu0 %v1086, 15
        %v1092 = vpop.permute.xlu0 %1091
        %vm1093 = vcmask 121856
        %v1094 = vsel %vm1093, %v1088, %v1090
        %v1095 = vsel %vm1093, %v1090, %v1092
        %v1098 = vsel %vm1072, %v1094, 0.0
        %v1099 = vsel %vm1073, %v1095, 0.0
        %v1100 = vadd.f32 %v1063, %v1098
        %v1101 = vadd.f32 %v1064, %v1099
        %s1102 = sld [smem:[#allocation7 + $0x13]]
        %v1103 = vstv %s1102
        %v1104 = vmul.f32 %v1103, %v308
        %s1105 = sld [smem:[#allocation7 + $0x44]]
        %v1106 = vstv %s1105
        %v1107 = vmul.f32 %v1106, %v309
        %v1108 = vadd.f32 %v1104, %v1107
        %vm1109 = vmand %vm915, %vm566
        %vm1110 = vmand %vm916, %vm567
        %v1112 = vlaneseq
        %v1113 = vshrl.u32 %v1112, 7
        %v1114 = vsub.s32 0, %v1113
        %v1115 = vrot.slane %v1108, %v1114
        %v1116 = vlaneseq
        %v1117 = vshrl.u32 %v1116, 7
        %v1118 = vsub.s32 1, %v1117
        %v1119 = vrot.slane %v1108, %v1118
        %v1120 = vlaneseq
        %v1121 = vshrl.u32 %v1120, 7
        %v1122 = vsub.s32 2, %v1121
        %v1123 = vrot.slane %v1108, %v1122
        %1124 = vrot.lane.b32.xlu0 %v1115, 14
        %v1125 = vpop.permute.xlu0 %1124
        %1126 = vrot.lane.b32.xlu0 %v1119, 14
        %v1127 = vpop.permute.xlu0 %1126
        %1128 = vrot.lane.b32.xlu0 %v1123, 14
        %v1129 = vpop.permute.xlu0 %1128
        %vm1130 = vcmask 113664
        %v1131 = vsel %vm1130, %v1125, %v1127
        %v1132 = vsel %vm1130, %v1127, %v1129
        %v1135 = vsel %vm1109, %v1131, 0.0
        %v1136 = vsel %vm1110, %v1132, 0.0
        %v1137 = vadd.f32 %v1100, %v1135
        %v1138 = vadd.f32 %v1101, %v1136
        %s1139 = sld [smem:[#allocation7 + $0x14]]
        %v1140 = vstv %s1139
        %v1141 = vmul.f32 %v1140, %v308
        %s1142 = sld [smem:[#allocation7 + $0x45]]
        %v1143 = vstv %s1142
        %v1144 = vmul.f32 %v1143, %v309
        %v1145 = vadd.f32 %v1141, %v1144
        %vm1146 = vmand %vm915, %vm614
        %vm1147 = vmand %vm916, %vm615
        %v1149 = vlaneseq
        %v1150 = vshrl.u32 %v1149, 7
        %v1151 = vsub.s32 0, %v1150
        %v1152 = vrot.slane %v1145, %v1151
        %v1153 = vlaneseq
        %v1154 = vshrl.u32 %v1153, 7
        %v1155 = vsub.s32 1, %v1154
        %v1156 = vrot.slane %v1145, %v1155
        %v1157 = vlaneseq
        %v1158 = vshrl.u32 %v1157, 7
        %v1159 = vsub.s32 2, %v1158
        %v1160 = vrot.slane %v1145, %v1159
        %1161 = vrot.lane.b32.xlu0 %v1152, 13
        %v1162 = vpop.permute.xlu0 %1161
        %1163 = vrot.lane.b32.xlu0 %v1156, 13
        %v1164 = vpop.permute.xlu0 %1163
        %1165 = vrot.lane.b32.xlu0 %v1160, 13
        %v1166 = vpop.permute.xlu0 %1165
        %vm1167 = vcmask 105472
        %v1168 = vsel %vm1167, %v1162, %v1164
        %v1169 = vsel %vm1167, %v1164, %v1166
        %v1172 = vsel %vm1146, %v1168, 0.0
        %v1173 = vsel %vm1147, %v1169, 0.0
        %v1174 = vadd.f32 %v1137, %v1172
        %v1175 = vadd.f32 %v1138, %v1173
        %vm1176 = vcmp.ge.s32.totalorder %v278, 0
        %vm1177 = vcmp.ge.s32.totalorder %v279, 0
        %vm1178 = vcmp.lt.s32.totalorder %v278, 256
        %vm1179 = vcmp.lt.s32.totalorder %v279, 256
        %vm1180 = vmand %vm1176, %vm1178
        %vm1181 = vmand %vm1177, %vm1179
        %s1182 = sld [smem:[#allocation7 + $0x15]]
        %v1183 = vstv %s1182
        %v1184 = vmul.f32 %v1183, %v308
        %s1185 = sld [smem:[#allocation7 + $0x46]]
        %v1186 = vstv %s1185
        %v1187 = vmul.f32 %v1186, %v309
        %v1188 = vadd.f32 %v1184, %v1187
        %vm1189 = vmand %vm1180, %vm326
        %vm1190 = vmand %vm1181, %vm327
        %v1192 = vlaneseq
        %v1193 = vshrl.u32 %v1192, 7
        %v1194 = vsub.s32 0, %v1193
        %v1195 = vrot.slane %v1188, %v1194
        %v1196 = vlaneseq
        %v1197 = vshrl.u32 %v1196, 7
        %v1198 = vsub.s32 1, %v1197
        %v1199 = vrot.slane %v1188, %v1198
        %v1200 = vlaneseq
        %v1201 = vshrl.u32 %v1200, 7
        %v1202 = vsub.s32 2, %v1201
        %v1203 = vrot.slane %v1188, %v1202
        %1204 = vrot.lane.b32.xlu0 %v1195, 3
        %v1205 = vpop.permute.xlu0 %1204
        %1206 = vrot.lane.b32.xlu0 %v1199, 3
        %v1207 = vpop.permute.xlu0 %1206
        %1208 = vrot.lane.b32.xlu0 %v1203, 3
        %v1209 = vpop.permute.xlu0 %1208
        %vm1210 = vcmask 23552
        %v1211 = vsel %vm1210, %v1205, %v1207
        %v1212 = vsel %vm1210, %v1207, %v1209
        %v1215 = vsel %vm1189, %v1211, 0.0
        %v1216 = vsel %vm1190, %v1212, 0.0
        %v1217 = vadd.f32 %v1174, %v1215
        %v1218 = vadd.f32 %v1175, %v1216
        %s1219 = sld [smem:[#allocation7 + $0x16]]
        %v1220 = vstv %s1219
        %v1221 = vmul.f32 %v1220, %v308
        %s1222 = sld [smem:[#allocation7 + $0x47]]
        %v1223 = vstv %s1222
        %v1224 = vmul.f32 %v1223, %v309
        %v1225 = vadd.f32 %v1221, %v1224
        %vm1226 = vmand %vm1180, %vm374
        %vm1227 = vmand %vm1181, %vm375
        %v1229 = vlaneseq
        %v1230 = vshrl.u32 %v1229, 7
        %v1231 = vsub.s32 0, %v1230
        %v1232 = vrot.slane %v1225, %v1231
        %v1233 = vlaneseq
        %v1234 = vshrl.u32 %v1233, 7
        %v1235 = vsub.s32 1, %v1234
        %v1236 = vrot.slane %v1225, %v1235
        %v1237 = vlaneseq
        %v1238 = vshrl.u32 %v1237, 7
        %v1239 = vsub.s32 2, %v1238
        %v1240 = vrot.slane %v1225, %v1239
        %1241 = vrot.lane.b32.xlu0 %v1232, 2
        %v1242 = vpop.permute.xlu0 %1241
        %1243 = vrot.lane.b32.xlu0 %v1236, 2
        %v1244 = vpop.permute.xlu0 %1243
        %1245 = vrot.lane.b32.xlu0 %v1240, 2
        %v1246 = vpop.permute.xlu0 %1245
        %vm1247 = vcmask 15360
        %v1248 = vsel %vm1247, %v1242, %v1244
        %v1249 = vsel %vm1247, %v1244, %v1246
        %v1252 = vsel %vm1226, %v1248, 0.0
        %v1253 = vsel %vm1227, %v1249, 0.0
        %v1254 = vadd.f32 %v1217, %v1252
        %v1255 = vadd.f32 %v1218, %v1253
        %s1256 = sld [smem:[#allocation7 + $0x17]]
        %v1257 = vstv %s1256
        %v1258 = vmul.f32 %v1257, %v308
        %s1259 = sld [smem:[#allocation7 + $0x48]]
        %v1260 = vstv %s1259
        %v1261 = vmul.f32 %v1260, %v309
        %v1262 = vadd.f32 %v1258, %v1261
        %vm1263 = vmand %vm1180, %vm422
        %vm1264 = vmand %vm1181, %vm423
        %v1266 = vlaneseq
        %v1267 = vshrl.u32 %v1266, 7
        %v1268 = vsub.s32 0, %v1267
        %v1269 = vrot.slane %v1262, %v1268
        %v1270 = vlaneseq
        %v1271 = vshrl.u32 %v1270, 7
        %v1272 = vsub.s32 1, %v1271
        %v1273 = vrot.slane %v1262, %v1272
        %v1274 = vlaneseq
        %v1275 = vshrl.u32 %v1274, 7
        %v1276 = vsub.s32 2, %v1275
        %v1277 = vrot.slane %v1262, %v1276
        %1278 = vrot.lane.b32.xlu0 %v1269, 1
        %v1279 = vpop.permute.xlu0 %1278
        %1280 = vrot.lane.b32.xlu0 %v1273, 1
        %v1281 = vpop.permute.xlu0 %1280
        %1282 = vrot.lane.b32.xlu0 %v1277, 1
        %v1283 = vpop.permute.xlu0 %1282
        %vm1284 = vcmask 7168
        %v1285 = vsel %vm1284, %v1279, %v1281
        %v1286 = vsel %vm1284, %v1281, %v1283
        %v1289 = vsel %vm1263, %v1285, 0.0
        %v1290 = vsel %vm1264, %v1286, 0.0
        %v1291 = vadd.f32 %v1254, %v1289
        %v1292 = vadd.f32 %v1255, %v1290
        %v1293 = vld [vmem:[#allocation2 + $0x1] sm:$0x3]
        %v1294 = vld [vmem:[%s275 + $0x1] sm:$0x3]
        %s1295 = sld [smem:[#allocation7 + $0x18]]
        %v1296 = vstv %s1295
        %v1297 = vmul.f32 %v1296, %v1293
        %s1298 = sld [smem:[#allocation7 + $0x49]]
        %v1299 = vstv %s1298
        %v1300 = vmul.f32 %v1299, %v1294
        %v1301 = vadd.f32 %v1297, %v1300
        %vm1302 = vmand %vm1180, %vm470
        %vm1303 = vmand %vm1181, %vm471
        %v1305 = vlaneseq
        %v1306 = vshrl.u32 %v1305, 7
        %v1307 = vsub.s32 0, %v1306
        %v1308 = vrot.slane %v1301, %v1307
        %v1309 = vlaneseq
        %v1310 = vshrl.u32 %v1309, 7
        %v1311 = vsub.s32 1, %v1310
        %v1312 = vrot.slane %v1301, %v1311
        %v1315 = vsel %vm1302, %v1308, 0.0
        %v1316 = vsel %vm1303, %v1312, 0.0
        %v1317 = vadd.f32 %v1291, %v1315
        %v1318 = vadd.f32 %v1292, %v1316
        %v1319 = vld [vmem:[#allocation2 + $0x1] sm:$0x7]
        %v1320 = vld [vmem:[%s275 + $0x1] sm:$0x7]
        %s1321 = sld [smem:[#allocation7 + $0x19]]
        %v1322 = vstv %s1321
        %v1323 = vmul.f32 %v1322, %v1319
        %s1324 = sld [smem:[#allocation7 + $0x4a]]
        %v1325 = vstv %s1324
        %v1326 = vmul.f32 %v1325, %v1320
        %v1327 = vadd.f32 %v1323, %v1326
        %vm1328 = vmand %vm1180, %vm518
        %vm1329 = vmand %vm1181, %vm519
        %v1331 = vlaneseq
        %v1332 = vshrl.u32 %v1331, 7
        %v1333 = vsub.s32 0, %v1332
        %v1334 = vrot.slane %v1327, %v1333
        %v1335 = vlaneseq
        %v1336 = vshrl.u32 %v1335, 7
        %v1337 = vsub.s32 1, %v1336
        %v1338 = vrot.slane %v1327, %v1337
        %v1339 = vlaneseq
        %v1340 = vshrl.u32 %v1339, 7
        %v1341 = vsub.s32 2, %v1340
        %v1342 = vrot.slane %v1327, %v1341
        %1343 = vrot.lane.b32.xlu0 %v1334, 127
        %v1344 = vpop.permute.xlu0 %1343
        %1345 = vrot.lane.b32.xlu0 %v1338, 127
        %v1346 = vpop.permute.xlu0 %1345
        %1347 = vrot.lane.b32.xlu0 %v1342, 127
        %v1348 = vpop.permute.xlu0 %1347
        %vm1349 = vcmask 1039360
        %v1350 = vsel %vm1349, %v1344, %v1346
        %v1351 = vsel %vm1349, %v1346, %v1348
        %v1354 = vsel %vm1328, %v1350, 0.0
        %v1355 = vsel %vm1329, %v1351, 0.0
        %v1356 = vadd.f32 %v1317, %v1354
        %v1357 = vadd.f32 %v1318, %v1355
        %s1358 = sld [smem:[#allocation7 + $0x1a]]
        %v1359 = vstv %s1358
        %v1360 = vmul.f32 %v1359, %v1319
        %s1361 = sld [smem:[#allocation7 + $0x4b]]
        %v1362 = vstv %s1361
        %v1363 = vmul.f32 %v1362, %v1320
        %v1364 = vadd.f32 %v1360, %v1363
        %vm1365 = vmand %vm1180, %vm566
        %vm1366 = vmand %vm1181, %vm567
        %v1368 = vlaneseq
        %v1369 = vshrl.u32 %v1368, 7
        %v1370 = vsub.s32 0, %v1369
        %v1371 = vrot.slane %v1364, %v1370
        %v1372 = vlaneseq
        %v1373 = vshrl.u32 %v1372, 7
        %v1374 = vsub.s32 1, %v1373
        %v1375 = vrot.slane %v1364, %v1374
        %v1376 = vlaneseq
        %v1377 = vshrl.u32 %v1376, 7
        %v1378 = vsub.s32 2, %v1377
        %v1379 = vrot.slane %v1364, %v1378
        %1380 = vrot.lane.b32.xlu0 %v1371, 126
        %v1381 = vpop.permute.xlu0 %1380
        %1382 = vrot.lane.b32.xlu0 %v1375, 126
        %v1383 = vpop.permute.xlu0 %1382
        %1384 = vrot.lane.b32.xlu0 %v1379, 126
        %v1385 = vpop.permute.xlu0 %1384
        %vm1386 = vcmask 1031168
        %v1387 = vsel %vm1386, %v1381, %v1383
        %v1388 = vsel %vm1386, %v1383, %v1385
        %v1391 = vsel %vm1365, %v1387, 0.0
        %v1392 = vsel %vm1366, %v1388, 0.0
        %v1393 = vadd.f32 %v1356, %v1391
        %v1394 = vadd.f32 %v1357, %v1392
        %s1395 = sld [smem:[#allocation7 + $0x1b]]
        %v1396 = vstv %s1395
        %v1397 = vmul.f32 %v1396, %v1319
        %s1398 = sld [smem:[#allocation7 + $0x4c]]
        %v1399 = vstv %s1398
        %v1400 = vmul.f32 %v1399, %v1320
        %v1401 = vadd.f32 %v1397, %v1400
        %vm1402 = vmand %vm1180, %vm614
        %vm1403 = vmand %vm1181, %vm615
        %v1405 = vlaneseq
        %v1406 = vshrl.u32 %v1405, 7
        %v1407 = vsub.s32 0, %v1406
        %v1408 = vrot.slane %v1401, %v1407
        %v1409 = vlaneseq
        %v1410 = vshrl.u32 %v1409, 7
        %v1411 = vsub.s32 1, %v1410
        %v1412 = vrot.slane %v1401, %v1411
        %v1413 = vlaneseq
        %v1414 = vshrl.u32 %v1413, 7
        %v1415 = vsub.s32 2, %v1414
        %v1416 = vrot.slane %v1401, %v1415
        %1417 = vrot.lane.b32.xlu0 %v1408, 125
        %v1418 = vpop.permute.xlu0 %1417
        %1419 = vrot.lane.b32.xlu0 %v1412, 125
        %v1420 = vpop.permute.xlu0 %1419
        %1421 = vrot.lane.b32.xlu0 %v1416, 125
        %v1422 = vpop.permute.xlu0 %1421
        %vm1423 = vcmask 1022976
        %v1424 = vsel %vm1423, %v1418, %v1420
        %v1425 = vsel %vm1423, %v1420, %v1422
        %v1428 = vsel %vm1402, %v1424, 0.0
        %v1429 = vsel %vm1403, %v1425, 0.0
        %v1430 = vadd.f32 %v1393, %v1428
        %v1431 = vadd.f32 %v1394, %v1429
        %vm1432 = vcmp.ge.s32.totalorder %v278, 4294967280
        %vm1433 = vcmp.ge.s32.totalorder %v279, 4294967280
        %vm1434 = vcmp.lt.s32.totalorder %v278, 240
        %vm1435 = vcmp.lt.s32.totalorder %v279, 240
        %vm1436 = vmand %vm1432, %vm1434
        %vm1437 = vmand %vm1433, %vm1435
        %s1438 = sld [smem:[#allocation7 + $0x1c]]
        %v1439 = vstv %s1438
        %v1440 = vmul.f32 %v1439, %v1319
        %s1441 = sld [smem:[#allocation7 + $0x4d]]
        %v1442 = vstv %s1441
        %v1443 = vmul.f32 %v1442, %v1320
        %v1444 = vadd.f32 %v1440, %v1443
        %vm1445 = vmand %vm1436, %vm326
        %vm1446 = vmand %vm1437, %vm327
        %v1448 = vlaneseq
        %v1449 = vshrl.u32 %v1448, 7
        %v1450 = vsub.s32 0, %v1449
        %v1451 = vrot.slane %v1444, %v1450
        %v1452 = vlaneseq
        %v1453 = vshrl.u32 %v1452, 7
        %v1454 = vsub.s32 1, %v1453
        %v1455 = vrot.slane %v1444, %v1454
        %v1456 = vlaneseq
        %v1457 = vshrl.u32 %v1456, 7
        %v1458 = vsub.s32 2, %v1457
        %v1459 = vrot.slane %v1444, %v1458
        %1460 = vrot.lane.b32.xlu0 %v1451, 115
        %v1461 = vpop.permute.xlu0 %1460
        %1462 = vrot.lane.b32.xlu0 %v1455, 115
        %v1463 = vpop.permute.xlu0 %1462
        %1464 = vrot.lane.b32.xlu0 %v1459, 115
        %v1465 = vpop.permute.xlu0 %1464
        %vm1466 = vcmask 941056
        %v1467 = vsel %vm1466, %v1461, %v1463
        %v1468 = vsel %vm1466, %v1463, %v1465
        %v1471 = vsel %vm1445, %v1467, 0.0
        %v1472 = vsel %vm1446, %v1468, 0.0
        %v1473 = vadd.f32 %v1430, %v1471
        %v1474 = vadd.f32 %v1431, %v1472
        %s1475 = sld [smem:[#allocation7 + $0x1d]]
        %v1476 = vstv %s1475
        %v1477 = vmul.f32 %v1476, %v1319
        %s1478 = sld [smem:[#allocation7 + $0x4e]]
        %v1479 = vstv %s1478
        %v1480 = vmul.f32 %v1479, %v1320
        %v1481 = vadd.f32 %v1477, %v1480
        %vm1482 = vmand %vm1436, %vm374
        %vm1483 = vmand %vm1437, %vm375
        %v1485 = vlaneseq
        %v1486 = vshrl.u32 %v1485, 7
        %v1487 = vsub.s32 0, %v1486
        %v1488 = vrot.slane %v1481, %v1487
        %v1489 = vlaneseq
        %v1490 = vshrl.u32 %v1489, 7
        %v1491 = vsub.s32 1, %v1490
        %v1492 = vrot.slane %v1481, %v1491
        %v1493 = vlaneseq
        %v1494 = vshrl.u32 %v1493, 7
        %v1495 = vsub.s32 2, %v1494
        %v1496 = vrot.slane %v1481, %v1495
        %1497 = vrot.lane.b32.xlu0 %v1488, 114
        %v1498 = vpop.permute.xlu0 %1497
        %1499 = vrot.lane.b32.xlu0 %v1492, 114
        %v1500 = vpop.permute.xlu0 %1499
        %1501 = vrot.lane.b32.xlu0 %v1496, 114
        %v1502 = vpop.permute.xlu0 %1501
        %vm1503 = vcmask 932864
        %v1504 = vsel %vm1503, %v1498, %v1500
        %v1505 = vsel %vm1503, %v1500, %v1502
        %v1508 = vsel %vm1482, %v1504, 0.0
        %v1509 = vsel %vm1483, %v1505, 0.0
        %v1510 = vadd.f32 %v1473, %v1508
        %v1511 = vadd.f32 %v1474, %v1509
        %s1512 = sld [smem:[#allocation7 + $0x1e]]
        %v1513 = vstv %s1512
        %v1514 = vmul.f32 %v1513, %v1319
        %s1515 = sld [smem:[#allocation7 + $0x4f]]
        %v1516 = vstv %s1515
        %v1517 = vmul.f32 %v1516, %v1320
        %v1518 = vadd.f32 %v1514, %v1517
        %vm1519 = vmand %vm1436, %vm422
        %vm1520 = vmand %vm1437, %vm423
        %v1522 = vlaneseq
        %v1523 = vshrl.u32 %v1522, 7
        %v1524 = vsub.s32 0, %v1523
        %v1525 = vrot.slane %v1518, %v1524
        %v1526 = vlaneseq
        %v1527 = vshrl.u32 %v1526, 7
        %v1528 = vsub.s32 1, %v1527
        %v1529 = vrot.slane %v1518, %v1528
        %v1530 = vlaneseq
        %v1531 = vshrl.u32 %v1530, 7
        %v1532 = vsub.s32 2, %v1531
        %v1533 = vrot.slane %v1518, %v1532
        %1534 = vrot.lane.b32.xlu0 %v1525, 113
        %v1535 = vpop.permute.xlu0 %1534
        %1536 = vrot.lane.b32.xlu0 %v1529, 113
        %v1537 = vpop.permute.xlu0 %1536
        %1538 = vrot.lane.b32.xlu0 %v1533, 113
        %v1539 = vpop.permute.xlu0 %1538
        %vm1540 = vcmask 924672
        %v1541 = vsel %vm1540, %v1535, %v1537
        %v1542 = vsel %vm1540, %v1537, %v1539
        %v1545 = vsel %vm1519, %v1541, 0.0
        %v1546 = vsel %vm1520, %v1542, 0.0
        %v1547 = vadd.f32 %v1510, %v1545
        %v1548 = vadd.f32 %v1511, %v1546
        %s1549 = sld [smem:[#allocation7 + $0x1f]]
        %v1550 = vstv %s1549
        %v1551 = vmul.f32 %v1550, %v1319
        %s1552 = sld [smem:[#allocation7 + $0x50]]
        %v1553 = vstv %s1552
        %v1554 = vmul.f32 %v1553, %v1320
        %v1555 = vadd.f32 %v1551, %v1554
        %vm1556 = vmand %vm1436, %vm470
        %vm1557 = vmand %vm1437, %vm471
        %v1559 = vlaneseq
        %v1560 = vshrl.u32 %v1559, 7
        %v1561 = vsub.s32 0, %v1560
        %v1562 = vrot.slane %v1555, %v1561
        %v1563 = vlaneseq
        %v1564 = vshrl.u32 %v1563, 7
        %v1565 = vsub.s32 1, %v1564
        %v1566 = vrot.slane %v1555, %v1565
        %v1567 = vlaneseq
        %v1568 = vshrl.u32 %v1567, 7
        %v1569 = vsub.s32 2, %v1568
        %v1570 = vrot.slane %v1555, %v1569
        %1571 = vrot.lane.b32.xlu0 %v1562, 112
        %v1572 = vpop.permute.xlu0 %1571
        %1573 = vrot.lane.b32.xlu0 %v1566, 112
        %v1574 = vpop.permute.xlu0 %1573
        %1575 = vrot.lane.b32.xlu0 %v1570, 112
        %v1576 = vpop.permute.xlu0 %1575
        %vm1577 = vcmask 916480
        %v1578 = vsel %vm1577, %v1572, %v1574
        %v1579 = vsel %vm1577, %v1574, %v1576
        %v1582 = vsel %vm1556, %v1578, 0.0
        %v1583 = vsel %vm1557, %v1579, 0.0
        %v1584 = vadd.f32 %v1547, %v1582
        %v1585 = vadd.f32 %v1548, %v1583
        %s1586 = sld [smem:[#allocation7 + $0x20]]
        %v1587 = vstv %s1586
        %v1588 = vmul.f32 %v1587, %v1319
        %s1589 = sld [smem:[#allocation7 + $0x51]]
        %v1590 = vstv %s1589
        %v1591 = vmul.f32 %v1590, %v1320
        %v1592 = vadd.f32 %v1588, %v1591
        %vm1593 = vmand %vm1436, %vm518
        %vm1594 = vmand %vm1437, %vm519
        %v1596 = vlaneseq
        %v1597 = vshrl.u32 %v1596, 7
        %v1598 = vsub.s32 0, %v1597
        %v1599 = vrot.slane %v1592, %v1598
        %v1600 = vlaneseq
        %v1601 = vshrl.u32 %v1600, 7
        %v1602 = vsub.s32 1, %v1601
        %v1603 = vrot.slane %v1592, %v1602
        %v1604 = vlaneseq
        %v1605 = vshrl.u32 %v1604, 7
        %v1606 = vsub.s32 2, %v1605
        %v1607 = vrot.slane %v1592, %v1606
        %1608 = vrot.lane.b32.xlu0 %v1599, 111
        %v1609 = vpop.permute.xlu0 %1608
        %1610 = vrot.lane.b32.xlu0 %v1603, 111
        %v1611 = vpop.permute.xlu0 %1610
        %1612 = vrot.lane.b32.xlu0 %v1607, 111
        %v1613 = vpop.permute.xlu0 %1612
        %vm1614 = vcmask 908288
        %v1615 = vsel %vm1614, %v1609, %v1611
        %v1616 = vsel %vm1614, %v1611, %v1613
        %v1619 = vsel %vm1593, %v1615, 0.0
        %v1620 = vsel %vm1594, %v1616, 0.0
        %v1621 = vadd.f32 %v1584, %v1619
        %v1622 = vadd.f32 %v1585, %v1620
        %s1623 = sld [smem:[#allocation7 + $0x21]]
        %v1624 = vstv %s1623
        %v1625 = vmul.f32 %v1624, %v1319
        %s1626 = sld [smem:[#allocation7 + $0x52]]
        %v1627 = vstv %s1626
        %v1628 = vmul.f32 %v1627, %v1320
        %v1629 = vadd.f32 %v1625, %v1628
        %vm1630 = vmand %vm1436, %vm566
        %vm1631 = vmand %vm1437, %vm567
        %v1633 = vlaneseq
        %v1634 = vshrl.u32 %v1633, 7
        %v1635 = vsub.s32 0, %v1634
        %v1636 = vrot.slane %v1629, %v1635
        %v1637 = vlaneseq
        %v1638 = vshrl.u32 %v1637, 7
        %v1639 = vsub.s32 1, %v1638
        %v1640 = vrot.slane %v1629, %v1639
        %v1641 = vlaneseq
        %v1642 = vshrl.u32 %v1641, 7
        %v1643 = vsub.s32 2, %v1642
        %v1644 = vrot.slane %v1629, %v1643
        %1645 = vrot.lane.b32.xlu0 %v1636, 110
        %v1646 = vpop.permute.xlu0 %1645
        %1647 = vrot.lane.b32.xlu0 %v1640, 110
        %v1648 = vpop.permute.xlu0 %1647
        %1649 = vrot.lane.b32.xlu0 %v1644, 110
        %v1650 = vpop.permute.xlu0 %1649
        %vm1651 = vcmask 900096
        %v1652 = vsel %vm1651, %v1646, %v1648
        %v1653 = vsel %vm1651, %v1648, %v1650
        %v1656 = vsel %vm1630, %v1652, 0.0
        %v1657 = vsel %vm1631, %v1653, 0.0
        %v1658 = vadd.f32 %v1621, %v1656
        %v1659 = vadd.f32 %v1622, %v1657
        %s1660 = sld [smem:[#allocation7 + $0x22]]
        %v1661 = vstv %s1660
        %v1662 = vmul.f32 %v1661, %v1319
        %s1663 = sld [smem:[#allocation7 + $0x53]]
        %v1664 = vstv %s1663
        %v1665 = vmul.f32 %v1664, %v1320
        %v1666 = vadd.f32 %v1662, %v1665
        %vm1667 = vmand %vm1436, %vm614
        %vm1668 = vmand %vm1437, %vm615
        %v1670 = vlaneseq
        %v1671 = vshrl.u32 %v1670, 7
        %v1672 = vsub.s32 0, %v1671
        %v1673 = vrot.slane %v1666, %v1672
        %v1674 = vlaneseq
        %v1675 = vshrl.u32 %v1674, 7
        %v1676 = vsub.s32 1, %v1675
        %v1677 = vrot.slane %v1666, %v1676
        %v1678 = vlaneseq
        %v1679 = vshrl.u32 %v1678, 7
        %v1680 = vsub.s32 2, %v1679
        %v1681 = vrot.slane %v1666, %v1680
        %1682 = vrot.lane.b32.xlu0 %v1673, 109
        %v1683 = vpop.permute.xlu0 %1682
        %1684 = vrot.lane.b32.xlu0 %v1677, 109
        %v1685 = vpop.permute.xlu0 %1684
        %1686 = vrot.lane.b32.xlu0 %v1681, 109
        %v1687 = vpop.permute.xlu0 %1686
        %vm1688 = vcmask 891904
        %v1689 = vsel %vm1688, %v1683, %v1685
        %v1690 = vsel %vm1688, %v1685, %v1687
        %v1693 = vsel %vm1667, %v1689, 0.0
        %v1694 = vsel %vm1668, %v1690, 0.0
        %v1695 = vadd.f32 %v1658, %v1693
        %v1696 = vadd.f32 %v1659, %v1694
        %vm1697 = vcmp.ge.s32.totalorder %v278, 4294967264
        %vm1698 = vcmp.ge.s32.totalorder %v279, 4294967264
        %vm1699 = vcmp.lt.s32.totalorder %v278, 224
        %vm1700 = vcmp.lt.s32.totalorder %v279, 224
        %vm1701 = vmand %vm1697, %vm1699
        %vm1702 = vmand %vm1698, %vm1700
        %s1703 = sld [smem:[#allocation7 + $0x23]]
        %v1704 = vstv %s1703
        %v1705 = vmul.f32 %v1704, %v1319
        %s1706 = sld [smem:[#allocation7 + $0x54]]
        %v1707 = vstv %s1706
        %v1708 = vmul.f32 %v1707, %v1320
        %v1709 = vadd.f32 %v1705, %v1708
        %vm1710 = vmand %vm1701, %vm326
        %vm1711 = vmand %vm1702, %vm327
        %v1713 = vlaneseq
        %v1714 = vshrl.u32 %v1713, 7
        %v1715 = vsub.s32 0, %v1714
        %v1716 = vrot.slane %v1709, %v1715
        %v1717 = vlaneseq
        %v1718 = vshrl.u32 %v1717, 7
        %v1719 = vsub.s32 1, %v1718
        %v1720 = vrot.slane %v1709, %v1719
        %v1721 = vlaneseq
        %v1722 = vshrl.u32 %v1721, 7
        %v1723 = vsub.s32 2, %v1722
        %v1724 = vrot.slane %v1709, %v1723
        %1725 = vrot.lane.b32.xlu0 %v1716, 99
        %v1726 = vpop.permute.xlu0 %1725
        %1727 = vrot.lane.b32.xlu0 %v1720, 99
        %v1728 = vpop.permute.xlu0 %1727
        %1729 = vrot.lane.b32.xlu0 %v1724, 99
        %v1730 = vpop.permute.xlu0 %1729
        %vm1731 = vcmask 809984
        %v1732 = vsel %vm1731, %v1726, %v1728
        %v1733 = vsel %vm1731, %v1728, %v1730
        %v1736 = vsel %vm1710, %v1732, 0.0
        %v1737 = vsel %vm1711, %v1733, 0.0
        %v1738 = vadd.f32 %v1695, %v1736
        %v1739 = vadd.f32 %v1696, %v1737
        %s1740 = sld [smem:[#allocation7 + $0x24]]
        %v1741 = vstv %s1740
        %v1742 = vmul.f32 %v1741, %v1319
        %s1743 = sld [smem:[#allocation7 + $0x55]]
        %v1744 = vstv %s1743
        %v1745 = vmul.f32 %v1744, %v1320
        %v1746 = vadd.f32 %v1742, %v1745
        %vm1747 = vmand %vm1701, %vm374
        %vm1748 = vmand %vm1702, %vm375
        %v1750 = vlaneseq
        %v1751 = vshrl.u32 %v1750, 7
        %v1752 = vsub.s32 0, %v1751
        %v1753 = vrot.slane %v1746, %v1752
        %v1754 = vlaneseq
        %v1755 = vshrl.u32 %v1754, 7
        %v1756 = vsub.s32 1, %v1755
        %v1757 = vrot.slane %v1746, %v1756
        %v1758 = vlaneseq
        %v1759 = vshrl.u32 %v1758, 7
        %v1760 = vsub.s32 2, %v1759
        %v1761 = vrot.slane %v1746, %v1760
        %1762 = vrot.lane.b32.xlu0 %v1753, 98
        %v1763 = vpop.permute.xlu0 %1762
        %1764 = vrot.lane.b32.xlu0 %v1757, 98
        %v1765 = vpop.permute.xlu0 %1764
        %1766 = vrot.lane.b32.xlu0 %v1761, 98
        %v1767 = vpop.permute.xlu0 %1766
        %vm1768 = vcmask 801792
        %v1769 = vsel %vm1768, %v1763, %v1765
        %v1770 = vsel %vm1768, %v1765, %v1767
        %v1773 = vsel %vm1747, %v1769, 0.0
        %v1774 = vsel %vm1748, %v1770, 0.0
        %v1775 = vadd.f32 %v1738, %v1773
        %v1776 = vadd.f32 %v1739, %v1774
        %s1777 = sld [smem:[#allocation7 + $0x25]]
        %v1778 = vstv %s1777
        %v1779 = vmul.f32 %v1778, %v1319
        %s1780 = sld [smem:[#allocation7 + $0x56]]
        %v1781 = vstv %s1780
        %v1782 = vmul.f32 %v1781, %v1320
        %v1783 = vadd.f32 %v1779, %v1782
        %vm1784 = vmand %vm1701, %vm422
        %vm1785 = vmand %vm1702, %vm423
        %v1787 = vlaneseq
        %v1788 = vshrl.u32 %v1787, 7
        %v1789 = vsub.s32 0, %v1788
        %v1790 = vrot.slane %v1783, %v1789
        %v1791 = vlaneseq
        %v1792 = vshrl.u32 %v1791, 7
        %v1793 = vsub.s32 1, %v1792
        %v1794 = vrot.slane %v1783, %v1793
        %v1795 = vlaneseq
        %v1796 = vshrl.u32 %v1795, 7
        %v1797 = vsub.s32 2, %v1796
        %v1798 = vrot.slane %v1783, %v1797
        %1799 = vrot.lane.b32.xlu0 %v1790, 97
        %v1800 = vpop.permute.xlu0 %1799
        %1801 = vrot.lane.b32.xlu0 %v1794, 97
        %v1802 = vpop.permute.xlu0 %1801
        %1803 = vrot.lane.b32.xlu0 %v1798, 97
        %v1804 = vpop.permute.xlu0 %1803
        %vm1805 = vcmask 793600
        %v1806 = vsel %vm1805, %v1800, %v1802
        %v1807 = vsel %vm1805, %v1802, %v1804
        %v1810 = vsel %vm1784, %v1806, 0.0
        %v1811 = vsel %vm1785, %v1807, 0.0
        %v1812 = vadd.f32 %v1775, %v1810
        %v1813 = vadd.f32 %v1776, %v1811
        %s1814 = sld [smem:[#allocation7 + $0x26]]
        %v1815 = vstv %s1814
        %v1816 = vmul.f32 %v1815, %v1319
        %s1817 = sld [smem:[#allocation7 + $0x57]]
        %v1818 = vstv %s1817
        %v1819 = vmul.f32 %v1818, %v1320
        %v1820 = vadd.f32 %v1816, %v1819
        %vm1821 = vmand %vm1701, %vm470
        %vm1822 = vmand %vm1702, %vm471
        %v1824 = vlaneseq
        %v1825 = vshrl.u32 %v1824, 7
        %v1826 = vsub.s32 0, %v1825
        %v1827 = vrot.slane %v1820, %v1826
        %v1828 = vlaneseq
        %v1829 = vshrl.u32 %v1828, 7
        %v1830 = vsub.s32 1, %v1829
        %v1831 = vrot.slane %v1820, %v1830
        %v1832 = vlaneseq
        %v1833 = vshrl.u32 %v1832, 7
        %v1834 = vsub.s32 2, %v1833
        %v1835 = vrot.slane %v1820, %v1834
        %1836 = vrot.lane.b32.xlu0 %v1827, 96
        %v1837 = vpop.permute.xlu0 %1836
        %1838 = vrot.lane.b32.xlu0 %v1831, 96
        %v1839 = vpop.permute.xlu0 %1838
        %1840 = vrot.lane.b32.xlu0 %v1835, 96
        %v1841 = vpop.permute.xlu0 %1840
        %vm1842 = vcmask 785408
        %v1843 = vsel %vm1842, %v1837, %v1839
        %v1844 = vsel %vm1842, %v1839, %v1841
        %v1847 = vsel %vm1821, %v1843, 0.0
        %v1848 = vsel %vm1822, %v1844, 0.0
        %v1849 = vadd.f32 %v1812, %v1847
        %v1850 = vadd.f32 %v1813, %v1848
        %s1851 = sld [smem:[#allocation7 + $0x27]]
        %v1852 = vstv %s1851
        %v1853 = vmul.f32 %v1852, %v1319
        %s1854 = sld [smem:[#allocation7 + $0x58]]
        %v1855 = vstv %s1854
        %v1856 = vmul.f32 %v1855, %v1320
        %v1857 = vadd.f32 %v1853, %v1856
        %vm1858 = vmand %vm1701, %vm518
        %vm1859 = vmand %vm1702, %vm519
        %v1861 = vlaneseq
        %v1862 = vshrl.u32 %v1861, 7
        %v1863 = vsub.s32 0, %v1862
        %v1864 = vrot.slane %v1857, %v1863
        %v1865 = vlaneseq
        %v1866 = vshrl.u32 %v1865, 7
        %v1867 = vsub.s32 1, %v1866
        %v1868 = vrot.slane %v1857, %v1867
        %v1869 = vlaneseq
        %v1870 = vshrl.u32 %v1869, 7
        %v1871 = vsub.s32 2, %v1870
        %v1872 = vrot.slane %v1857, %v1871
        %1873 = vrot.lane.b32.xlu0 %v1864, 95
        %v1874 = vpop.permute.xlu0 %1873
        %1875 = vrot.lane.b32.xlu0 %v1868, 95
        %v1876 = vpop.permute.xlu0 %1875
        %1877 = vrot.lane.b32.xlu0 %v1872, 95
        %v1878 = vpop.permute.xlu0 %1877
        %vm1879 = vcmask 777216
        %v1880 = vsel %vm1879, %v1874, %v1876
        %v1881 = vsel %vm1879, %v1876, %v1878
        %v1884 = vsel %vm1858, %v1880, 0.0
        %v1885 = vsel %vm1859, %v1881, 0.0
        %v1886 = vadd.f32 %v1849, %v1884
        %v1887 = vadd.f32 %v1850, %v1885
        %s1888 = sld [smem:[#allocation7 + $0x28]]
        %v1889 = vstv %s1888
        %v1890 = vmul.f32 %v1889, %v1319
        %s1891 = sld [smem:[#allocation7 + $0x59]]
        %v1892 = vstv %s1891
        %v1893 = vmul.f32 %v1892, %v1320
        %v1894 = vadd.f32 %v1890, %v1893
        %vm1895 = vmand %vm1701, %vm566
        %vm1896 = vmand %vm1702, %vm567
        %v1898 = vlaneseq
        %v1899 = vshrl.u32 %v1898, 7
        %v1900 = vsub.s32 0, %v1899
        %v1901 = vrot.slane %v1894, %v1900
        %v1902 = vlaneseq
        %v1903 = vshrl.u32 %v1902, 7
        %v1904 = vsub.s32 1, %v1903
        %v1905 = vrot.slane %v1894, %v1904
        %v1906 = vlaneseq
        %v1907 = vshrl.u32 %v1906, 7
        %v1908 = vsub.s32 2, %v1907
        %v1909 = vrot.slane %v1894, %v1908
        %1910 = vrot.lane.b32.xlu0 %v1901, 94
        %v1911 = vpop.permute.xlu0 %1910
        %1912 = vrot.lane.b32.xlu0 %v1905, 94
        %v1913 = vpop.permute.xlu0 %1912
        %1914 = vrot.lane.b32.xlu0 %v1909, 94
        %v1915 = vpop.permute.xlu0 %1914
        %vm1916 = vcmask 769024
        %v1917 = vsel %vm1916, %v1911, %v1913
        %v1918 = vsel %vm1916, %v1913, %v1915
        %v1921 = vsel %vm1895, %v1917, 0.0
        %v1922 = vsel %vm1896, %v1918, 0.0
        %v1923 = vadd.f32 %v1886, %v1921
        %v1924 = vadd.f32 %v1887, %v1922
        %s1925 = sld [smem:[#allocation7 + $0x29]]
        %v1926 = vstv %s1925
        %v1927 = vmul.f32 %v1926, %v1319
        %s1928 = sld [smem:[#allocation7 + $0x5a]]
        %v1929 = vstv %s1928
        %v1930 = vmul.f32 %v1929, %v1320
        %v1931 = vadd.f32 %v1927, %v1930
        %vm1932 = vmand %vm1701, %vm614
        %vm1933 = vmand %vm1702, %vm615
        %v1935 = vlaneseq
        %v1936 = vshrl.u32 %v1935, 7
        %v1937 = vsub.s32 0, %v1936
        %v1938 = vrot.slane %v1931, %v1937
        %v1939 = vlaneseq
        %v1940 = vshrl.u32 %v1939, 7
        %v1941 = vsub.s32 1, %v1940
        %v1942 = vrot.slane %v1931, %v1941
        %v1943 = vlaneseq
        %v1944 = vshrl.u32 %v1943, 7
        %v1945 = vsub.s32 2, %v1944
        %v1946 = vrot.slane %v1931, %v1945
        %1947 = vrot.lane.b32.xlu0 %v1938, 93
        %v1948 = vpop.permute.xlu0 %1947
        %1949 = vrot.lane.b32.xlu0 %v1942, 93
        %v1950 = vpop.permute.xlu0 %1949
        %1951 = vrot.lane.b32.xlu0 %v1946, 93
        %v1952 = vpop.permute.xlu0 %1951
        %vm1953 = vcmask 760832
        %v1954 = vsel %vm1953, %v1948, %v1950
        %v1955 = vsel %vm1953, %v1950, %v1952
        %v1958 = vsel %vm1932, %v1954, 0.0
        %v1959 = vsel %vm1933, %v1955, 0.0
        %v1960 = vadd.f32 %v1923, %v1958
        %v1961 = vadd.f32 %v1924, %v1959
        %vm1962 = vcmp.ge.s32.totalorder %v278, 4294967248
        %vm1963 = vcmp.ge.s32.totalorder %v279, 4294967248
        %vm1964 = vcmp.lt.s32.totalorder %v278, 208
        %vm1965 = vcmp.lt.s32.totalorder %v279, 208
        %vm1966 = vmand %vm1962, %vm1964
        %vm1967 = vmand %vm1963, %vm1965
        %s1968 = sld [smem:[#allocation7 + $0x2a]]
        %v1969 = vstv %s1968
        %v1970 = vmul.f32 %v1969, %v1319
        %s1971 = sld [smem:[#allocation7 + $0x5b]]
        %v1972 = vstv %s1971
        %v1973 = vmul.f32 %v1972, %v1320
        %v1974 = vadd.f32 %v1970, %v1973
        %vm1975 = vmand %vm1966, %vm326
        %vm1976 = vmand %vm1967, %vm327
        %v1978 = vlaneseq
        %v1979 = vshrl.u32 %v1978, 7
        %v1980 = vsub.s32 0, %v1979
        %v1981 = vrot.slane %v1974, %v1980
        %v1982 = vlaneseq
        %v1983 = vshrl.u32 %v1982, 7
        %v1984 = vsub.s32 1, %v1983
        %v1985 = vrot.slane %v1974, %v1984
        %v1986 = vlaneseq
        %v1987 = vshrl.u32 %v1986, 7
        %v1988 = vsub.s32 2, %v1987
        %v1989 = vrot.slane %v1974, %v1988
        %1990 = vrot.lane.b32.xlu0 %v1981, 83
        %v1991 = vpop.permute.xlu0 %1990
        %1992 = vrot.lane.b32.xlu0 %v1985, 83
        %v1993 = vpop.permute.xlu0 %1992
        %1994 = vrot.lane.b32.xlu0 %v1989, 83
        %v1995 = vpop.permute.xlu0 %1994
        %vm1996 = vcmask 678912
        %v1997 = vsel %vm1996, %v1991, %v1993
        %v1998 = vsel %vm1996, %v1993, %v1995
        %v2001 = vsel %vm1975, %v1997, 0.0
        %v2002 = vsel %vm1976, %v1998, 0.0
        %v2003 = vadd.f32 %v1960, %v2001
        %v2004 = vadd.f32 %v1961, %v2002
        %s2005 = sld [smem:[#allocation7 + $0x2b]]
        %v2006 = vstv %s2005
        %v2007 = vmul.f32 %v2006, %v1319
        %s2008 = sld [smem:[#allocation7 + $0x5c]]
        %v2009 = vstv %s2008
        %v2010 = vmul.f32 %v2009, %v1320
        %v2011 = vadd.f32 %v2007, %v2010
        %vm2012 = vmand %vm1966, %vm374
        %vm2013 = vmand %vm1967, %vm375
        %v2015 = vlaneseq
        %v2016 = vshrl.u32 %v2015, 7
        %v2017 = vsub.s32 0, %v2016
        %v2018 = vrot.slane %v2011, %v2017
        %v2019 = vlaneseq
        %v2020 = vshrl.u32 %v2019, 7
        %v2021 = vsub.s32 1, %v2020
        %v2022 = vrot.slane %v2011, %v2021
        %v2023 = vlaneseq
        %v2024 = vshrl.u32 %v2023, 7
        %v2025 = vsub.s32 2, %v2024
        %v2026 = vrot.slane %v2011, %v2025
        %2027 = vrot.lane.b32.xlu0 %v2018, 82
        %v2028 = vpop.permute.xlu0 %2027
        %2029 = vrot.lane.b32.xlu0 %v2022, 82
        %v2030 = vpop.permute.xlu0 %2029
        %2031 = vrot.lane.b32.xlu0 %v2026, 82
        %v2032 = vpop.permute.xlu0 %2031
        %vm2033 = vcmask 670720
        %v2034 = vsel %vm2033, %v2028, %v2030
        %v2035 = vsel %vm2033, %v2030, %v2032
        %v2038 = vsel %vm2012, %v2034, 0.0
        %v2039 = vsel %vm2013, %v2035, 0.0
        %v2040 = vadd.f32 %v2003, %v2038
        %v2041 = vadd.f32 %v2004, %v2039
        %s2042 = sld [smem:[#allocation7 + $0x2c]]
        %v2043 = vstv %s2042
        %v2044 = vmul.f32 %v2043, %v1319
        %s2045 = sld [smem:[#allocation7 + $0x5d]]
        %v2046 = vstv %s2045
        %v2047 = vmul.f32 %v2046, %v1320
        %v2048 = vadd.f32 %v2044, %v2047
        %vm2049 = vmand %vm1966, %vm422
        %vm2050 = vmand %vm1967, %vm423
        %v2052 = vlaneseq
        %v2053 = vshrl.u32 %v2052, 7
        %v2054 = vsub.s32 0, %v2053
        %v2055 = vrot.slane %v2048, %v2054
        %v2056 = vlaneseq
        %v2057 = vshrl.u32 %v2056, 7
        %v2058 = vsub.s32 1, %v2057
        %v2059 = vrot.slane %v2048, %v2058
        %v2060 = vlaneseq
        %v2061 = vshrl.u32 %v2060, 7
        %v2062 = vsub.s32 2, %v2061
        %v2063 = vrot.slane %v2048, %v2062
        %2064 = vrot.lane.b32.xlu0 %v2055, 81
        %v2065 = vpop.permute.xlu0 %2064
        %2066 = vrot.lane.b32.xlu0 %v2059, 81
        %v2067 = vpop.permute.xlu0 %2066
        %2068 = vrot.lane.b32.xlu0 %v2063, 81
        %v2069 = vpop.permute.xlu0 %2068
        %vm2070 = vcmask 662528
        %v2071 = vsel %vm2070, %v2065, %v2067
        %v2072 = vsel %vm2070, %v2067, %v2069
        %v2075 = vsel %vm2049, %v2071, 0.0
        %v2076 = vsel %vm2050, %v2072, 0.0
        %v2077 = vadd.f32 %v2040, %v2075
        %v2078 = vadd.f32 %v2041, %v2076
        %s2079 = sld [smem:[#allocation7 + $0x2d]]
        %v2080 = vstv %s2079
        %v2081 = vmul.f32 %v2080, %v1319
        %s2082 = sld [smem:[#allocation7 + $0x5e]]
        %v2083 = vstv %s2082
        %v2084 = vmul.f32 %v2083, %v1320
        %v2085 = vadd.f32 %v2081, %v2084
        %vm2086 = vmand %vm1966, %vm470
        %vm2087 = vmand %vm1967, %vm471
        %v2089 = vlaneseq
        %v2090 = vshrl.u32 %v2089, 7
        %v2091 = vsub.s32 0, %v2090
        %v2092 = vrot.slane %v2085, %v2091
        %v2093 = vlaneseq
        %v2094 = vshrl.u32 %v2093, 7
        %v2095 = vsub.s32 1, %v2094
        %v2096 = vrot.slane %v2085, %v2095
        %v2097 = vlaneseq
        %v2098 = vshrl.u32 %v2097, 7
        %v2099 = vsub.s32 2, %v2098
        %v2100 = vrot.slane %v2085, %v2099
        %2101 = vrot.lane.b32.xlu0 %v2092, 80
        %v2102 = vpop.permute.xlu0 %2101
        %2103 = vrot.lane.b32.xlu0 %v2096, 80
        %v2104 = vpop.permute.xlu0 %2103
        %2105 = vrot.lane.b32.xlu0 %v2100, 80
        %v2106 = vpop.permute.xlu0 %2105
        %vm2107 = vcmask 654336
        %v2108 = vsel %vm2107, %v2102, %v2104
        %v2109 = vsel %vm2107, %v2104, %v2106
        %v2112 = vsel %vm2086, %v2108, 0.0
        %v2113 = vsel %vm2087, %v2109, 0.0
        %v2114 = vadd.f32 %v2077, %v2112
        %v2115 = vadd.f32 %v2078, %v2113
        %s2116 = sld [smem:[#allocation7 + $0x2e]]
        %v2117 = vstv %s2116
        %v2118 = vmul.f32 %v2117, %v1319
        %s2119 = sld [smem:[#allocation7 + $0x5f]]
        %v2120 = vstv %s2119
        %v2121 = vmul.f32 %v2120, %v1320
        %v2122 = vadd.f32 %v2118, %v2121
        %vm2123 = vmand %vm1966, %vm518
        %vm2124 = vmand %vm1967, %vm519
        %v2126 = vlaneseq
        %v2127 = vshrl.u32 %v2126, 7
        %v2128 = vsub.s32 0, %v2127
        %v2129 = vrot.slane %v2122, %v2128
        %v2130 = vlaneseq
        %v2131 = vshrl.u32 %v2130, 7
        %v2132 = vsub.s32 1, %v2131
        %v2133 = vrot.slane %v2122, %v2132
        %v2134 = vlaneseq
        %v2135 = vshrl.u32 %v2134, 7
        %v2136 = vsub.s32 2, %v2135
        %v2137 = vrot.slane %v2122, %v2136
        %2138 = vrot.lane.b32.xlu0 %v2129, 79
        %v2139 = vpop.permute.xlu0 %2138
        %2140 = vrot.lane.b32.xlu0 %v2133, 79
        %v2141 = vpop.permute.xlu0 %2140
        %2142 = vrot.lane.b32.xlu0 %v2137, 79
        %v2143 = vpop.permute.xlu0 %2142
        %vm2144 = vcmask 646144
        %v2145 = vsel %vm2144, %v2139, %v2141
        %v2146 = vsel %vm2144, %v2141, %v2143
        %v2149 = vsel %vm2123, %v2145, 0.0
        %v2150 = vsel %vm2124, %v2146, 0.0
        %v2151 = vadd.f32 %v2114, %v2149
        %v2152 = vadd.f32 %v2115, %v2150
        %s2153 = sld [smem:[#allocation7 + $0x2f]]
        %v2154 = vstv %s2153
        %v2155 = vmul.f32 %v2154, %v1319
        %s2156 = sld [smem:[#allocation7 + $0x60]]
        %v2157 = vstv %s2156
        %v2158 = vmul.f32 %v2157, %v1320
        %v2159 = vadd.f32 %v2155, %v2158
        %vm2160 = vmand %vm1966, %vm566
        %vm2161 = vmand %vm1967, %vm567
        %v2163 = vlaneseq
        %v2164 = vshrl.u32 %v2163, 7
        %v2165 = vsub.s32 0, %v2164
        %v2166 = vrot.slane %v2159, %v2165
        %v2167 = vlaneseq
        %v2168 = vshrl.u32 %v2167, 7
        %v2169 = vsub.s32 1, %v2168
        %v2170 = vrot.slane %v2159, %v2169
        %v2171 = vlaneseq
        %v2172 = vshrl.u32 %v2171, 7
        %v2173 = vsub.s32 2, %v2172
        %v2174 = vrot.slane %v2159, %v2173
        %2175 = vrot.lane.b32.xlu0 %v2166, 78
        %v2176 = vpop.permute.xlu0 %2175
        %2177 = vrot.lane.b32.xlu0 %v2170, 78
        %v2178 = vpop.permute.xlu0 %2177
        %2179 = vrot.lane.b32.xlu0 %v2174, 78
        %v2180 = vpop.permute.xlu0 %2179
        %vm2181 = vcmask 637952
        %v2182 = vsel %vm2181, %v2176, %v2178
        %v2183 = vsel %vm2181, %v2178, %v2180
        %v2186 = vsel %vm2160, %v2182, 0.0
        %v2187 = vsel %vm2161, %v2183, 0.0
        %v2188 = vadd.f32 %v2151, %v2186
        %v2189 = vadd.f32 %v2152, %v2187
        %s2190 = sld [smem:[#allocation7 + $0x30]]
        %v2191 = vstv %s2190
        %v2192 = vmul.f32 %v2191, %v1319
        %s2193 = sld [smem:[#allocation7 + $0x61]]
        %v2194 = vstv %s2193
        %v2195 = vmul.f32 %v2194, %v1320
        %v2196 = vadd.f32 %v2192, %v2195
        %vm2197 = vmand %vm1966, %vm614
        %vm2198 = vmand %vm1967, %vm615
        %v2200 = vlaneseq
        %v2201 = vshrl.u32 %v2200, 7
        %v2202 = vsub.s32 0, %v2201
        %v2203 = vrot.slane %v2196, %v2202
        %v2204 = vlaneseq
        %v2205 = vshrl.u32 %v2204, 7
        %v2206 = vsub.s32 1, %v2205
        %v2207 = vrot.slane %v2196, %v2206
        %v2208 = vlaneseq
        %v2209 = vshrl.u32 %v2208, 7
        %v2210 = vsub.s32 2, %v2209
        %v2211 = vrot.slane %v2196, %v2210
        %2212 = vrot.lane.b32.xlu0 %v2203, 77
        %v2213 = vpop.permute.xlu0 %2212
        %2214 = vrot.lane.b32.xlu0 %v2207, 77
        %v2215 = vpop.permute.xlu0 %2214
        %2216 = vrot.lane.b32.xlu0 %v2211, 77
        %v2217 = vpop.permute.xlu0 %2216
        %vm2218 = vcmask 629760
        %v2219 = vsel %vm2218, %v2213, %v2215
        %v2220 = vsel %vm2218, %v2215, %v2217
        %v2223 = vsel %vm2197, %v2219, 0.0
        %v2224 = vsel %vm2198, %v2220, 0.0
        %v2225 = vadd.f32 %v2188, %v2223
        %v2226 = vadd.f32 %v2189, %v2224
        %v2227 = vxor.u32 %v2225, 2147483648
        %v2228 = vxor.u32 %v2226, 2147483648
        %v2229 = vmul.f32 %v2227, 1.442695
        %v2230 = vpow.pop %v2229
        %v2231 = vmul.f32 %v2228, 1.442695
        %v2232 = vpow.pop %v2231
        %v2233 = vadd.f32 %v2230, 1.0
        %v2234 = vadd.f32 %v2232, 1.0
        %v2235 = vrcp.pop %v2233
        %v2236 = vmul.f32 1.0, %v2235
        %v2237 = vrcp.pop %v2234
        %v2238 = vmul.f32 1.0, %v2237
        %v2241 = vcombine.low %v2236, %v2238
        %v2243 = vunpack.c.l.s4 1966171168
        %v2244 = vunpack.c.0.s8 %v2243
        %v2245 = vlaneseq
        %v2246 = vshrl.u32 %v2245, 7
        %v2247 = vsub.s32 %v2244, %v2246
        %v2248 = vrot.slane %v2241, %v2247
        %v2250 = vunpack.c.l.s4 1966171168
        %v2251 = vunpack.c.0.s8 %v2250
        %v2252 = vlaneseq
        %v2253 = vshrl.u32 %v2252, 7
        %v2254 = vsub.s32 %v2251, %v2253
        %v2255 = vrot.slane %v2248, %v2254
        %2257 = vst.msk [vmem:[%s200] sm:$0x3] %vm241, %v2255
        %s2258 = sand.u32 %s97, 1
        %s2259 = scalar_lea.sflag [#allocation5], %s2258
        %s2260 = sand.u32 %s97, 1
        %s2261 = smul.addr %s2260, 2
        %s2262 = scalar_lea.vmem [#allocation8], %s2261
        // Predicated region
        $region41: #{tpu_custom_call.1} parent=31 // pred_check
          %p2263 = pneg %p107
        $region42: #{tpu_custom_call.1} parent=31 // pred_check_branch
          %2265 = sbr.rel (%p2263) target = $region44
        $region43: #{tpu_custom_call.1} parent=31 // pred_region
          %s2267 = ssub.s32 32, 32
          %2268 = vsyncadd %s2259, %s2267
          %s2269 = smul.addr %s21, 2
          %s2270 = smul.addr %s2269, 16
          %s2271 = scalar_lea.hbm %s3, %s2270
          %s2273 = sshll.u32 %s2262, 4
          %s2274 = int_to_ptr.vmem [resolvable:$true] %s2273
          %2276 = dma.vmem_to_hbm [thread:$0]  %s2274, 32, %s2271, %s2259
        $region44: #{tpu_custom_call.1} parent=31 // pred_fallthru
          _
      $region32: #{tpu_custom_call.1} parent=5 // pred_fallthru
        _
      %p2277 = scmp.le.s32.totalorder 2, %s16
      // Predicated region
      $region45: #{tpu_custom_call.1} parent=5 // pred_check
        %p2278 = pneg %p2277
      $region46: #{tpu_custom_call.1} parent=5 // pred_check_branch
        %2280 = sbr.rel (%p2278) target = $region48
      $region47: #{tpu_custom_call.1} parent=5 // pred_region
        %s2281 = ssub.s32 %s16, 2
        // Predicated region
        $region49: #{tpu_custom_call.1} parent=47 // pred_check
          %p2282 = pneg %p113
        $region50: #{tpu_custom_call.1} parent=47 // pred_check_branch
          %2284 = sbr.rel (%p2282) target = $region52
        $region51: #{tpu_custom_call.1} parent=47 // pred_region
          %s2285 = sand.u32 %s98, 1
          %s2286 = scalar_lea.sflag [#allocation5], %s2285
          %s2287 = sand.u32 %s98, 1
          %s2288 = smul.addr %s2287, 2
          %s2289 = scalar_lea.vmem [#allocation8], %s2288
          %2290 = dma.done %s2286, 32
        $region52: #{tpu_custom_call.1} parent=47 // pred_fallthru
          _
      $region48: #{tpu_custom_call.1} parent=5 // pred_fallthru
        _
    $region6: #{tpu_custom_call.1} parent=1 // loop_footer
      %s20 = sadd.s32 1, %s16
    $region7: #{tpu_custom_call.1} parent=1 // loop_footer_branch
      %15 = sbr.rel target = $region3
    $region8: #{tpu_custom_call.1} parent=1 // loop_exit
      _
    %2291 = vsyncpa [#allocation4], 1
    %s2292 = scalar_lea.sflag [#allocation4], 1
    %2293 = vsyncpa %s2292, 1
    %2294 = vsyncpa [#allocation5], 1
    %s2295 = scalar_lea.sflag [#allocation5], 1
    %2296 = vsyncpa %s2295, 1
    %2297 = vsyncpa [#allocation6], 1
    %s2298 = scalar_lea.sflag [#allocation6], 1
    %2299 = vsyncpa %s2298, 1

</llo_original>
